<compile_context>
chip_gen: v5e
topology: v5e:2x2
jax: 0.10.0
libtpu: 0.0.40
codegen_flags: <defaults>
</compile_context>

<pallas_src>
import functools

import jax
import jax.numpy as jnp
from jax.experimental import pallas as pl
from jax.experimental.pallas import tpu as pltpu

VMEM = pltpu.MemorySpace.VMEM
OUTPUT_DIM = 512
N_CHUNKS = 4  # pairwise branch: 4 grid steps x 8 text rows per step


# --------------------------------------------------------------------------
# Shared in-kernel helper:
#   g = fc( softmax(relu(y @ W1 + b1) @ W2 + b2, axis=1) * y )   -> (B, 2D)
# All dots run bf16 x bf16 on the MXU with f32 accumulation.
# --------------------------------------------------------------------------
def _compute_g(y, w1_ref, b1_ref, w2_ref, b2_ref, wfc_ref, bfc_ref):
    h = jnp.dot(y.astype(jnp.bfloat16), w1_ref[...],
                preferred_element_type=jnp.float32) + b1_ref[...]
    h = jnp.maximum(h, 0.0)
    s = jnp.dot(h.astype(jnp.bfloat16), w2_ref[...],
                preferred_element_type=jnp.float32) + b2_ref[...]
    # softmax over the feature axis (torch Softmax(dim=1) on a 2-D input)
    s = s - jnp.max(s, axis=1, keepdims=True)
    e = jnp.exp(s)
    a = e * pl.reciprocal(jnp.sum(e, axis=1, keepdims=True), approx=True)
    ya = a * y
    return jnp.dot(ya.astype(jnp.bfloat16), wfc_ref[...],
                   preferred_element_type=jnp.float32) + bfc_ref[...]


# --------------------------------------------------------------------------
# Fused kernel, cell_id in {0, 3}:  out = fc_out(gamma * x + beta) -> (B, 512)
# --------------------------------------------------------------------------
def _film_single_kernel(x_ref, y_ref, w1_ref, b1_ref, w2_ref, b2_ref,
                        wfc_ref, bfc_ref, wout_ref, bout_ref, o_ref, *, dim):
    g = _compute_g(y_ref[...], w1_ref, b1_ref, w2_ref, b2_ref, wfc_ref, bfc_ref)
    gamma = g[:, :dim]
    beta = g[:, dim:]
    filmed = gamma * x_ref[...] + beta
    out = jnp.dot(filmed.astype(jnp.bfloat16), wout_ref[...],
                  preferred_element_type=jnp.float32) + bout_ref[...]
    o_ref[...] = out.astype(o_ref.dtype)


# --------------------------------------------------------------------------
# Fused kernel, cell_id not in {0, 3}: per-text FiLM applied to the whole
# visual batch.  Grid axis = chunk of text rows; step c handles text rows
# [c*rpc, (c+1)*rpc) and writes output rows [c*rpc*bs, (c+1)*rpc*bs).
#   out[i*B + b, :] = fc_out(gamma_i * x_b + beta_i)
# gamma/beta are computed once on step 0 into persistent VMEM scratch.
# (matches torch's per-i expand(32, -1) loop; only shape-consistent when
#  batch_size == 32 and embed_dim == 512, which is what the forward implies)
# --------------------------------------------------------------------------
def _film_pairwise_kernel(x_ref, y_ref, w1_ref, b1_ref, w2_ref, b2_ref,
                          wfc_ref, bfc_ref, wout_ref, bout_ref, o_ref,
                          gamma_sc, beta_sc, *, dim, bs, rows_per_chunk):
    @pl.when(pl.program_id(0) == 0)
    def _():
        g = _compute_g(y_ref[...], w1_ref, b1_ref, w2_ref, b2_ref,
                       wfc_ref, bfc_ref)
        gamma_sc[...] = g[:, :dim]
        beta_sc[...] = g[:, dim:]

    start = pl.multiple_of(pl.program_id(0) * rows_per_chunk, rows_per_chunk)
    gamma = gamma_sc[pl.ds(start, rows_per_chunk), :]        # (rpc, D)
    beta = beta_sc[pl.ds(start, rows_per_chunk), :]          # (rpc, D)
    x = x_ref[...]                                           # (B, D)

    # filmed[j, b, :] = gamma[j] * x[b] + beta[j]; cast to bf16 immediately so
    # only a small chunk is live (no 2 MiB f32 spill through the vst slot).
    filmed = (gamma[:, None, :] * x[None, :, :]
              + beta[:, None, :]).astype(jnp.bfloat16)       # (rpc, B, D)
    filmed = filmed.reshape(rows_per_chunk * bs, dim)        # (rpc*B, D)

    out = jnp.dot(filmed, wout_ref[...],
                  preferred_element_type=jnp.float32) + bout_ref[...]
    o_ref[...] = out.astype(o_ref.dtype)


# --------------------------------------------------------------------------
# Wrapper
# --------------------------------------------------------------------------
def film_forward(x, y, cell_id, params):
    d = params["dim"]
    bsz = x.shape[0]
    cparams = pltpu.CompilerParams(
        vmem_limit_bytes=32 << 20,
        dimension_semantics=("arbitrary",),
    )

    args = (x, y,
            params["w_att1"], params["b_att1"],
            params["w_att2"], params["b_att2"],
            params["w_fc"], params["b_fc"],
            params["w_out"], params["b_out"])

    if cell_id != 0 and cell_id != 3:
        # TODO(synk): the torch `.cuda()` device move has no kernel equivalent (no-op here).
        rpc = bsz // N_CHUNKS
        rows_out = rpc * bsz  # output rows produced per grid step
        # All inputs: full-array blocks with constant index_map -> stay
        # VMEM-resident across grid steps (no re-DMA).
        in_specs = [pl.BlockSpec(a.shape, lambda i: (0, 0)) for a in args]
        out = pl.pallas_call(
            functools.partial(_film_pairwise_kernel, dim=d, bs=bsz,
                              rows_per_chunk=rpc),
            out_shape=jax.ShapeDtypeStruct((bsz * bsz, OUTPUT_DIM),
                                           jnp.bfloat16),
            grid=(N_CHUNKS,),
            in_specs=in_specs,
            out_specs=pl.BlockSpec((rows_out, OUTPUT_DIM), lambda i: (i, 0)),
            scratch_shapes=[pltpu.VMEM((bsz, d), jnp.float32),
                            pltpu.VMEM((bsz, d), jnp.float32)],
            compiler_params=cparams,
        )(*args)
        return out.reshape(bsz, bsz, OUTPUT_DIM)
    else:
        in_specs = [pl.BlockSpec(memory_space=VMEM)] * len(args)
        return pl.pallas_call(
            functools.partial(_film_single_kernel, dim=d),
            out_shape=jax.ShapeDtypeStruct((bsz, OUTPUT_DIM), jnp.bfloat16),
            in_specs=in_specs,
            out_specs=pl.BlockSpec(memory_space=VMEM),
            compiler_params=pltpu.CompilerParams(vmem_limit_bytes=32 << 20),
        )(*args)


# --------------------------------------------------------------------------
# Deterministic parameter init (PyTorch nn.Linear default: U(-1/sqrt(fan_in), .))
# Weight matrices are stored in bf16 (memory-bound workload); biases stay f32.
# --------------------------------------------------------------------------
def init_params(key, embed_dim, output_dim=OUTPUT_DIM):
    def linear(k, fan_in, fan_out):
        k1, k2 = jax.random.split(k)
        bound = 1.0 / (fan_in ** 0.5)
        w = jax.random.uniform(k1, (fan_in, fan_out), jnp.float32, -bound, bound)
        bias = jax.random.uniform(k2, (1, fan_out), jnp.float32, -bound, bound)
        return w.astype(jnp.bfloat16), bias

    keys = jax.random.split(key, 4)
    w_att1, b_att1 = linear(keys[0], embed_dim, embed_dim)
    w_att2, b_att2 = linear(keys[1], embed_dim, embed_dim)
    w_fc, b_fc = linear(keys[2], embed_dim, 2 * embed_dim)
    w_out, b_out = linear(keys[3], embed_dim, output_dim)
    return dict(dim=embed_dim,
                w_att1=w_att1, b_att1=b_att1,
                w_att2=w_att2, b_att2=b_att2,
                w_fc=w_fc, b_fc=b_fc,
                w_out=w_out, b_out=b_out)


# --------------------------------------------------------------------------
# Pure-JAX reference for validation (f32 math on the same bf16 weight values).
# --------------------------------------------------------------------------
def film_reference(x, y, cell_id, p):
    d = p["dim"]
    w1 = p["w_att1"].astype(jnp.float32)
    w2 = p["w_att2"].astype(jnp.float32)
    wfc = p["w_fc"].astype(jnp.float32)
    wout = p["w_out"].astype(jnp.float32)
    h = jax.nn.relu(y @ w1 + p["b_att1"])
    a = jax.nn.softmax(h @ w2 + p["b_att2"], axis=1)
    ya = a * y
    g = ya @ wfc + p["b_fc"]
    gamma, beta = g[:, :d], g[:, d:]
    if cell_id != 0 and cell_id != 3:
        filmed = gamma[:, None, :] * x[None, :, :] + beta[:, None, :]
        return jnp.einsum("ibd,do->ibo", filmed, wout) + p["b_out"][None]
    else:
        return (gamma * x + beta) @ wout + p["b_out"]


if __name__ == "__main__":
    # The loop branch of the original module hardcodes expand(32, -1) and
    # outs = zeros(bs, bs, input_dim); it is only shape-consistent when
    # batch_size == 32 and embed_dim == 512 (fc_out output dim), so use those.
    batch, embed_dim = 32, 512
    key = jax.random.PRNGKey(0)
    kx, ky, kp = jax.random.split(key, 3)
    x = jax.random.normal(kx, (batch, embed_dim), jnp.float32)
    y = jax.random.normal(ky, (batch, embed_dim), jnp.float32)
    params = init_params(kp, embed_dim)

    out0 = jax.block_until_ready(film_forward(x, y, 0, params))   # cell_id == 0 branch
    out1 = jax.block_until_ready(film_forward(x, y, 1, params))   # loop branch

    ref0 = film_reference(x, y, 0, params)
    ref1 = film_reference(x, y, 1, params)

    assert out0.shape == (batch, OUTPUT_DIM)
    assert out1.shape == (batch, batch, OUTPUT_DIM)
    # bf16 activation casts + bf16 output + approx reciprocal vs f32 reference.
    assert jnp.allclose(out0.astype(jnp.float32), ref0, atol=2e-2, rtol=2e-2)
    assert jnp.allclose(out1.astype(jnp.float32), ref1, atol=2e-2, rtol=2e-2)
    print("KERNEL_OK")
</pallas_src>

<mosaic_0001>
module attributes {stable_mosaic.version = 11 : i64} {
  func.func @_film_single_kernel(%arg0: memref<32x512xf32, #tpu.memory_space<vmem>>, %arg1: memref<32x512xf32, #tpu.memory_space<vmem>>, %arg2: memref<512x512xbf16, #tpu.memory_space<vmem>>, %arg3: memref<1x512xf32, #tpu.memory_space<vmem>>, %arg4: memref<512x512xbf16, #tpu.memory_space<vmem>>, %arg5: memref<1x512xf32, #tpu.memory_space<vmem>>, %arg6: memref<512x1024xbf16, #tpu.memory_space<vmem>>, %arg7: memref<1x1024xf32, #tpu.memory_space<vmem>>, %arg8: memref<512x512xbf16, #tpu.memory_space<vmem>>, %arg9: memref<1x512xf32, #tpu.memory_space<vmem>>, %arg10: memref<32x512xbf16, #tpu.memory_space<vmem>>) attributes {dimension_semantics = [], scalar_prefetch = 0 : i64, scratch_operands = 0 : i64, tpu.core_type = #tpu.core_type<tc>} {
    %c0 = arith.constant 0 : index
    %c0_0 = arith.constant 0 : index
    %0 = vector.load %arg1[%c0, %c0_0] : memref<32x512xf32, #tpu.memory_space<vmem>>, vector<32x512xf32>
    %1 = arith.truncf %0 : vector<32x512xf32> to vector<32x512xbf16>
    %c0_1 = arith.constant 0 : index
    %c0_2 = arith.constant 0 : index
    %2 = vector.load %arg2[%c0_1, %c0_2] : memref<512x512xbf16, #tpu.memory_space<vmem>>, vector<512x512xbf16>
    %cst = arith.constant dense<0.000000e+00> : vector<32x512xf32>
    %3 = tpu.matmul %1, %2, %cst {dimension_numbers = #tpu.dot_dimension_numbers<[1], [0], [0], [1], [0, 0, 1, 1], [], []>} : vector<32x512xbf16>, vector<512x512xbf16>, vector<32x512xf32> -> vector<32x512xf32>
    %c0_3 = arith.constant 0 : index
    %c0_4 = arith.constant 0 : index
    %4 = vector.load %arg3[%c0_3, %c0_4] : memref<1x512xf32, #tpu.memory_space<vmem>>, vector<1x512xf32>
    %5 = vector.broadcast %4 : vector<1x512xf32> to vector<32x512xf32>
    %6 = arith.addf %3, %5 : vector<32x512xf32>
    %cst_5 = arith.constant 0.000000e+00 : f32
    %7 = vector.broadcast %cst_5 : f32 to vector<32x512xf32>
    %8 = arith.maximumf %6, %7 : vector<32x512xf32>
    %9 = arith.truncf %8 : vector<32x512xf32> to vector<32x512xbf16>
    %c0_6 = arith.constant 0 : index
    %c0_7 = arith.constant 0 : index
    %10 = vector.load %arg4[%c0_6, %c0_7] : memref<512x512xbf16, #tpu.memory_space<vmem>>, vector<512x512xbf16>
    %cst_8 = arith.constant dense<0.000000e+00> : vector<32x512xf32>
    %11 = tpu.matmul %9, %10, %cst_8 {dimension_numbers = #tpu.dot_dimension_numbers<[1], [0], [0], [1], [0, 0, 1, 1], [], []>} : vector<32x512xbf16>, vector<512x512xbf16>, vector<32x512xf32> -> vector<32x512xf32>
    %c0_9 = arith.constant 0 : index
    %c0_10 = arith.constant 0 : index
    %12 = vector.load %arg5[%c0_9, %c0_10] : memref<1x512xf32, #tpu.memory_space<vmem>>, vector<1x512xf32>
    %13 = vector.broadcast %12 : vector<1x512xf32> to vector<32x512xf32>
    %14 = arith.addf %11, %13 : vector<32x512xf32>
    %cst_11 = arith.constant dense<0xFF800000> : vector<32xf32>
    %15 = vector.multi_reduction <maximumf>, %14, %cst_11 [1] : vector<32x512xf32> to vector<32xf32>
    %16 = vector.shape_cast %15 : vector<32xf32> to vector<32x1xf32>
    %17 = vector.broadcast %16 : vector<32x1xf32> to vector<32x512xf32>
    %18 = arith.subf %14, %17 : vector<32x512xf32>
    %19 = math.exp %18 : vector<32x512xf32>
    %cst_12 = arith.constant dense<0.000000e+00> : vector<32xf32>
    %20 = vector.multi_reduction <add>, %19, %cst_12 [1] : vector<32x512xf32> to vector<32xf32>
    %21 = vector.shape_cast %20 : vector<32xf32> to vector<32x1xf32>
    %22 = tpu.reciprocal %21 {approx = true} : vector<32x1xf32> -> vector<32x1xf32>
    %23 = vector.broadcast %22 : vector<32x1xf32> to vector<32x512xf32>
    %24 = arith.mulf %19, %23 : vector<32x512xf32>
    %25 = arith.mulf %24, %0 : vector<32x512xf32>
    %26 = arith.truncf %25 : vector<32x512xf32> to vector<32x512xbf16>
    %c0_13 = arith.constant 0 : index
    %c0_14 = arith.constant 0 : index
    %27 = vector.load %arg6[%c0_13, %c0_14] : memref<512x1024xbf16, #tpu.memory_space<vmem>>, vector<512x1024xbf16>
    %cst_15 = arith.constant dense<0.000000e+00> : vector<32x1024xf32>
    %28 = tpu.matmul %26, %27, %cst_15 {dimension_numbers = #tpu.dot_dimension_numbers<[1], [0], [0], [1], [0, 0, 1, 1], [], []>} : vector<32x512xbf16>, vector<512x1024xbf16>, vector<32x1024xf32> -> vector<32x1024xf32>
    %c0_16 = arith.constant 0 : index
    %c0_17 = arith.constant 0 : index
    %29 = vector.load %arg7[%c0_16, %c0_17] : memref<1x1024xf32, #tpu.memory_space<vmem>>, vector<1x1024xf32>
    %30 = vector.broadcast %29 : vector<1x1024xf32> to vector<32x1024xf32>
    %31 = arith.addf %28, %30 : vector<32x1024xf32>
    %32 = vector.extract_strided_slice %31 {offsets = [0, 0], sizes = [32, 512], strides = [1, 1]} : vector<32x1024xf32> to vector<32x512xf32>
    %33 = vector.extract_strided_slice %31 {offsets = [0, 512], sizes = [32, 512], strides = [1, 1]} : vector<32x1024xf32> to vector<32x512xf32>
    %c0_18 = arith.constant 0 : index
    %c0_19 = arith.constant 0 : index
    %34 = vector.load %arg0[%c0_18, %c0_19] : memref<32x512xf32, #tpu.memory_space<vmem>>, vector<32x512xf32>
    %35 = arith.mulf %32, %34 : vector<32x512xf32>
    %36 = arith.addf %35, %33 : vector<32x512xf32>
    %37 = arith.truncf %36 : vector<32x512xf32> to vector<32x512xbf16>
    %c0_20 = arith.constant 0 : index
    %c0_21 = arith.constant 0 : index
    %38 = vector.load %arg8[%c0_20, %c0_21] : memref<512x512xbf16, #tpu.memory_space<vmem>>, vector<512x512xbf16>
    %cst_22 = arith.constant dense<0.000000e+00> : vector<32x512xf32>
    %39 = tpu.matmul %37, %38, %cst_22 {dimension_numbers = #tpu.dot_dimension_numbers<[1], [0], [0], [1], [0, 0, 1, 1], [], []>} : vector<32x512xbf16>, vector<512x512xbf16>, vector<32x512xf32> -> vector<32x512xf32>
    %c0_23 = arith.constant 0 : index
    %c0_24 = arith.constant 0 : index
    %40 = vector.load %arg9[%c0_23, %c0_24] : memref<1x512xf32, #tpu.memory_space<vmem>>, vector<1x512xf32>
    %41 = vector.broadcast %40 : vector<1x512xf32> to vector<32x512xf32>
    %42 = arith.addf %39, %41 : vector<32x512xf32>
    %43 = arith.truncf %42 : vector<32x512xf32> to vector<32x512xbf16>
    %c0_25 = arith.constant 0 : index
    %c0_26 = arith.constant 0 : index
    %44 = vector.load %arg10[%c0_25, %c0_26] : memref<32x512xbf16, #tpu.memory_space<vmem>>, vector<32x512xbf16>
    tpu.vector_store %arg10[%c0_25, %c0_26], %43 {strides = array<i32>} : memref<32x512xbf16, #tpu.memory_space<vmem>>, vector<32x512xbf16>,
    return
  }
}

</mosaic_0001>

<llo_original>
// kernel: tpu_custom_call.1
$region0: #{tpu_custom_call.1}
  #allocation0 [shape = 'u32[]', space=smem, size = 0x4, offset = 0x4, fixed_abs, tag = 'smem constant byte address 0x4 - core index']
  #allocation1 [shape = 'u32[72,128]{1,0:T(1,128)}', space=vmem, size = 0x9000, scoped, tag = 'internal scratch']
  %s0 = inlined_call_operand.hbm [shape: f32[32,512], index: 0, kind: input, shape index: {}]
  %s1 = inlined_call_operand.hbm [shape: f32[32,512], index: 1, kind: input, shape index: {}]
  %s2 = inlined_call_operand.hbm [shape: bf16[512,512], index: 2, kind: input, shape index: {}]
  %s3 = inlined_call_operand.hbm [shape: f32[1,512], index: 3, kind: input, shape index: {}]
  %s4 = inlined_call_operand.hbm [shape: bf16[512,512], index: 4, kind: input, shape index: {}]
  %s5 = inlined_call_operand.vmem [shape: f32[1,512], index: 5, kind: input, shape index: {}]
  %s6 = inlined_call_operand.hbm [shape: bf16[512,1024], index: 6, kind: input, shape index: {}]
  %s7 = inlined_call_operand.hbm [shape: f32[1,1024], index: 7, kind: input, shape index: {}]
  %s8 = inlined_call_operand.hbm [shape: bf16[512,512], index: 8, kind: input, shape index: {}]
  %s9 = inlined_call_operand.vmem [shape: f32[1,512], index: 9, kind: input, shape index: {}]
  %s10 = inlined_call_operand.hbm [shape: bf16[32,512], index: 10, kind: output, shape index: {}]
  %s11 = sld [smem:[#allocation0]]
  $region82: #{tpu_custom_call.1} parent=0
    _
  %s13 = ssub.s32 1, %s11
  %s14 = scalar_select 0, %s13, %s11
  $region1: #{tpu_custom_call.1} parent=0
    #allocation2 [shape = 'u8[65536]{0}', space=vmem, size = 0x10000, scoped, tag = 'input window, operand 0, single buffered']
    #allocation3 [shape = 's32[1]{0}', space=sflag, size = 0x4, scoped, tag = 'scoped memory for tpu_custom_call.1']
    #allocation4 [shape = 's32[1]{0}', space=sflag, size = 0x4, scoped, tag = 'scoped memory for tpu_custom_call.1']
    #allocation5 [shape = 'u8[65536]{0}', space=vmem, size = 0x10000, scoped, tag = 'input window, operand 1, single buffered']
    #allocation6 [shape = 's32[1]{0}', space=sflag, size = 0x4, scoped, tag = 'scoped memory for tpu_custom_call.1']
    #allocation7 [shape = 'u8[524288]{0}', space=vmem, size = 0x80000, scoped, tag = 'input window, operand 2, single buffered']
    #allocation8 [shape = 'u8[2048]{0}', space=vmem, size = 0x800, scoped, tag = 'input window, operand 3, single buffered']
    #allocation9 [shape = 's32[1]{0}', space=sflag, size = 0x4, scoped, tag = 'scoped memory for tpu_custom_call.1']
    #allocation10 [shape = 'u8[524288]{0}', space=vmem, size = 0x80000, scoped, tag = 'input window, operand 4, single buffered']
    #allocation11 [shape = 'u8[1048576]{0}', space=vmem, size = 0x100000, scoped, tag = 'input window, operand 6, single buffered']
    #allocation12 [shape = 's32[1]{0}', space=sflag, size = 0x4, scoped, tag = 'scoped memory for tpu_custom_call.1']
    #allocation13 [shape = 'u8[4096]{0}', space=vmem, size = 0x1000, scoped, tag = 'input window, operand 7, single buffered']
    #allocation14 [shape = 'u8[524288]{0}', space=vmem, size = 0x80000, scoped, tag = 'input window, operand 8, single buffered']
    #allocation15 [shape = 's32[1]{0}', space=sflag, size = 0x4, scoped, tag = 'scoped memory for tpu_custom_call.1']
    #allocation16 [shape = 'u8[32768]{0}', space=vmem, size = 0x8000, scoped, tag = 'output window, operand 0, single buffered']
    %15 = vsyncpa [#allocation3], 0
    %16 = vsyncpa [#allocation6], 0
    %17 = vsyncpa [#allocation9], 0
    %18 = vsyncpa [#allocation12], 0
    %19 = vsyncpa [#allocation15], 0
    %20 = vsyncpa [#allocation4], 0
    // Predicated region
    $region2: #{tpu_custom_call.1} parent=1 // pred_check
      _
    $region3: #{tpu_custom_call.1} parent=1 // pred_check_branch
      %22 = sbr.rel (0) target = $region5
    $region4: #{tpu_custom_call.1} parent=1 // pred_region
      %24 = vsyncadd [#allocation3], 0
      %s25 = sshll.u32 %s0, 4
      %s26 = int_to_ptr.hbm [resolvable:$true] %s25
      %s27 = sshll.u32 [#allocation2], 4
      %s28 = int_to_ptr.vmem [resolvable:$true] %s27
      %33 = dma.hbm_to_vmem [thread:$0]  %s26, 2048, %s28, [#allocation3], 512, 512, 32
    $region5: #{tpu_custom_call.1} parent=1 // pred_fallthru
      _
    // Predicated region
    $region6: #{tpu_custom_call.1} parent=1 // pred_check
      _
    $region7: #{tpu_custom_call.1} parent=1 // pred_check_branch
      %35 = sbr.rel (0) target = $region9
    $region8: #{tpu_custom_call.1} parent=1 // pred_region
      %37 = vsyncadd [#allocation6], 0
      %s38 = sshll.u32 %s1, 4
      %s39 = int_to_ptr.hbm [resolvable:$true] %s38
      %s40 = sshll.u32 [#allocation5], 4
      %s41 = int_to_ptr.vmem [resolvable:$true] %s40
      %46 = dma.hbm_to_vmem [thread:$0]  %s39, 2048, %s41, [#allocation6], 512, 512, 32
    $region9: #{tpu_custom_call.1} parent=1 // pred_fallthru
      _
    // Predicated region
    $region10: #{tpu_custom_call.1} parent=1 // pred_check
      _
    $region11: #{tpu_custom_call.1} parent=1 // pred_check_branch
      %48 = sbr.rel (0) target = $region13
    $region12: #{tpu_custom_call.1} parent=1 // pred_region
      %50 = vsyncadd [#allocation6], 0
      %s51 = sshll.u32 %s2, 4
      %s52 = int_to_ptr.hbm [resolvable:$true] %s51
      %s53 = sshll.u32 [#allocation7], 4
      %s54 = int_to_ptr.vmem [resolvable:$true] %s53
      %59 = dma.hbm_to_vmem [thread:$0]  %s52, 16384, %s54, [#allocation6], 256, 256, 16
    $region13: #{tpu_custom_call.1} parent=1 // pred_fallthru
      _
    // Predicated region
    $region14: #{tpu_custom_call.1} parent=1 // pred_check
      _
    $region15: #{tpu_custom_call.1} parent=1 // pred_check_branch
      %61 = sbr.rel (0) target = $region17
    $region16: #{tpu_custom_call.1} parent=1 // pred_region
      %63 = vsyncadd [#allocation9], 0
      %s65 = sshll.u32 %s3, 4
      %s66 = int_to_ptr.hbm [resolvable:$true] %s65
      %s67 = sshll.u32 [#allocation8], 4
      %s68 = int_to_ptr.vmem [resolvable:$true] %s67
      %70 = dma.hbm_to_vmem [thread:$0]  %s66, 64, %s68, [#allocation9]
    $region17: #{tpu_custom_call.1} parent=1 // pred_fallthru
      _
    // Predicated region
    $region18: #{tpu_custom_call.1} parent=1 // pred_check
      _
    $region19: #{tpu_custom_call.1} parent=1 // pred_check_branch
      %72 = sbr.rel (0) target = $region21
    $region20: #{tpu_custom_call.1} parent=1 // pred_region
      %74 = vsyncadd [#allocation9], 0
      %s75 = sshll.u32 %s4, 4
      %s76 = int_to_ptr.hbm [resolvable:$true] %s75
      %s77 = sshll.u32 [#allocation10], 4
      %s78 = int_to_ptr.vmem [resolvable:$true] %s77
      %83 = dma.hbm_to_vmem [thread:$0]  %s76, 16384, %s78, [#allocation9], 256, 256, 16
    $region21: #{tpu_custom_call.1} parent=1 // pred_fallthru
      _
    // Predicated region
    $region22: #{tpu_custom_call.1} parent=1 // pred_check
      _
    $region23: #{tpu_custom_call.1} parent=1 // pred_check_branch
      %85 = sbr.rel (0) target = $region25
    $region24: #{tpu_custom_call.1} parent=1 // pred_region
      _
    $region25: #{tpu_custom_call.1} parent=1 // pred_fallthru
      _
    // Predicated region
    $region26: #{tpu_custom_call.1} parent=1 // pred_check
      _
    $region27: #{tpu_custom_call.1} parent=1 // pred_check_branch
      %87 = sbr.rel (0) target = $region29
    $region28: #{tpu_custom_call.1} parent=1 // pred_region
      %89 = vsyncadd [#allocation12], 0
      %s90 = sshll.u32 %s6, 4
      %s91 = int_to_ptr.hbm [resolvable:$true] %s90
      %s92 = sshll.u32 [#allocation11], 4
      %s93 = int_to_ptr.vmem [resolvable:$true] %s92
      %98 = dma.hbm_to_vmem [thread:$0]  %s91, 32768, %s93, [#allocation12], 512, 512, 32
    $region29: #{tpu_custom_call.1} parent=1 // pred_fallthru
      _
    // Predicated region
    $region30: #{tpu_custom_call.1} parent=1 // pred_check
      _
    $region31: #{tpu_custom_call.1} parent=1 // pred_check_branch
      %100 = sbr.rel (0) target = $region33
    $region32: #{tpu_custom_call.1} parent=1 // pred_region
      %102 = vsyncadd [#allocation12], 0
      %s104 = sshll.u32 %s7, 4
      %s105 = int_to_ptr.hbm [resolvable:$true] %s104
      %s106 = sshll.u32 [#allocation13], 4
      %s107 = int_to_ptr.vmem [resolvable:$true] %s106
      %109 = dma.hbm_to_vmem [thread:$0]  %s105, 128, %s107, [#allocation12]
    $region33: #{tpu_custom_call.1} parent=1 // pred_fallthru
      _
    // Predicated region
    $region34: #{tpu_custom_call.1} parent=1 // pred_check
      _
    $region35: #{tpu_custom_call.1} parent=1 // pred_check_branch
      %111 = sbr.rel (0) target = $region37
    $region36: #{tpu_custom_call.1} parent=1 // pred_region
      %113 = vsyncadd [#allocation15], 0
      %s114 = sshll.u32 %s8, 4
      %s115 = int_to_ptr.hbm [resolvable:$true] %s114
      %s116 = sshll.u32 [#allocation14], 4
      %s117 = int_to_ptr.vmem [resolvable:$true] %s116
      %122 = dma.hbm_to_vmem [thread:$0]  %s115, 16384, %s117, [#allocation15], 256, 256, 16
    $region37: #{tpu_custom_call.1} parent=1 // pred_fallthru
      _
    // Predicated region
    $region38: #{tpu_custom_call.1} parent=1 // pred_check
      _
    $region39: #{tpu_custom_call.1} parent=1 // pred_check_branch
      %124 = sbr.rel (0) target = $region41
    $region40: #{tpu_custom_call.1} parent=1 // pred_region
      _
    $region41: #{tpu_custom_call.1} parent=1 // pred_fallthru
      _
    // Predicated region
    $region42: #{tpu_custom_call.1} parent=1 // pred_check
      _
    $region43: #{tpu_custom_call.1} parent=1 // pred_check_branch
      %126 = sbr.rel (0) target = $region45
    $region44: #{tpu_custom_call.1} parent=1 // pred_region
      %128 = dma.done [#allocation3], 2048
    $region45: #{tpu_custom_call.1} parent=1 // pred_fallthru
      _
    // Predicated region
    $region46: #{tpu_custom_call.1} parent=1 // pred_check
      _
    $region47: #{tpu_custom_call.1} parent=1 // pred_check_branch
      %130 = sbr.rel (0) target = $region49
    $region48: #{tpu_custom_call.1} parent=1 // pred_region
      %132 = dma.done [#allocation6], 2048
    $region49: #{tpu_custom_call.1} parent=1 // pred_fallthru
      _
    // Predicated region
    $region50: #{tpu_custom_call.1} parent=1 // pred_check
      _
    $region51: #{tpu_custom_call.1} parent=1 // pred_check_branch
      %134 = sbr.rel (0) target = $region53
    $region52: #{tpu_custom_call.1} parent=1 // pred_region
      %136 = dma.done [#allocation6], 16384
    $region53: #{tpu_custom_call.1} parent=1 // pred_fallthru
      _
    // Predicated region
    $region54: #{tpu_custom_call.1} parent=1 // pred_check
      _
    $region55: #{tpu_custom_call.1} parent=1 // pred_check_branch
      %138 = sbr.rel (0) target = $region57
    $region56: #{tpu_custom_call.1} parent=1 // pred_region
      %140 = dma.done [#allocation9], 64
    $region57: #{tpu_custom_call.1} parent=1 // pred_fallthru
      _
    // Predicated region
    $region58: #{tpu_custom_call.1} parent=1 // pred_check
      _
    $region59: #{tpu_custom_call.1} parent=1 // pred_check_branch
      %142 = sbr.rel (0) target = $region61
    $region60: #{tpu_custom_call.1} parent=1 // pred_region
      %144 = dma.done [#allocation9], 16384
    $region61: #{tpu_custom_call.1} parent=1 // pred_fallthru
      _
    // Predicated region
    $region62: #{tpu_custom_call.1} parent=1 // pred_check
      _
    $region63: #{tpu_custom_call.1} parent=1 // pred_check_branch
      %146 = sbr.rel (0) target = $region65
    $region64: #{tpu_custom_call.1} parent=1 // pred_region
      %148 = dma.done [#allocation12], 32768
    $region65: #{tpu_custom_call.1} parent=1 // pred_fallthru
      _
    // Predicated region
    $region66: #{tpu_custom_call.1} parent=1 // pred_check
      _
    $region67: #{tpu_custom_call.1} parent=1 // pred_check_branch
      %150 = sbr.rel (0) target = $region69
    $region68: #{tpu_custom_call.1} parent=1 // pred_region
      %152 = dma.done [#allocation12], 128
    $region69: #{tpu_custom_call.1} parent=1 // pred_fallthru
      _
    // Predicated region
    $region70: #{tpu_custom_call.1} parent=1 // pred_check
      _
    $region71: #{tpu_custom_call.1} parent=1 // pred_check_branch
      %154 = sbr.rel (0) target = $region73
    $region72: #{tpu_custom_call.1} parent=1 // pred_region
      %156 = dma.done [#allocation15], 16384
    $region73: #{tpu_custom_call.1} parent=1 // pred_fallthru
      _
    %v157 = vld [vmem:[#allocation5] sm:$0xff]
    %v158 = vld [vmem:[#allocation5 + $0x8] sm:$0xff]
    %v159 = vld [vmem:[#allocation5 + $0x10] sm:$0xff]
    %v160 = vld [vmem:[#allocation5 + $0x18] sm:$0xff]
    %v161 = vld [vmem:[#allocation5 + $0x20] sm:$0xff]
    %v162 = vld [vmem:[#allocation5 + $0x28] sm:$0xff]
    %v163 = vld [vmem:[#allocation5 + $0x30] sm:$0xff]
    %v164 = vld [vmem:[#allocation5 + $0x38] sm:$0xff]
    %v165 = vld [vmem:[#allocation5 + $0x40] sm:$0xff]
    %v166 = vld [vmem:[#allocation5 + $0x48] sm:$0xff]
    %v167 = vld [vmem:[#allocation5 + $0x50] sm:$0xff]
    %v168 = vld [vmem:[#allocation5 + $0x58] sm:$0xff]
    %v169 = vld [vmem:[#allocation5 + $0x60] sm:$0xff]
    %v170 = vld [vmem:[#allocation5 + $0x68] sm:$0xff]
    %v171 = vld [vmem:[#allocation5 + $0x70] sm:$0xff]
    %v172 = vld [vmem:[#allocation5 + $0x78] sm:$0xff]
    %v173 = vpack.c.bf16 %v161, %v157
    %v174 = vpack.c.bf16 %v162, %v158
    %v175 = vpack.c.bf16 %v163, %v159
    %v176 = vpack.c.bf16 %v164, %v160
    %v177 = vpack.c.bf16 %v169, %v165
    %v178 = vpack.c.bf16 %v170, %v166
    %v179 = vpack.c.bf16 %v171, %v167
    %v180 = vpack.c.bf16 %v172, %v168
    %v181 = vld [vmem:[#allocation7] sm:$0xff]
    %v182 = vld [vmem:[#allocation7 + $0x8] sm:$0xff]
    %v183 = vld [vmem:[#allocation7 + $0x10] sm:$0xff]
    %v184 = vld [vmem:[#allocation7 + $0x18] sm:$0xff]
    %v185 = vld [vmem:[#allocation7 + $0x20] sm:$0xff]
    %v186 = vld [vmem:[#allocation7 + $0x28] sm:$0xff]
    %v187 = vld [vmem:[#allocation7 + $0x30] sm:$0xff]
    %v188 = vld [vmem:[#allocation7 + $0x38] sm:$0xff]
    %v189 = vld [vmem:[#allocation7 + $0x40] sm:$0xff]
    %v190 = vld [vmem:[#allocation7 + $0x48] sm:$0xff]
    %v191 = vld [vmem:[#allocation7 + $0x50] sm:$0xff]
    %v192 = vld [vmem:[#allocation7 + $0x58] sm:$0xff]
    %v193 = vld [vmem:[#allocation7 + $0x60] sm:$0xff]
    %v194 = vld [vmem:[#allocation7 + $0x68] sm:$0xff]
    %v195 = vld [vmem:[#allocation7 + $0x70] sm:$0xff]
    %v196 = vld [vmem:[#allocation7 + $0x78] sm:$0xff]
    %v197 = vld [vmem:[#allocation7 + $0x80] sm:$0xff]
    %v198 = vld [vmem:[#allocation7 + $0x88] sm:$0xff]
    %v199 = vld [vmem:[#allocation7 + $0x90] sm:$0xff]
    %v200 = vld [vmem:[#allocation7 + $0x98] sm:$0xff]
    %v201 = vld [vmem:[#allocation7 + $0xa0] sm:$0xff]
    %v202 = vld [vmem:[#allocation7 + $0xa8] sm:$0xff]
    %v203 = vld [vmem:[#allocation7 + $0xb0] sm:$0xff]
    %v204 = vld [vmem:[#allocation7 + $0xb8] sm:$0xff]
    %v205 = vld [vmem:[#allocation7 + $0xc0] sm:$0xff]
    %v206 = vld [vmem:[#allocation7 + $0xc8] sm:$0xff]
    %v207 = vld [vmem:[#allocation7 + $0xd0] sm:$0xff]
    %v208 = vld [vmem:[#allocation7 + $0xd8] sm:$0xff]
    %v209 = vld [vmem:[#allocation7 + $0xe0] sm:$0xff]
    %v210 = vld [vmem:[#allocation7 + $0xe8] sm:$0xff]
    %v211 = vld [vmem:[#allocation7 + $0xf0] sm:$0xff]
    %v212 = vld [vmem:[#allocation7 + $0xf8] sm:$0xff]
    %v213 = vld [vmem:[#allocation7 + $0x100] sm:$0xff]
    %v214 = vld [vmem:[#allocation7 + $0x108] sm:$0xff]
    %v215 = vld [vmem:[#allocation7 + $0x110] sm:$0xff]
    %v216 = vld [vmem:[#allocation7 + $0x118] sm:$0xff]
    %v217 = vld [vmem:[#allocation7 + $0x120] sm:$0xff]
    %v218 = vld [vmem:[#allocation7 + $0x128] sm:$0xff]
    %v219 = vld [vmem:[#allocation7 + $0x130] sm:$0xff]
    %v220 = vld [vmem:[#allocation7 + $0x138] sm:$0xff]
    %v221 = vld [vmem:[#allocation7 + $0x140] sm:$0xff]
    %v222 = vld [vmem:[#allocation7 + $0x148] sm:$0xff]
    %v223 = vld [vmem:[#allocation7 + $0x150] sm:$0xff]
    %v224 = vld [vmem:[#allocation7 + $0x158] sm:$0xff]
    %v225 = vld [vmem:[#allocation7 + $0x160] sm:$0xff]
    %v226 = vld [vmem:[#allocation7 + $0x168] sm:$0xff]
    %v227 = vld [vmem:[#allocation7 + $0x170] sm:$0xff]
    %v228 = vld [vmem:[#allocation7 + $0x178] sm:$0xff]
    %v229 = vld [vmem:[#allocation7 + $0x180] sm:$0xff]
    %v230 = vld [vmem:[#allocation7 + $0x188] sm:$0xff]
    %v231 = vld [vmem:[#allocation7 + $0x190] sm:$0xff]
    %v232 = vld [vmem:[#allocation7 + $0x198] sm:$0xff]
    %v233 = vld [vmem:[#allocation7 + $0x1a0] sm:$0xff]
    %v234 = vld [vmem:[#allocation7 + $0x1a8] sm:$0xff]
    %v235 = vld [vmem:[#allocation7 + $0x1b0] sm:$0xff]
    %v236 = vld [vmem:[#allocation7 + $0x1b8] sm:$0xff]
    %v237 = vld [vmem:[#allocation7 + $0x1c0] sm:$0xff]
    %v238 = vld [vmem:[#allocation7 + $0x1c8] sm:$0xff]
    %v239 = vld [vmem:[#allocation7 + $0x1d0] sm:$0xff]
    %v240 = vld [vmem:[#allocation7 + $0x1d8] sm:$0xff]
    %v241 = vld [vmem:[#allocation7 + $0x1e0] sm:$0xff]
    %v242 = vld [vmem:[#allocation7 + $0x1e8] sm:$0xff]
    %v243 = vld [vmem:[#allocation7 + $0x1f0] sm:$0xff]
    %v244 = vld [vmem:[#allocation7 + $0x1f8] sm:$0xff]
    %v245 = vld [vmem:[#allocation7 + $0x200] sm:$0xff]
    %v246 = vld [vmem:[#allocation7 + $0x208] sm:$0xff]
    %v247 = vld [vmem:[#allocation7 + $0x210] sm:$0xff]
    %v248 = vld [vmem:[#allocation7 + $0x218] sm:$0xff]
    %v249 = vld [vmem:[#allocation7 + $0x220] sm:$0xff]
    %v250 = vld [vmem:[#allocation7 + $0x228] sm:$0xff]
    %v251 = vld [vmem:[#allocation7 + $0x230] sm:$0xff]
    %v252 = vld [vmem:[#allocation7 + $0x238] sm:$0xff]
    %v253 = vld [vmem:[#allocation7 + $0x240] sm:$0xff]
    %v254 = vld [vmem:[#allocation7 + $0x248] sm:$0xff]
    %v255 = vld [vmem:[#allocation7 + $0x250] sm:$0xff]
    %v256 = vld [vmem:[#allocation7 + $0x258] sm:$0xff]
    %v257 = vld [vmem:[#allocation7 + $0x260] sm:$0xff]
    %v258 = vld [vmem:[#allocation7 + $0x268] sm:$0xff]
    %v259 = vld [vmem:[#allocation7 + $0x270] sm:$0xff]
    %v260 = vld [vmem:[#allocation7 + $0x278] sm:$0xff]
    %v261 = vld [vmem:[#allocation7 + $0x280] sm:$0xff]
    %v262 = vld [vmem:[#allocation7 + $0x288] sm:$0xff]
    %v263 = vld [vmem:[#allocation7 + $0x290] sm:$0xff]
    %v264 = vld [vmem:[#allocation7 + $0x298] sm:$0xff]
    %v265 = vld [vmem:[#allocation7 + $0x2a0] sm:$0xff]
    %v266 = vld [vmem:[#allocation7 + $0x2a8] sm:$0xff]
    %v267 = vld [vmem:[#allocation7 + $0x2b0] sm:$0xff]
    %v268 = vld [vmem:[#allocation7 + $0x2b8] sm:$0xff]
    %v269 = vld [vmem:[#allocation7 + $0x2c0] sm:$0xff]
    %v270 = vld [vmem:[#allocation7 + $0x2c8] sm:$0xff]
    %v271 = vld [vmem:[#allocation7 + $0x2d0] sm:$0xff]
    %v272 = vld [vmem:[#allocation7 + $0x2d8] sm:$0xff]
    %v273 = vld [vmem:[#allocation7 + $0x2e0] sm:$0xff]
    %v274 = vld [vmem:[#allocation7 + $0x2e8] sm:$0xff]
    %v275 = vld [vmem:[#allocation7 + $0x2f0] sm:$0xff]
    %v276 = vld [vmem:[#allocation7 + $0x2f8] sm:$0xff]
    %v277 = vld [vmem:[#allocation7 + $0x300] sm:$0xff]
    %v278 = vld [vmem:[#allocation7 + $0x308] sm:$0xff]
    %v279 = vld [vmem:[#allocation7 + $0x310] sm:$0xff]
    %v280 = vld [vmem:[#allocation7 + $0x318] sm:$0xff]
    %v281 = vld [vmem:[#allocation7 + $0x320] sm:$0xff]
    %v282 = vld [vmem:[#allocation7 + $0x328] sm:$0xff]
    %v283 = vld [vmem:[#allocation7 + $0x330] sm:$0xff]
    %v284 = vld [vmem:[#allocation7 + $0x338] sm:$0xff]
    %v285 = vld [vmem:[#allocation7 + $0x340] sm:$0xff]
    %v286 = vld [vmem:[#allocation7 + $0x348] sm:$0xff]
    %v287 = vld [vmem:[#allocation7 + $0x350] sm:$0xff]
    %v288 = vld [vmem:[#allocation7 + $0x358] sm:$0xff]
    %v289 = vld [vmem:[#allocation7 + $0x360] sm:$0xff]
    %v290 = vld [vmem:[#allocation7 + $0x368] sm:$0xff]
    %v291 = vld [vmem:[#allocation7 + $0x370] sm:$0xff]
    %v292 = vld [vmem:[#allocation7 + $0x378] sm:$0xff]
    %v293 = vld [vmem:[#allocation7 + $0x380] sm:$0xff]
    %v294 = vld [vmem:[#allocation7 + $0x388] sm:$0xff]
    %v295 = vld [vmem:[#allocation7 + $0x390] sm:$0xff]
    %v296 = vld [vmem:[#allocation7 + $0x398] sm:$0xff]
    %v297 = vld [vmem:[#allocation7 + $0x3a0] sm:$0xff]
    %v298 = vld [vmem:[#allocation7 + $0x3a8] sm:$0xff]
    %v299 = vld [vmem:[#allocation7 + $0x3b0] sm:$0xff]
    %v300 = vld [vmem:[#allocation7 + $0x3b8] sm:$0xff]
    %v301 = vld [vmem:[#allocation7 + $0x3c0] sm:$0xff]
    %v302 = vld [vmem:[#allocation7 + $0x3c8] sm:$0xff]
    %v303 = vld [vmem:[#allocation7 + $0x3d0] sm:$0xff]
    %v304 = vld [vmem:[#allocation7 + $0x3d8] sm:$0xff]
    %v305 = vld [vmem:[#allocation7 + $0x3e0] sm:$0xff]
    %v306 = vld [vmem:[#allocation7 + $0x3e8] sm:$0xff]
    %v307 = vld [vmem:[#allocation7 + $0x3f0] sm:$0xff]
    %v308 = vld [vmem:[#allocation7 + $0x3f8] sm:$0xff]
    %v309 = vld [vmem:[#allocation8] sm:$0xf]
    %v311 = vperm.slane %v309, 0
    %v312 = vperm.slane %v309, 1
    %v313 = vperm.slane %v309, 2
    %v314 = vperm.slane %v309, 3
    %v447 = vunpack.c.l.b16 %v181
    %v448 = vunpack.c.h.b16 %v181
    %v449 = vunpack.c.l.b16 %v182
    %v450 = vunpack.c.h.b16 %v182
    %v451 = vunpack.c.l.b16 %v183
    %v452 = vunpack.c.h.b16 %v183
    %v453 = vunpack.c.l.b16 %v184
    %v454 = vunpack.c.h.b16 %v184
    %v455 = vunpack.c.l.b16 %v185
    %v456 = vunpack.c.h.b16 %v185
    %v457 = vunpack.c.l.b16 %v186
    %v458 = vunpack.c.h.b16 %v186
    %v459 = vunpack.c.l.b16 %v187
    %v460 = vunpack.c.h.b16 %v187
    %v461 = vunpack.c.l.b16 %v188
    %v462 = vunpack.c.h.b16 %v188
    %v463 = vunpack.c.l.b16 %v189
    %v464 = vunpack.c.h.b16 %v189
    %v465 = vunpack.c.l.b16 %v190
    %v466 = vunpack.c.h.b16 %v190
    %v467 = vunpack.c.l.b16 %v191
    %v468 = vunpack.c.h.b16 %v191
    %v469 = vunpack.c.l.b16 %v192
    %v470 = vunpack.c.h.b16 %v192
    %v471 = vunpack.c.l.b16 %v193
    %v472 = vunpack.c.h.b16 %v193
    %v473 = vunpack.c.l.b16 %v194
    %v474 = vunpack.c.h.b16 %v194
    %v475 = vunpack.c.l.b16 %v195
    %v476 = vunpack.c.h.b16 %v195
    %v477 = vunpack.c.l.b16 %v196
    %v478 = vunpack.c.h.b16 %v196
    %v479 = vunpack.c.l.b16 %v197
    %v480 = vunpack.c.h.b16 %v197
    %v481 = vunpack.c.l.b16 %v198
    %v482 = vunpack.c.h.b16 %v198
    %v483 = vunpack.c.l.b16 %v199
    %v484 = vunpack.c.h.b16 %v199
    %v485 = vunpack.c.l.b16 %v200
    %v486 = vunpack.c.h.b16 %v200
    %v487 = vunpack.c.l.b16 %v201
    %v488 = vunpack.c.h.b16 %v201
    %v489 = vunpack.c.l.b16 %v202
    %v490 = vunpack.c.h.b16 %v202
    %v491 = vunpack.c.l.b16 %v203
    %v492 = vunpack.c.h.b16 %v203
    %v493 = vunpack.c.l.b16 %v204
    %v494 = vunpack.c.h.b16 %v204
    %v495 = vunpack.c.l.b16 %v205
    %v496 = vunpack.c.h.b16 %v205
    %v497 = vunpack.c.l.b16 %v206
    %v498 = vunpack.c.h.b16 %v206
    %v499 = vunpack.c.l.b16 %v207
    %v500 = vunpack.c.h.b16 %v207
    %v501 = vunpack.c.l.b16 %v208
    %v502 = vunpack.c.h.b16 %v208
    %v503 = vunpack.c.l.b16 %v209
    %v504 = vunpack.c.h.b16 %v209
    %v505 = vunpack.c.l.b16 %v210
    %v506 = vunpack.c.h.b16 %v210
    %v507 = vunpack.c.l.b16 %v211
    %v508 = vunpack.c.h.b16 %v211
    %v509 = vunpack.c.l.b16 %v212
    %v510 = vunpack.c.h.b16 %v212
    %v511 = vunpack.c.l.b16 %v213
    %v512 = vunpack.c.h.b16 %v213
    %v513 = vunpack.c.l.b16 %v214
    %v514 = vunpack.c.h.b16 %v214
    %v515 = vunpack.c.l.b16 %v215
    %v516 = vunpack.c.h.b16 %v215
    %v517 = vunpack.c.l.b16 %v216
    %v518 = vunpack.c.h.b16 %v216
    %v519 = vunpack.c.l.b16 %v217
    %v520 = vunpack.c.h.b16 %v217
    %v521 = vunpack.c.l.b16 %v218
    %v522 = vunpack.c.h.b16 %v218
    %v523 = vunpack.c.l.b16 %v219
    %v524 = vunpack.c.h.b16 %v219
    %v525 = vunpack.c.l.b16 %v220
    %v526 = vunpack.c.h.b16 %v220
    %v527 = vunpack.c.l.b16 %v221
    %v528 = vunpack.c.h.b16 %v221
    %v529 = vunpack.c.l.b16 %v222
    %v530 = vunpack.c.h.b16 %v222
    %v531 = vunpack.c.l.b16 %v223
    %v532 = vunpack.c.h.b16 %v223
    %v533 = vunpack.c.l.b16 %v224
    %v534 = vunpack.c.h.b16 %v224
    %v535 = vunpack.c.l.b16 %v225
    %v536 = vunpack.c.h.b16 %v225
    %v537 = vunpack.c.l.b16 %v226
    %v538 = vunpack.c.h.b16 %v226
    %v539 = vunpack.c.l.b16 %v227
    %v540 = vunpack.c.h.b16 %v227
    %v541 = vunpack.c.l.b16 %v228
    %v542 = vunpack.c.h.b16 %v228
    %v543 = vunpack.c.l.b16 %v229
    %v544 = vunpack.c.h.b16 %v229
    %v545 = vunpack.c.l.b16 %v230
    %v546 = vunpack.c.h.b16 %v230
    %v547 = vunpack.c.l.b16 %v231
    %v548 = vunpack.c.h.b16 %v231
    %v549 = vunpack.c.l.b16 %v232
    %v550 = vunpack.c.h.b16 %v232
    %v551 = vunpack.c.l.b16 %v233
    %v552 = vunpack.c.h.b16 %v233
    %v553 = vunpack.c.l.b16 %v234
    %v554 = vunpack.c.h.b16 %v234
    %v555 = vunpack.c.l.b16 %v235
    %v556 = vunpack.c.h.b16 %v235
    %v557 = vunpack.c.l.b16 %v236
    %v558 = vunpack.c.h.b16 %v236
    %v559 = vunpack.c.l.b16 %v237
    %v560 = vunpack.c.h.b16 %v237
    %v561 = vunpack.c.l.b16 %v238
    %v562 = vunpack.c.h.b16 %v238
    %v563 = vunpack.c.l.b16 %v239
    %v564 = vunpack.c.h.b16 %v239
    %v565 = vunpack.c.l.b16 %v240
    %v566 = vunpack.c.h.b16 %v240
    %v567 = vunpack.c.l.b16 %v241
    %v568 = vunpack.c.h.b16 %v241
    %v569 = vunpack.c.l.b16 %v242
    %v570 = vunpack.c.h.b16 %v242
    %v571 = vunpack.c.l.b16 %v243
    %v572 = vunpack.c.h.b16 %v243
    %v573 = vunpack.c.l.b16 %v244
    %v574 = vunpack.c.h.b16 %v244
    %v575 = vunpack.c.l.b16 %v245
    %v576 = vunpack.c.h.b16 %v245
    %v577 = vunpack.c.l.b16 %v246
    %v578 = vunpack.c.h.b16 %v246
    %v579 = vunpack.c.l.b16 %v247
    %v580 = vunpack.c.h.b16 %v247
    %v581 = vunpack.c.l.b16 %v248
    %v582 = vunpack.c.h.b16 %v248
    %v583 = vunpack.c.l.b16 %v249
    %v584 = vunpack.c.h.b16 %v249
    %v585 = vunpack.c.l.b16 %v250
    %v586 = vunpack.c.h.b16 %v250
    %v587 = vunpack.c.l.b16 %v251
    %v588 = vunpack.c.h.b16 %v251
    %v589 = vunpack.c.l.b16 %v252
    %v590 = vunpack.c.h.b16 %v252
    %v591 = vunpack.c.l.b16 %v253
    %v592 = vunpack.c.h.b16 %v253
    %v593 = vunpack.c.l.b16 %v254
    %v594 = vunpack.c.h.b16 %v254
    %v595 = vunpack.c.l.b16 %v255
    %v596 = vunpack.c.h.b16 %v255
    %v597 = vunpack.c.l.b16 %v256
    %v598 = vunpack.c.h.b16 %v256
    %v599 = vunpack.c.l.b16 %v257
    %v600 = vunpack.c.h.b16 %v257
    %v601 = vunpack.c.l.b16 %v258
    %v602 = vunpack.c.h.b16 %v258
    %v603 = vunpack.c.l.b16 %v259
    %v604 = vunpack.c.h.b16 %v259
    %v605 = vunpack.c.l.b16 %v260
    %v606 = vunpack.c.h.b16 %v260
    %v607 = vunpack.c.l.b16 %v261
    %v608 = vunpack.c.h.b16 %v261
    %v609 = vunpack.c.l.b16 %v262
    %v610 = vunpack.c.h.b16 %v262
    %v611 = vunpack.c.l.b16 %v263
    %v612 = vunpack.c.h.b16 %v263
    %v613 = vunpack.c.l.b16 %v264
    %v614 = vunpack.c.h.b16 %v264
    %v615 = vunpack.c.l.b16 %v265
    %v616 = vunpack.c.h.b16 %v265
    %v617 = vunpack.c.l.b16 %v266
    %v618 = vunpack.c.h.b16 %v266
    %v619 = vunpack.c.l.b16 %v267
    %v620 = vunpack.c.h.b16 %v267
    %v621 = vunpack.c.l.b16 %v268
    %v622 = vunpack.c.h.b16 %v268
    %v623 = vunpack.c.l.b16 %v269
    %v624 = vunpack.c.h.b16 %v269
    %v625 = vunpack.c.l.b16 %v270
    %v626 = vunpack.c.h.b16 %v270
    %v627 = vunpack.c.l.b16 %v271
    %v628 = vunpack.c.h.b16 %v271
    %v629 = vunpack.c.l.b16 %v272
    %v630 = vunpack.c.h.b16 %v272
    %v631 = vunpack.c.l.b16 %v273
    %v632 = vunpack.c.h.b16 %v273
    %v633 = vunpack.c.l.b16 %v274
    %v634 = vunpack.c.h.b16 %v274
    %v635 = vunpack.c.l.b16 %v275
    %v636 = vunpack.c.h.b16 %v275
    %v637 = vunpack.c.l.b16 %v276
    %v638 = vunpack.c.h.b16 %v276
    %v639 = vunpack.c.l.b16 %v277
    %v640 = vunpack.c.h.b16 %v277
    %v641 = vunpack.c.l.b16 %v278
    %v642 = vunpack.c.h.b16 %v278
    %v643 = vunpack.c.l.b16 %v279
    %v644 = vunpack.c.h.b16 %v279
    %v645 = vunpack.c.l.b16 %v280
    %v646 = vunpack.c.h.b16 %v280
    %v647 = vunpack.c.l.b16 %v281
    %v648 = vunpack.c.h.b16 %v281
    %v649 = vunpack.c.l.b16 %v282
    %v650 = vunpack.c.h.b16 %v282
    %v651 = vunpack.c.l.b16 %v283
    %v652 = vunpack.c.h.b16 %v283
    %v653 = vunpack.c.l.b16 %v284
    %v654 = vunpack.c.h.b16 %v284
    %v655 = vunpack.c.l.b16 %v285
    %v656 = vunpack.c.h.b16 %v285
    %v657 = vunpack.c.l.b16 %v286
    %v658 = vunpack.c.h.b16 %v286
    %v659 = vunpack.c.l.b16 %v287
    %v660 = vunpack.c.h.b16 %v287
    %v661 = vunpack.c.l.b16 %v288
    %v662 = vunpack.c.h.b16 %v288
    %v663 = vunpack.c.l.b16 %v289
    %v664 = vunpack.c.h.b16 %v289
    %v665 = vunpack.c.l.b16 %v290
    %v666 = vunpack.c.h.b16 %v290
    %v667 = vunpack.c.l.b16 %v291
    %v668 = vunpack.c.h.b16 %v291
    %v669 = vunpack.c.l.b16 %v292
    %v670 = vunpack.c.h.b16 %v292
    %v671 = vunpack.c.l.b16 %v293
    %v672 = vunpack.c.h.b16 %v293
    %v673 = vunpack.c.l.b16 %v294
    %v674 = vunpack.c.h.b16 %v294
    %v675 = vunpack.c.l.b16 %v295
    %v676 = vunpack.c.h.b16 %v295
    %v677 = vunpack.c.l.b16 %v296
    %v678 = vunpack.c.h.b16 %v296
    %v679 = vunpack.c.l.b16 %v297
    %v680 = vunpack.c.h.b16 %v297
    %v681 = vunpack.c.l.b16 %v298
    %v682 = vunpack.c.h.b16 %v298
    %v683 = vunpack.c.l.b16 %v299
    %v684 = vunpack.c.h.b16 %v299
    %v685 = vunpack.c.l.b16 %v300
    %v686 = vunpack.c.h.b16 %v300
    %v687 = vunpack.c.l.b16 %v301
    %v688 = vunpack.c.h.b16 %v301
    %v689 = vunpack.c.l.b16 %v302
    %v690 = vunpack.c.h.b16 %v302
    %v691 = vunpack.c.l.b16 %v303
    %v692 = vunpack.c.h.b16 %v303
    %v693 = vunpack.c.l.b16 %v304
    %v694 = vunpack.c.h.b16 %v304
    %v695 = vunpack.c.l.b16 %v305
    %v696 = vunpack.c.h.b16 %v305
    %v697 = vunpack.c.l.b16 %v306
    %v698 = vunpack.c.h.b16 %v306
    %v699 = vunpack.c.l.b16 %v307
    %v700 = vunpack.c.h.b16 %v307
    %v701 = vunpack.c.l.b16 %v308
    %v702 = vunpack.c.h.b16 %v308
    %v703 = vpack.c.b16 %v451, %v447
    %v704 = vpack.c.b16 %v452, %v448
    %v705 = vpack.c.b16 %v453, %v449
    %v706 = vpack.c.b16 %v454, %v450
    %v707 = vpack.c.b16 %v459, %v455
    %v708 = vpack.c.b16 %v460, %v456
    %v709 = vpack.c.b16 %v461, %v457
    %v710 = vpack.c.b16 %v462, %v458
    %v711 = vpack.c.b16 %v467, %v463
    %v712 = vpack.c.b16 %v468, %v464
    %v713 = vpack.c.b16 %v469, %v465
    %v714 = vpack.c.b16 %v470, %v466
    %v715 = vpack.c.b16 %v475, %v471
    %v716 = vpack.c.b16 %v476, %v472
    %v717 = vpack.c.b16 %v477, %v473
    %v718 = vpack.c.b16 %v478, %v474
    %v719 = vpack.c.b16 %v483, %v479
    %v720 = vpack.c.b16 %v484, %v480
    %v721 = vpack.c.b16 %v485, %v481
    %v722 = vpack.c.b16 %v486, %v482
    %v723 = vpack.c.b16 %v491, %v487
    %v724 = vpack.c.b16 %v492, %v488
    %v725 = vpack.c.b16 %v493, %v489
    %v726 = vpack.c.b16 %v494, %v490
    %v727 = vpack.c.b16 %v499, %v495
    %v728 = vpack.c.b16 %v500, %v496
    %v729 = vpack.c.b16 %v501, %v497
    %v730 = vpack.c.b16 %v502, %v498
    %v731 = vpack.c.b16 %v507, %v503
    %v732 = vpack.c.b16 %v508, %v504
    %v733 = vpack.c.b16 %v509, %v505
    %v734 = vpack.c.b16 %v510, %v506
    %v735 = vpack.c.b16 %v515, %v511
    %v736 = vpack.c.b16 %v516, %v512
    %v737 = vpack.c.b16 %v517, %v513
    %v738 = vpack.c.b16 %v518, %v514
    %v739 = vpack.c.b16 %v523, %v519
    %v740 = vpack.c.b16 %v524, %v520
    %v741 = vpack.c.b16 %v525, %v521
    %v742 = vpack.c.b16 %v526, %v522
    %v743 = vpack.c.b16 %v531, %v527
    %v744 = vpack.c.b16 %v532, %v528
    %v745 = vpack.c.b16 %v533, %v529
    %v746 = vpack.c.b16 %v534, %v530
    %v747 = vpack.c.b16 %v539, %v535
    %v748 = vpack.c.b16 %v540, %v536
    %v749 = vpack.c.b16 %v541, %v537
    %v750 = vpack.c.b16 %v542, %v538
    %v751 = vpack.c.b16 %v547, %v543
    %v752 = vpack.c.b16 %v548, %v544
    %v753 = vpack.c.b16 %v549, %v545
    %v754 = vpack.c.b16 %v550, %v546
    %v755 = vpack.c.b16 %v555, %v551
    %v756 = vpack.c.b16 %v556, %v552
    %v757 = vpack.c.b16 %v557, %v553
    %v758 = vpack.c.b16 %v558, %v554
    %v759 = vpack.c.b16 %v563, %v559
    %v760 = vpack.c.b16 %v564, %v560
    %v761 = vpack.c.b16 %v565, %v561
    %v762 = vpack.c.b16 %v566, %v562
    %v763 = vpack.c.b16 %v571, %v567
    %v764 = vpack.c.b16 %v572, %v568
    %v765 = vpack.c.b16 %v573, %v569
    %v766 = vpack.c.b16 %v574, %v570
    %v767 = vpack.c.b16 %v579, %v575
    %v768 = vpack.c.b16 %v580, %v576
    %v769 = vpack.c.b16 %v581, %v577
    %v770 = vpack.c.b16 %v582, %v578
    %v771 = vpack.c.b16 %v587, %v583
    %v772 = vpack.c.b16 %v588, %v584
    %v773 = vpack.c.b16 %v589, %v585
    %v774 = vpack.c.b16 %v590, %v586
    %v775 = vpack.c.b16 %v595, %v591
    %v776 = vpack.c.b16 %v596, %v592
    %v777 = vpack.c.b16 %v597, %v593
    %v778 = vpack.c.b16 %v598, %v594
    %v779 = vpack.c.b16 %v603, %v599
    %v780 = vpack.c.b16 %v604, %v600
    %v781 = vpack.c.b16 %v605, %v601
    %v782 = vpack.c.b16 %v606, %v602
    %v783 = vpack.c.b16 %v611, %v607
    %v784 = vpack.c.b16 %v612, %v608
    %v785 = vpack.c.b16 %v613, %v609
    %v786 = vpack.c.b16 %v614, %v610
    %v787 = vpack.c.b16 %v619, %v615
    %v788 = vpack.c.b16 %v620, %v616
    %v789 = vpack.c.b16 %v621, %v617
    %v790 = vpack.c.b16 %v622, %v618
    %v791 = vpack.c.b16 %v627, %v623
    %v792 = vpack.c.b16 %v628, %v624
    %v793 = vpack.c.b16 %v629, %v625
    %v794 = vpack.c.b16 %v630, %v626
    %v795 = vpack.c.b16 %v635, %v631
    %v796 = vpack.c.b16 %v636, %v632
    %v797 = vpack.c.b16 %v637, %v633
    %v798 = vpack.c.b16 %v638, %v634
    %v799 = vpack.c.b16 %v643, %v639
    %v800 = vpack.c.b16 %v644, %v640
    %v801 = vpack.c.b16 %v645, %v641
    %v802 = vpack.c.b16 %v646, %v642
    %v803 = vpack.c.b16 %v651, %v647
    %v804 = vpack.c.b16 %v652, %v648
    %v805 = vpack.c.b16 %v653, %v649
    %v806 = vpack.c.b16 %v654, %v650
    %v807 = vpack.c.b16 %v659, %v655
    %v808 = vpack.c.b16 %v660, %v656
    %v809 = vpack.c.b16 %v661, %v657
    %v810 = vpack.c.b16 %v662, %v658
    %v811 = vpack.c.b16 %v667, %v663
    %v812 = vpack.c.b16 %v668, %v664
    %v813 = vpack.c.b16 %v669, %v665
    %v814 = vpack.c.b16 %v670, %v666
    %v815 = vpack.c.b16 %v675, %v671
    %v816 = vpack.c.b16 %v676, %v672
    %v817 = vpack.c.b16 %v677, %v673
    %v818 = vpack.c.b16 %v678, %v674
    %v819 = vpack.c.b16 %v683, %v679
    %v820 = vpack.c.b16 %v684, %v680
    %v821 = vpack.c.b16 %v685, %v681
    %v822 = vpack.c.b16 %v686, %v682
    %v823 = vpack.c.b16 %v691, %v687
    %v824 = vpack.c.b16 %v692, %v688
    %v825 = vpack.c.b16 %v693, %v689
    %v826 = vpack.c.b16 %v694, %v690
    %v827 = vpack.c.b16 %v699, %v695
    %v828 = vpack.c.b16 %v700, %v696
    %v829 = vpack.c.b16 %v701, %v697
    %v830 = vpack.c.b16 %v702, %v698
    %959 = vmatpush.bf16.msra.mxu0 %v731
    %960 = vmatpush.bf16.msra.mxu0 %v727
    %961 = vmatpush.bf16.msra.mxu0 %v723
    %962 = vmatpush.bf16.msra.mxu0 %v719
    %963 = vmatpush.bf16.msra.mxu0 %v715
    %964 = vmatpush.bf16.msra.mxu0 %v711
    %965 = vmatpush.bf16.msra.mxu0 %v707
    %966 = vmatpush.bf16.msra.mxu0 %v703
    %967 = vmatmul.bf16.gmra.mxu0 %v173
    %v968 = vpop.f32.mrf.mxu0
    %v969 = vadd.f32 %v311, %v968
    %v970 = vpop.f32.mrf.mxu0
    %v971 = vadd.f32 %v311, %v970
    %972 = vmatmul.bf16.gmra.mxu0 %v177
    %v973 = vpop.f32.mrf.mxu0
    %v974 = vadd.f32 %v311, %v973
    %v975 = vpop.f32.mrf.mxu0
    %v976 = vadd.f32 %v311, %v975
    %977 = vdwg.mxu0
    %978 = vmatpush.bf16.msra.mxu0 %v763
    %979 = vmatpush.bf16.msra.mxu0 %v759
    %980 = vmatpush.bf16.msra.mxu0 %v755
    %981 = vmatpush.bf16.msra.mxu0 %v751
    %982 = vmatpush.bf16.msra.mxu0 %v747
    %983 = vmatpush.bf16.msra.mxu0 %v743
    %984 = vmatpush.bf16.msra.mxu0 %v739
    %985 = vmatpush.bf16.msra.mxu0 %v735
    %986 = vmatmul.bf16.gmra.mxu0 %v174
    %v987 = vpop.f32.mrf.mxu0
    %v988 = vadd.f32 %v969, %v987
    %v989 = vpop.f32.mrf.mxu0
    %v990 = vadd.f32 %v971, %v989
    %991 = vmatmul.bf16.gmra.mxu0 %v178
    %v992 = vpop.f32.mrf.mxu0
    %v993 = vadd.f32 %v974, %v992
    %v994 = vpop.f32.mrf.mxu0
    %v995 = vadd.f32 %v976, %v994
    %996 = vdwg.mxu0
    %997 = vmatpush.bf16.msra.mxu0 %v795
    %998 = vmatpush.bf16.msra.mxu0 %v791
    %999 = vmatpush.bf16.msra.mxu0 %v787
    %1000 = vmatpush.bf16.msra.mxu0 %v783
    %1001 = vmatpush.bf16.msra.mxu0 %v779
    %1002 = vmatpush.bf16.msra.mxu0 %v775
    %1003 = vmatpush.bf16.msra.mxu0 %v771
    %1004 = vmatpush.bf16.msra.mxu0 %v767
    %1005 = vmatmul.bf16.gmra.mxu0 %v175
    %v1006 = vpop.f32.mrf.mxu0
    %v1007 = vadd.f32 %v988, %v1006
    %v1008 = vpop.f32.mrf.mxu0
    %v1009 = vadd.f32 %v990, %v1008
    %1010 = vmatmul.bf16.gmra.mxu0 %v179
    %v1011 = vpop.f32.mrf.mxu0
    %v1012 = vadd.f32 %v993, %v1011
    %v1013 = vpop.f32.mrf.mxu0
    %v1014 = vadd.f32 %v995, %v1013
    %1015 = vdwg.mxu0
    %1016 = vmatpush.bf16.msra.mxu0 %v827
    %1017 = vmatpush.bf16.msra.mxu0 %v823
    %1018 = vmatpush.bf16.msra.mxu0 %v819
    %1019 = vmatpush.bf16.msra.mxu0 %v815
    %1020 = vmatpush.bf16.msra.mxu0 %v811
    %1021 = vmatpush.bf16.msra.mxu0 %v807
    %1022 = vmatpush.bf16.msra.mxu0 %v803
    %1023 = vmatpush.bf16.msra.mxu0 %v799
    %1024 = vmatmul.bf16.gmra.mxu0 %v176
    %v1025 = vpop.f32.mrf.mxu0
    %v1026 = vadd.f32 %v1007, %v1025
    %v1027 = vpop.f32.mrf.mxu0
    %v1028 = vadd.f32 %v1009, %v1027
    %1029 = vmatmul.bf16.gmra.mxu0 %v180
    %v1030 = vpop.f32.mrf.mxu0
    %v1031 = vadd.f32 %v1012, %v1030
    %v1032 = vpop.f32.mrf.mxu0
    %v1033 = vadd.f32 %v1014, %v1032
    %1034 = vdwg.mxu0
    %1035 = vmatpush.bf16.msra.mxu0 %v732
    %1036 = vmatpush.bf16.msra.mxu0 %v728
    %1037 = vmatpush.bf16.msra.mxu0 %v724
    %1038 = vmatpush.bf16.msra.mxu0 %v720
    %1039 = vmatpush.bf16.msra.mxu0 %v716
    %1040 = vmatpush.bf16.msra.mxu0 %v712
    %1041 = vmatpush.bf16.msra.mxu0 %v708
    %1042 = vmatpush.bf16.msra.mxu0 %v704
    %1043 = vmatmul.bf16.gmra.mxu0 %v173
    %v1044 = vpop.f32.mrf.mxu0
    %v1045 = vadd.f32 %v312, %v1044
    %v1046 = vpop.f32.mrf.mxu0
    %v1047 = vadd.f32 %v312, %v1046
    %1048 = vmatmul.bf16.gmra.mxu0 %v177
    %v1049 = vpop.f32.mrf.mxu0
    %v1050 = vadd.f32 %v312, %v1049
    %v1051 = vpop.f32.mrf.mxu0
    %v1052 = vadd.f32 %v312, %v1051
    %1053 = vdwg.mxu0
    %1054 = vmatpush.bf16.msra.mxu0 %v764
    %1055 = vmatpush.bf16.msra.mxu0 %v760
    %1056 = vmatpush.bf16.msra.mxu0 %v756
    %1057 = vmatpush.bf16.msra.mxu0 %v752
    %1058 = vmatpush.bf16.msra.mxu0 %v748
    %1059 = vmatpush.bf16.msra.mxu0 %v744
    %1060 = vmatpush.bf16.msra.mxu0 %v740
    %1061 = vmatpush.bf16.msra.mxu0 %v736
    %1062 = vmatmul.bf16.gmra.mxu0 %v174
    %v1063 = vpop.f32.mrf.mxu0
    %v1064 = vadd.f32 %v1045, %v1063
    %v1065 = vpop.f32.mrf.mxu0
    %v1066 = vadd.f32 %v1047, %v1065
    %1067 = vmatmul.bf16.gmra.mxu0 %v178
    %v1068 = vpop.f32.mrf.mxu0
    %v1069 = vadd.f32 %v1050, %v1068
    %v1070 = vpop.f32.mrf.mxu0
    %v1071 = vadd.f32 %v1052, %v1070
    %1072 = vdwg.mxu0
    %1073 = vmatpush.bf16.msra.mxu0 %v796
    %1074 = vmatpush.bf16.msra.mxu0 %v792
    %1075 = vmatpush.bf16.msra.mxu0 %v788
    %1076 = vmatpush.bf16.msra.mxu0 %v784
    %1077 = vmatpush.bf16.msra.mxu0 %v780
    %1078 = vmatpush.bf16.msra.mxu0 %v776
    %1079 = vmatpush.bf16.msra.mxu0 %v772
    %1080 = vmatpush.bf16.msra.mxu0 %v768
    %1081 = vmatmul.bf16.gmra.mxu0 %v175
    %v1082 = vpop.f32.mrf.mxu0
    %v1083 = vadd.f32 %v1064, %v1082
    %v1084 = vpop.f32.mrf.mxu0
    %v1085 = vadd.f32 %v1066, %v1084
    %1086 = vmatmul.bf16.gmra.mxu0 %v179
    %v1087 = vpop.f32.mrf.mxu0
    %v1088 = vadd.f32 %v1069, %v1087
    %v1089 = vpop.f32.mrf.mxu0
    %v1090 = vadd.f32 %v1071, %v1089
    %1091 = vdwg.mxu0
    %1092 = vmatpush.bf16.msra.mxu0 %v828
    %1093 = vmatpush.bf16.msra.mxu0 %v824
    %1094 = vmatpush.bf16.msra.mxu0 %v820
    %1095 = vmatpush.bf16.msra.mxu0 %v816
    %1096 = vmatpush.bf16.msra.mxu0 %v812
    %1097 = vmatpush.bf16.msra.mxu0 %v808
    %1098 = vmatpush.bf16.msra.mxu0 %v804
    %1099 = vmatpush.bf16.msra.mxu0 %v800
    %1100 = vmatmul.bf16.gmra.mxu0 %v176
    %v1101 = vpop.f32.mrf.mxu0
    %v1102 = vadd.f32 %v1083, %v1101
    %v1103 = vpop.f32.mrf.mxu0
    %v1104 = vadd.f32 %v1085, %v1103
    %1105 = vmatmul.bf16.gmra.mxu0 %v180
    %v1106 = vpop.f32.mrf.mxu0
    %v1107 = vadd.f32 %v1088, %v1106
    %v1108 = vpop.f32.mrf.mxu0
    %v1109 = vadd.f32 %v1090, %v1108
    %1110 = vdwg.mxu0
    %1111 = vmatpush.bf16.msra.mxu0 %v733
    %1112 = vmatpush.bf16.msra.mxu0 %v729
    %1113 = vmatpush.bf16.msra.mxu0 %v725
    %1114 = vmatpush.bf16.msra.mxu0 %v721
    %1115 = vmatpush.bf16.msra.mxu0 %v717
    %1116 = vmatpush.bf16.msra.mxu0 %v713
    %1117 = vmatpush.bf16.msra.mxu0 %v709
    %1118 = vmatpush.bf16.msra.mxu0 %v705
    %1119 = vmatmul.bf16.gmra.mxu0 %v173
    %v1120 = vpop.f32.mrf.mxu0
    %v1121 = vadd.f32 %v313, %v1120
    %v1122 = vpop.f32.mrf.mxu0
    %v1123 = vadd.f32 %v313, %v1122
    %1124 = vmatmul.bf16.gmra.mxu0 %v177
    %v1125 = vpop.f32.mrf.mxu0
    %v1126 = vadd.f32 %v313, %v1125
    %v1127 = vpop.f32.mrf.mxu0
    %v1128 = vadd.f32 %v313, %v1127
    %1129 = vdwg.mxu0
    %1130 = vmatpush.bf16.msra.mxu0 %v765
    %1131 = vmatpush.bf16.msra.mxu0 %v761
    %1132 = vmatpush.bf16.msra.mxu0 %v757
    %1133 = vmatpush.bf16.msra.mxu0 %v753
    %1134 = vmatpush.bf16.msra.mxu0 %v749
    %1135 = vmatpush.bf16.msra.mxu0 %v745
    %1136 = vmatpush.bf16.msra.mxu0 %v741
    %1137 = vmatpush.bf16.msra.mxu0 %v737
    %1138 = vmatmul.bf16.gmra.mxu0 %v174
    %v1139 = vpop.f32.mrf.mxu0
    %v1140 = vadd.f32 %v1121, %v1139
    %v1141 = vpop.f32.mrf.mxu0
    %v1142 = vadd.f32 %v1123, %v1141
    %1143 = vmatmul.bf16.gmra.mxu0 %v178
    %v1144 = vpop.f32.mrf.mxu0
    %v1145 = vadd.f32 %v1126, %v1144
    %v1146 = vpop.f32.mrf.mxu0
    %v1147 = vadd.f32 %v1128, %v1146
    %1148 = vdwg.mxu0
    %1149 = vmatpush.bf16.msra.mxu0 %v797
    %1150 = vmatpush.bf16.msra.mxu0 %v793
    %1151 = vmatpush.bf16.msra.mxu0 %v789
    %1152 = vmatpush.bf16.msra.mxu0 %v785
    %1153 = vmatpush.bf16.msra.mxu0 %v781
    %1154 = vmatpush.bf16.msra.mxu0 %v777
    %1155 = vmatpush.bf16.msra.mxu0 %v773
    %1156 = vmatpush.bf16.msra.mxu0 %v769
    %1157 = vmatmul.bf16.gmra.mxu0 %v175
    %v1158 = vpop.f32.mrf.mxu0
    %v1159 = vadd.f32 %v1140, %v1158
    %v1160 = vpop.f32.mrf.mxu0
    %v1161 = vadd.f32 %v1142, %v1160
    %1162 = vmatmul.bf16.gmra.mxu0 %v179
    %v1163 = vpop.f32.mrf.mxu0
    %v1164 = vadd.f32 %v1145, %v1163
    %v1165 = vpop.f32.mrf.mxu0
    %v1166 = vadd.f32 %v1147, %v1165
    %1167 = vdwg.mxu0
    %1168 = vmatpush.bf16.msra.mxu0 %v829
    %1169 = vmatpush.bf16.msra.mxu0 %v825
    %1170 = vmatpush.bf16.msra.mxu0 %v821
    %1171 = vmatpush.bf16.msra.mxu0 %v817
    %1172 = vmatpush.bf16.msra.mxu0 %v813
    %1173 = vmatpush.bf16.msra.mxu0 %v809
    %1174 = vmatpush.bf16.msra.mxu0 %v805
    %1175 = vmatpush.bf16.msra.mxu0 %v801
    %1176 = vmatmul.bf16.gmra.mxu0 %v176
    %v1177 = vpop.f32.mrf.mxu0
    %v1178 = vadd.f32 %v1159, %v1177
    %v1179 = vpop.f32.mrf.mxu0
    %v1180 = vadd.f32 %v1161, %v1179
    %1181 = vmatmul.bf16.gmra.mxu0 %v180
    %v1182 = vpop.f32.mrf.mxu0
    %v1183 = vadd.f32 %v1164, %v1182
    %v1184 = vpop.f32.mrf.mxu0
    %v1185 = vadd.f32 %v1166, %v1184
    %1186 = vdwg.mxu0
    %1187 = vmatpush.bf16.msra.mxu0 %v734
    %1188 = vmatpush.bf16.msra.mxu0 %v730
    %1189 = vmatpush.bf16.msra.mxu0 %v726
    %1190 = vmatpush.bf16.msra.mxu0 %v722
    %1191 = vmatpush.bf16.msra.mxu0 %v718
    %1192 = vmatpush.bf16.msra.mxu0 %v714
    %1193 = vmatpush.bf16.msra.mxu0 %v710
    %1194 = vmatpush.bf16.msra.mxu0 %v706
    %1195 = vmatmul.bf16.gmra.mxu0 %v173
    %v1196 = vpop.f32.mrf.mxu0
    %v1197 = vadd.f32 %v314, %v1196
    %v1198 = vpop.f32.mrf.mxu0
    %v1199 = vadd.f32 %v314, %v1198
    %1200 = vmatmul.bf16.gmra.mxu0 %v177
    %v1201 = vpop.f32.mrf.mxu0
    %v1202 = vadd.f32 %v314, %v1201
    %v1203 = vpop.f32.mrf.mxu0
    %v1204 = vadd.f32 %v314, %v1203
    %1205 = vdwg.mxu0
    %1206 = vmatpush.bf16.msra.mxu0 %v766
    %1207 = vmatpush.bf16.msra.mxu0 %v762
    %1208 = vmatpush.bf16.msra.mxu0 %v758
    %1209 = vmatpush.bf16.msra.mxu0 %v754
    %1210 = vmatpush.bf16.msra.mxu0 %v750
    %1211 = vmatpush.bf16.msra.mxu0 %v746
    %1212 = vmatpush.bf16.msra.mxu0 %v742
    %1213 = vmatpush.bf16.msra.mxu0 %v738
    %1214 = vmatmul.bf16.gmra.mxu0 %v174
    %v1215 = vpop.f32.mrf.mxu0
    %v1216 = vadd.f32 %v1197, %v1215
    %v1217 = vpop.f32.mrf.mxu0
    %v1218 = vadd.f32 %v1199, %v1217
    %1219 = vmatmul.bf16.gmra.mxu0 %v178
    %v1220 = vpop.f32.mrf.mxu0
    %v1221 = vadd.f32 %v1202, %v1220
    %v1222 = vpop.f32.mrf.mxu0
    %v1223 = vadd.f32 %v1204, %v1222
    %1224 = vdwg.mxu0
    %1225 = vmatpush.bf16.msra.mxu0 %v798
    %1226 = vmatpush.bf16.msra.mxu0 %v794
    %1227 = vmatpush.bf16.msra.mxu0 %v790
    %1228 = vmatpush.bf16.msra.mxu0 %v786
    %1229 = vmatpush.bf16.msra.mxu0 %v782
    %1230 = vmatpush.bf16.msra.mxu0 %v778
    %1231 = vmatpush.bf16.msra.mxu0 %v774
    %1232 = vmatpush.bf16.msra.mxu0 %v770
    %1233 = vmatmul.bf16.gmra.mxu0 %v175
    %v1234 = vpop.f32.mrf.mxu0
    %v1235 = vadd.f32 %v1216, %v1234
    %v1236 = vpop.f32.mrf.mxu0
    %v1237 = vadd.f32 %v1218, %v1236
    %1238 = vmatmul.bf16.gmra.mxu0 %v179
    %v1239 = vpop.f32.mrf.mxu0
    %v1240 = vadd.f32 %v1221, %v1239
    %v1241 = vpop.f32.mrf.mxu0
    %v1242 = vadd.f32 %v1223, %v1241
    %1243 = vdwg.mxu0
    %1244 = vmatpush.bf16.msra.mxu0 %v830
    %1245 = vmatpush.bf16.msra.mxu0 %v826
    %1246 = vmatpush.bf16.msra.mxu0 %v822
    %1247 = vmatpush.bf16.msra.mxu0 %v818
    %1248 = vmatpush.bf16.msra.mxu0 %v814
    %1249 = vmatpush.bf16.msra.mxu0 %v810
    %1250 = vmatpush.bf16.msra.mxu0 %v806
    %1251 = vmatpush.bf16.msra.mxu0 %v802
    %1252 = vmatmul.bf16.gmra.mxu0 %v176
    %v1253 = vpop.f32.mrf.mxu0
    %v1254 = vadd.f32 %v1235, %v1253
    %v1255 = vpop.f32.mrf.mxu0
    %v1256 = vadd.f32 %v1237, %v1255
    %1257 = vmatmul.bf16.gmra.mxu0 %v180
    %v1258 = vpop.f32.mrf.mxu0
    %v1259 = vadd.f32 %v1240, %v1258
    %v1260 = vpop.f32.mrf.mxu0
    %v1261 = vadd.f32 %v1242, %v1260
    %1262 = vdwg.mxu0
    %v1263 = vmax.f32 %v1026, 0.0
    %v1264 = vmax.f32 %v1102, 0.0
    %v1265 = vmax.f32 %v1178, 0.0
    %v1266 = vmax.f32 %v1254, 0.0
    %v1267 = vmax.f32 %v1028, 0.0
    %v1268 = vmax.f32 %v1104, 0.0
    %v1269 = vmax.f32 %v1180, 0.0
    %v1270 = vmax.f32 %v1256, 0.0
    %v1271 = vmax.f32 %v1031, 0.0
    %v1272 = vmax.f32 %v1107, 0.0
    %v1273 = vmax.f32 %v1183, 0.0
    %v1274 = vmax.f32 %v1259, 0.0
    %v1275 = vmax.f32 %v1033, 0.0
    %v1276 = vmax.f32 %v1109, 0.0
    %v1277 = vmax.f32 %v1185, 0.0
    %v1278 = vmax.f32 %v1261, 0.0
    %v1279 = vpack.c.bf16 %v1267, %v1263
    %v1280 = vpack.c.bf16 %v1268, %v1264
    %v1281 = vpack.c.bf16 %v1269, %v1265
    %v1282 = vpack.c.bf16 %v1270, %v1266
    %v1283 = vpack.c.bf16 %v1275, %v1271
    %v1284 = vpack.c.bf16 %v1276, %v1272
    %v1285 = vpack.c.bf16 %v1277, %v1273
    %v1286 = vpack.c.bf16 %v1278, %v1274
    %v1287 = vld [vmem:[#allocation10] sm:$0xff]
    %v1288 = vld [vmem:[#allocation10 + $0x8] sm:$0xff]
    %v1289 = vld [vmem:[#allocation10 + $0x10] sm:$0xff]
    %v1290 = vld [vmem:[#allocation10 + $0x18] sm:$0xff]
    %v1291 = vld [vmem:[#allocation10 + $0x20] sm:$0xff]
    %v1292 = vld [vmem:[#allocation10 + $0x28] sm:$0xff]
    %v1293 = vld [vmem:[#allocation10 + $0x30] sm:$0xff]
    %v1294 = vld [vmem:[#allocation10 + $0x38] sm:$0xff]
    %v1295 = vld [vmem:[#allocation10 + $0x40] sm:$0xff]
    %v1296 = vld [vmem:[#allocation10 + $0x48] sm:$0xff]
    %v1297 = vld [vmem:[#allocation10 + $0x50] sm:$0xff]
    %v1298 = vld [vmem:[#allocation10 + $0x58] sm:$0xff]
    %v1299 = vld [vmem:[#allocation10 + $0x60] sm:$0xff]
    %v1300 = vld [vmem:[#allocation10 + $0x68] sm:$0xff]
    %v1301 = vld [vmem:[#allocation10 + $0x70] sm:$0xff]
    %v1302 = vld [vmem:[#allocation10 + $0x78] sm:$0xff]
    %v1303 = vld [vmem:[#allocation10 + $0x80] sm:$0xff]
    %v1304 = vld [vmem:[#allocation10 + $0x88] sm:$0xff]
    %v1305 = vld [vmem:[#allocation10 + $0x90] sm:$0xff]
    %v1306 = vld [vmem:[#allocation10 + $0x98] sm:$0xff]
    %v1307 = vld [vmem:[#allocation10 + $0xa0] sm:$0xff]
    %v1308 = vld [vmem:[#allocation10 + $0xa8] sm:$0xff]
    %v1309 = vld [vmem:[#allocation10 + $0xb0] sm:$0xff]
    %v1310 = vld [vmem:[#allocation10 + $0xb8] sm:$0xff]
    %v1311 = vld [vmem:[#allocation10 + $0xc0] sm:$0xff]
    %v1312 = vld [vmem:[#allocation10 + $0xc8] sm:$0xff]
    %v1313 = vld [vmem:[#allocation10 + $0xd0] sm:$0xff]
    %v1314 = vld [vmem:[#allocation10 + $0xd8] sm:$0xff]
    %v1315 = vld [vmem:[#allocation10 + $0xe0] sm:$0xff]
    %v1316 = vld [vmem:[#allocation10 + $0xe8] sm:$0xff]
    %v1317 = vld [vmem:[#allocation10 + $0xf0] sm:$0xff]
    %v1318 = vld [vmem:[#allocation10 + $0xf8] sm:$0xff]
    %v1319 = vld [vmem:[#allocation10 + $0x100] sm:$0xff]
    %v1320 = vld [vmem:[#allocation10 + $0x108] sm:$0xff]
    %v1321 = vld [vmem:[#allocation10 + $0x110] sm:$0xff]
    %v1322 = vld [vmem:[#allocation10 + $0x118] sm:$0xff]
    %v1323 = vld [vmem:[#allocation10 + $0x120] sm:$0xff]
    %v1324 = vld [vmem:[#allocation10 + $0x128] sm:$0xff]
    %v1325 = vld [vmem:[#allocation10 + $0x130] sm:$0xff]
    %v1326 = vld [vmem:[#allocation10 + $0x138] sm:$0xff]
    %v1327 = vld [vmem:[#allocation10 + $0x140] sm:$0xff]
    %v1328 = vld [vmem:[#allocation10 + $0x148] sm:$0xff]
    %v1329 = vld [vmem:[#allocation10 + $0x150] sm:$0xff]
    %v1330 = vld [vmem:[#allocation10 + $0x158] sm:$0xff]
    %v1331 = vld [vmem:[#allocation10 + $0x160] sm:$0xff]
    %v1332 = vld [vmem:[#allocation10 + $0x168] sm:$0xff]
    %v1333 = vld [vmem:[#allocation10 + $0x170] sm:$0xff]
    %v1334 = vld [vmem:[#allocation10 + $0x178] sm:$0xff]
    %v1335 = vld [vmem:[#allocation10 + $0x180] sm:$0xff]
    %v1336 = vld [vmem:[#allocation10 + $0x188] sm:$0xff]
    %v1337 = vld [vmem:[#allocation10 + $0x190] sm:$0xff]
    %v1338 = vld [vmem:[#allocation10 + $0x198] sm:$0xff]
    %v1339 = vld [vmem:[#allocation10 + $0x1a0] sm:$0xff]
    %v1340 = vld [vmem:[#allocation10 + $0x1a8] sm:$0xff]
    %v1341 = vld [vmem:[#allocation10 + $0x1b0] sm:$0xff]
    %v1342 = vld [vmem:[#allocation10 + $0x1b8] sm:$0xff]
    %v1343 = vld [vmem:[#allocation10 + $0x1c0] sm:$0xff]
    %v1344 = vld [vmem:[#allocation10 + $0x1c8] sm:$0xff]
    %v1345 = vld [vmem:[#allocation10 + $0x1d0] sm:$0xff]
    %v1346 = vld [vmem:[#allocation10 + $0x1d8] sm:$0xff]
    %v1347 = vld [vmem:[#allocation10 + $0x1e0] sm:$0xff]
    %v1348 = vld [vmem:[#allocation10 + $0x1e8] sm:$0xff]
    %v1349 = vld [vmem:[#allocation10 + $0x1f0] sm:$0xff]
    %v1350 = vld [vmem:[#allocation10 + $0x1f8] sm:$0xff]
    %v1351 = vld [vmem:[#allocation10 + $0x200] sm:$0xff]
    %v1352 = vld [vmem:[#allocation10 + $0x208] sm:$0xff]
    %v1353 = vld [vmem:[#allocation10 + $0x210] sm:$0xff]
    %v1354 = vld [vmem:[#allocation10 + $0x218] sm:$0xff]
    %v1355 = vld [vmem:[#allocation10 + $0x220] sm:$0xff]
    %v1356 = vld [vmem:[#allocation10 + $0x228] sm:$0xff]
    %v1357 = vld [vmem:[#allocation10 + $0x230] sm:$0xff]
    %v1358 = vld [vmem:[#allocation10 + $0x238] sm:$0xff]
    %v1359 = vld [vmem:[#allocation10 + $0x240] sm:$0xff]
    %v1360 = vld [vmem:[#allocation10 + $0x248] sm:$0xff]
    %v1361 = vld [vmem:[#allocation10 + $0x250] sm:$0xff]
    %v1362 = vld [vmem:[#allocation10 + $0x258] sm:$0xff]
    %v1363 = vld [vmem:[#allocation10 + $0x260] sm:$0xff]
    %v1364 = vld [vmem:[#allocation10 + $0x268] sm:$0xff]
    %v1365 = vld [vmem:[#allocation10 + $0x270] sm:$0xff]
    %v1366 = vld [vmem:[#allocation10 + $0x278] sm:$0xff]
    %v1367 = vld [vmem:[#allocation10 + $0x280] sm:$0xff]
    %v1368 = vld [vmem:[#allocation10 + $0x288] sm:$0xff]
    %v1369 = vld [vmem:[#allocation10 + $0x290] sm:$0xff]
    %v1370 = vld [vmem:[#allocation10 + $0x298] sm:$0xff]
    %v1371 = vld [vmem:[#allocation10 + $0x2a0] sm:$0xff]
    %v1372 = vld [vmem:[#allocation10 + $0x2a8] sm:$0xff]
    %v1373 = vld [vmem:[#allocation10 + $0x2b0] sm:$0xff]
    %v1374 = vld [vmem:[#allocation10 + $0x2b8] sm:$0xff]
    %v1375 = vld [vmem:[#allocation10 + $0x2c0] sm:$0xff]
    %v1376 = vld [vmem:[#allocation10 + $0x2c8] sm:$0xff]
    %v1377 = vld [vmem:[#allocation10 + $0x2d0] sm:$0xff]
    %v1378 = vld [vmem:[#allocation10 + $0x2d8] sm:$0xff]
    %v1379 = vld [vmem:[#allocation10 + $0x2e0] sm:$0xff]
    %v1380 = vld [vmem:[#allocation10 + $0x2e8] sm:$0xff]
    %v1381 = vld [vmem:[#allocation10 + $0x2f0] sm:$0xff]
    %v1382 = vld [vmem:[#allocation10 + $0x2f8] sm:$0xff]
    %v1383 = vld [vmem:[#allocation10 + $0x300] sm:$0xff]
    %v1384 = vld [vmem:[#allocation10 + $0x308] sm:$0xff]
    %v1385 = vld [vmem:[#allocation10 + $0x310] sm:$0xff]
    %v1386 = vld [vmem:[#allocation10 + $0x318] sm:$0xff]
    %v1387 = vld [vmem:[#allocation10 + $0x320] sm:$0xff]
    %v1388 = vld [vmem:[#allocation10 + $0x328] sm:$0xff]
    %v1389 = vld [vmem:[#allocation10 + $0x330] sm:$0xff]
    %v1390 = vld [vmem:[#allocation10 + $0x338] sm:$0xff]
    %v1391 = vld [vmem:[#allocation10 + $0x340] sm:$0xff]
    %v1392 = vld [vmem:[#allocation10 + $0x348] sm:$0xff]
    %v1393 = vld [vmem:[#allocation10 + $0x350] sm:$0xff]
    %v1394 = vld [vmem:[#allocation10 + $0x358] sm:$0xff]
    %v1395 = vld [vmem:[#allocation10 + $0x360] sm:$0xff]
    %v1396 = vld [vmem:[#allocation10 + $0x368] sm:$0xff]
    %v1397 = vld [vmem:[#allocation10 + $0x370] sm:$0xff]
    %v1398 = vld [vmem:[#allocation10 + $0x378] sm:$0xff]
    %v1399 = vld [vmem:[#allocation10 + $0x380] sm:$0xff]
    %v1400 = vld [vmem:[#allocation10 + $0x388] sm:$0xff]
    %v1401 = vld [vmem:[#allocation10 + $0x390] sm:$0xff]
    %v1402 = vld [vmem:[#allocation10 + $0x398] sm:$0xff]
    %v1403 = vld [vmem:[#allocation10 + $0x3a0] sm:$0xff]
    %v1404 = vld [vmem:[#allocation10 + $0x3a8] sm:$0xff]
    %v1405 = vld [vmem:[#allocation10 + $0x3b0] sm:$0xff]
    %v1406 = vld [vmem:[#allocation10 + $0x3b8] sm:$0xff]
    %v1407 = vld [vmem:[#allocation10 + $0x3c0] sm:$0xff]
    %v1408 = vld [vmem:[#allocation10 + $0x3c8] sm:$0xff]
    %v1409 = vld [vmem:[#allocation10 + $0x3d0] sm:$0xff]
    %v1410 = vld [vmem:[#allocation10 + $0x3d8] sm:$0xff]
    %v1411 = vld [vmem:[#allocation10 + $0x3e0] sm:$0xff]
    %v1412 = vld [vmem:[#allocation10 + $0x3e8] sm:$0xff]
    %v1413 = vld [vmem:[#allocation10 + $0x3f0] sm:$0xff]
    %v1414 = vld [vmem:[#allocation10 + $0x3f8] sm:$0xff]
    %v1415 = vld [vmem:[%s5] sm:$0xf]
    %v1417 = vperm.slane %v1415, 0
    %v1418 = vperm.slane %v1415, 1
    %v1419 = vperm.slane %v1415, 2
    %v1420 = vperm.slane %v1415, 3
    %v1553 = vunpack.c.l.b16 %v1287
    %v1554 = vunpack.c.h.b16 %v1287
    %v1555 = vunpack.c.l.b16 %v1288
    %v1556 = vunpack.c.h.b16 %v1288
    %v1557 = vunpack.c.l.b16 %v1289
    %v1558 = vunpack.c.h.b16 %v1289
    %v1559 = vunpack.c.l.b16 %v1290
    %v1560 = vunpack.c.h.b16 %v1290
    %v1561 = vunpack.c.l.b16 %v1291
    %v1562 = vunpack.c.h.b16 %v1291
    %v1563 = vunpack.c.l.b16 %v1292
    %v1564 = vunpack.c.h.b16 %v1292
    %v1565 = vunpack.c.l.b16 %v1293
    %v1566 = vunpack.c.h.b16 %v1293
    %v1567 = vunpack.c.l.b16 %v1294
    %v1568 = vunpack.c.h.b16 %v1294
    %v1569 = vunpack.c.l.b16 %v1295
    %v1570 = vunpack.c.h.b16 %v1295
    %v1571 = vunpack.c.l.b16 %v1296
    %v1572 = vunpack.c.h.b16 %v1296
    %v1573 = vunpack.c.l.b16 %v1297
    %v1574 = vunpack.c.h.b16 %v1297
    %v1575 = vunpack.c.l.b16 %v1298
    %v1576 = vunpack.c.h.b16 %v1298
    %v1577 = vunpack.c.l.b16 %v1299
    %v1578 = vunpack.c.h.b16 %v1299
    %v1579 = vunpack.c.l.b16 %v1300
    %v1580 = vunpack.c.h.b16 %v1300
    %v1581 = vunpack.c.l.b16 %v1301
    %v1582 = vunpack.c.h.b16 %v1301
    %v1583 = vunpack.c.l.b16 %v1302
    %v1584 = vunpack.c.h.b16 %v1302
    %v1585 = vunpack.c.l.b16 %v1303
    %v1586 = vunpack.c.h.b16 %v1303
    %v1587 = vunpack.c.l.b16 %v1304
    %v1588 = vunpack.c.h.b16 %v1304
    %v1589 = vunpack.c.l.b16 %v1305
    %v1590 = vunpack.c.h.b16 %v1305
    %v1591 = vunpack.c.l.b16 %v1306
    %v1592 = vunpack.c.h.b16 %v1306
    %v1593 = vunpack.c.l.b16 %v1307
    %v1594 = vunpack.c.h.b16 %v1307
    %v1595 = vunpack.c.l.b16 %v1308
    %v1596 = vunpack.c.h.b16 %v1308
    %v1597 = vunpack.c.l.b16 %v1309
    %v1598 = vunpack.c.h.b16 %v1309
    %v1599 = vunpack.c.l.b16 %v1310
    %v1600 = vunpack.c.h.b16 %v1310
    %v1601 = vunpack.c.l.b16 %v1311
    %v1602 = vunpack.c.h.b16 %v1311
    %v1603 = vunpack.c.l.b16 %v1312
    %v1604 = vunpack.c.h.b16 %v1312
    %v1605 = vunpack.c.l.b16 %v1313
    %v1606 = vunpack.c.h.b16 %v1313
    %v1607 = vunpack.c.l.b16 %v1314
    %v1608 = vunpack.c.h.b16 %v1314
    %v1609 = vunpack.c.l.b16 %v1315
    %v1610 = vunpack.c.h.b16 %v1315
    %v1611 = vunpack.c.l.b16 %v1316
    %v1612 = vunpack.c.h.b16 %v1316
    %v1613 = vunpack.c.l.b16 %v1317
    %v1614 = vunpack.c.h.b16 %v1317
    %v1615 = vunpack.c.l.b16 %v1318
    %v1616 = vunpack.c.h.b16 %v1318
    %v1617 = vunpack.c.l.b16 %v1319
    %v1618 = vunpack.c.h.b16 %v1319
    %v1619 = vunpack.c.l.b16 %v1320
    %v1620 = vunpack.c.h.b16 %v1320
    %v1621 = vunpack.c.l.b16 %v1321
    %v1622 = vunpack.c.h.b16 %v1321
    %v1623 = vunpack.c.l.b16 %v1322
    %v1624 = vunpack.c.h.b16 %v1322
    %v1625 = vunpack.c.l.b16 %v1323
    %v1626 = vunpack.c.h.b16 %v1323
    %v1627 = vunpack.c.l.b16 %v1324
    %v1628 = vunpack.c.h.b16 %v1324
    %v1629 = vunpack.c.l.b16 %v1325
    %v1630 = vunpack.c.h.b16 %v1325
    %v1631 = vunpack.c.l.b16 %v1326
    %v1632 = vunpack.c.h.b16 %v1326
    %v1633 = vunpack.c.l.b16 %v1327
    %v1634 = vunpack.c.h.b16 %v1327
    %v1635 = vunpack.c.l.b16 %v1328
    %v1636 = vunpack.c.h.b16 %v1328
    %v1637 = vunpack.c.l.b16 %v1329
    %v1638 = vunpack.c.h.b16 %v1329
    %v1639 = vunpack.c.l.b16 %v1330
    %v1640 = vunpack.c.h.b16 %v1330
    %v1641 = vunpack.c.l.b16 %v1331
    %v1642 = vunpack.c.h.b16 %v1331
    %v1643 = vunpack.c.l.b16 %v1332
    %v1644 = vunpack.c.h.b16 %v1332
    %v1645 = vunpack.c.l.b16 %v1333
    %v1646 = vunpack.c.h.b16 %v1333
    %v1647 = vunpack.c.l.b16 %v1334
    %v1648 = vunpack.c.h.b16 %v1334
    %v1649 = vunpack.c.l.b16 %v1335
    %v1650 = vunpack.c.h.b16 %v1335
    %v1651 = vunpack.c.l.b16 %v1336
    %v1652 = vunpack.c.h.b16 %v1336
    %v1653 = vunpack.c.l.b16 %v1337
    %v1654 = vunpack.c.h.b16 %v1337
    %v1655 = vunpack.c.l.b16 %v1338
    %v1656 = vunpack.c.h.b16 %v1338
    %v1657 = vunpack.c.l.b16 %v1339
    %v1658 = vunpack.c.h.b16 %v1339
    %v1659 = vunpack.c.l.b16 %v1340
    %v1660 = vunpack.c.h.b16 %v1340
    %v1661 = vunpack.c.l.b16 %v1341
    %v1662 = vunpack.c.h.b16 %v1341
    %v1663 = vunpack.c.l.b16 %v1342
    %v1664 = vunpack.c.h.b16 %v1342
    %v1665 = vunpack.c.l.b16 %v1343
    %v1666 = vunpack.c.h.b16 %v1343
    %v1667 = vunpack.c.l.b16 %v1344
    %v1668 = vunpack.c.h.b16 %v1344
    %v1669 = vunpack.c.l.b16 %v1345
    %v1670 = vunpack.c.h.b16 %v1345
    %v1671 = vunpack.c.l.b16 %v1346
    %v1672 = vunpack.c.h.b16 %v1346
    %v1673 = vunpack.c.l.b16 %v1347
    %v1674 = vunpack.c.h.b16 %v1347
    %v1675 = vunpack.c.l.b16 %v1348
    %v1676 = vunpack.c.h.b16 %v1348
    %v1677 = vunpack.c.l.b16 %v1349
    %v1678 = vunpack.c.h.b16 %v1349
    %v1679 = vunpack.c.l.b16 %v1350
    %v1680 = vunpack.c.h.b16 %v1350
    %v1681 = vunpack.c.l.b16 %v1351
    %v1682 = vunpack.c.h.b16 %v1351
    %v1683 = vunpack.c.l.b16 %v1352
    %v1684 = vunpack.c.h.b16 %v1352
    %v1685 = vunpack.c.l.b16 %v1353
    %v1686 = vunpack.c.h.b16 %v1353
    %v1687 = vunpack.c.l.b16 %v1354
    %v1688 = vunpack.c.h.b16 %v1354
    %v1689 = vunpack.c.l.b16 %v1355
    %v1690 = vunpack.c.h.b16 %v1355
    %v1691 = vunpack.c.l.b16 %v1356
    %v1692 = vunpack.c.h.b16 %v1356
    %v1693 = vunpack.c.l.b16 %v1357
    %v1694 = vunpack.c.h.b16 %v1357
    %v1695 = vunpack.c.l.b16 %v1358
    %v1696 = vunpack.c.h.b16 %v1358
    %v1697 = vunpack.c.l.b16 %v1359
    %v1698 = vunpack.c.h.b16 %v1359
    %v1699 = vunpack.c.l.b16 %v1360
    %v1700 = vunpack.c.h.b16 %v1360
    %v1701 = vunpack.c.l.b16 %v1361
    %v1702 = vunpack.c.h.b16 %v1361
    %v1703 = vunpack.c.l.b16 %v1362
    %v1704 = vunpack.c.h.b16 %v1362
    %v1705 = vunpack.c.l.b16 %v1363
    %v1706 = vunpack.c.h.b16 %v1363
    %v1707 = vunpack.c.l.b16 %v1364
    %v1708 = vunpack.c.h.b16 %v1364
    %v1709 = vunpack.c.l.b16 %v1365
    %v1710 = vunpack.c.h.b16 %v1365
    %v1711 = vunpack.c.l.b16 %v1366
    %v1712 = vunpack.c.h.b16 %v1366
    %v1713 = vunpack.c.l.b16 %v1367
    %v1714 = vunpack.c.h.b16 %v1367
    %v1715 = vunpack.c.l.b16 %v1368
    %v1716 = vunpack.c.h.b16 %v1368
    %v1717 = vunpack.c.l.b16 %v1369
    %v1718 = vunpack.c.h.b16 %v1369
    %v1719 = vunpack.c.l.b16 %v1370
    %v1720 = vunpack.c.h.b16 %v1370
    %v1721 = vunpack.c.l.b16 %v1371
    %v1722 = vunpack.c.h.b16 %v1371
    %v1723 = vunpack.c.l.b16 %v1372
    %v1724 = vunpack.c.h.b16 %v1372
    %v1725 = vunpack.c.l.b16 %v1373
    %v1726 = vunpack.c.h.b16 %v1373
    %v1727 = vunpack.c.l.b16 %v1374
    %v1728 = vunpack.c.h.b16 %v1374
    %v1729 = vunpack.c.l.b16 %v1375
    %v1730 = vunpack.c.h.b16 %v1375
    %v1731 = vunpack.c.l.b16 %v1376
    %v1732 = vunpack.c.h.b16 %v1376
    %v1733 = vunpack.c.l.b16 %v1377
    %v1734 = vunpack.c.h.b16 %v1377
    %v1735 = vunpack.c.l.b16 %v1378
    %v1736 = vunpack.c.h.b16 %v1378
    %v1737 = vunpack.c.l.b16 %v1379
    %v1738 = vunpack.c.h.b16 %v1379
    %v1739 = vunpack.c.l.b16 %v1380
    %v1740 = vunpack.c.h.b16 %v1380
    %v1741 = vunpack.c.l.b16 %v1381
    %v1742 = vunpack.c.h.b16 %v1381
    %v1743 = vunpack.c.l.b16 %v1382
    %v1744 = vunpack.c.h.b16 %v1382
    %v1745 = vunpack.c.l.b16 %v1383
    %v1746 = vunpack.c.h.b16 %v1383
    %v1747 = vunpack.c.l.b16 %v1384
    %v1748 = vunpack.c.h.b16 %v1384
    %v1749 = vunpack.c.l.b16 %v1385
    %v1750 = vunpack.c.h.b16 %v1385
    %v1751 = vunpack.c.l.b16 %v1386
    %v1752 = vunpack.c.h.b16 %v1386
    %v1753 = vunpack.c.l.b16 %v1387
    %v1754 = vunpack.c.h.b16 %v1387
    %v1755 = vunpack.c.l.b16 %v1388
    %v1756 = vunpack.c.h.b16 %v1388
    %v1757 = vunpack.c.l.b16 %v1389
    %v1758 = vunpack.c.h.b16 %v1389
    %v1759 = vunpack.c.l.b16 %v1390
    %v1760 = vunpack.c.h.b16 %v1390
    %v1761 = vunpack.c.l.b16 %v1391
    %v1762 = vunpack.c.h.b16 %v1391
    %v1763 = vunpack.c.l.b16 %v1392
    %v1764 = vunpack.c.h.b16 %v1392
    %v1765 = vunpack.c.l.b16 %v1393
    %v1766 = vunpack.c.h.b16 %v1393
    %v1767 = vunpack.c.l.b16 %v1394
    %v1768 = vunpack.c.h.b16 %v1394
    %v1769 = vunpack.c.l.b16 %v1395
    %v1770 = vunpack.c.h.b16 %v1395
    %v1771 = vunpack.c.l.b16 %v1396
    %v1772 = vunpack.c.h.b16 %v1396
    %v1773 = vunpack.c.l.b16 %v1397
    %v1774 = vunpack.c.h.b16 %v1397
    %v1775 = vunpack.c.l.b16 %v1398
    %v1776 = vunpack.c.h.b16 %v1398
    %v1777 = vunpack.c.l.b16 %v1399
    %v1778 = vunpack.c.h.b16 %v1399
    %v1779 = vunpack.c.l.b16 %v1400
    %v1780 = vunpack.c.h.b16 %v1400
    %v1781 = vunpack.c.l.b16 %v1401
    %v1782 = vunpack.c.h.b16 %v1401
    %v1783 = vunpack.c.l.b16 %v1402
    %v1784 = vunpack.c.h.b16 %v1402
    %v1785 = vunpack.c.l.b16 %v1403
    %v1786 = vunpack.c.h.b16 %v1403
    %v1787 = vunpack.c.l.b16 %v1404
    %v1788 = vunpack.c.h.b16 %v1404
    %v1789 = vunpack.c.l.b16 %v1405
    %v1790 = vunpack.c.h.b16 %v1405
    %v1791 = vunpack.c.l.b16 %v1406
    %v1792 = vunpack.c.h.b16 %v1406
    %v1793 = vunpack.c.l.b16 %v1407
    %v1794 = vunpack.c.h.b16 %v1407
    %v1795 = vunpack.c.l.b16 %v1408
    %v1796 = vunpack.c.h.b16 %v1408
    %v1797 = vunpack.c.l.b16 %v1409
    %v1798 = vunpack.c.h.b16 %v1409
    %v1799 = vunpack.c.l.b16 %v1410
    %v1800 = vunpack.c.h.b16 %v1410
    %v1801 = vunpack.c.l.b16 %v1411
    %v1802 = vunpack.c.h.b16 %v1411
    %v1803 = vunpack.c.l.b16 %v1412
    %v1804 = vunpack.c.h.b16 %v1412
    %v1805 = vunpack.c.l.b16 %v1413
    %v1806 = vunpack.c.h.b16 %v1413
    %v1807 = vunpack.c.l.b16 %v1414
    %v1808 = vunpack.c.h.b16 %v1414
    %v1809 = vpack.c.b16 %v1557, %v1553
    %v1810 = vpack.c.b16 %v1558, %v1554
    %v1811 = vpack.c.b16 %v1559, %v1555
    %v1812 = vpack.c.b16 %v1560, %v1556
    %v1813 = vpack.c.b16 %v1565, %v1561
    %v1814 = vpack.c.b16 %v1566, %v1562
    %v1815 = vpack.c.b16 %v1567, %v1563
    %v1816 = vpack.c.b16 %v1568, %v1564
    %v1817 = vpack.c.b16 %v1573, %v1569
    %v1818 = vpack.c.b16 %v1574, %v1570
    %v1819 = vpack.c.b16 %v1575, %v1571
    %v1820 = vpack.c.b16 %v1576, %v1572
    %v1821 = vpack.c.b16 %v1581, %v1577
    %v1822 = vpack.c.b16 %v1582, %v1578
    %v1823 = vpack.c.b16 %v1583, %v1579
    %v1824 = vpack.c.b16 %v1584, %v1580
    %v1825 = vpack.c.b16 %v1589, %v1585
    %v1826 = vpack.c.b16 %v1590, %v1586
    %v1827 = vpack.c.b16 %v1591, %v1587
    %v1828 = vpack.c.b16 %v1592, %v1588
    %v1829 = vpack.c.b16 %v1597, %v1593
    %v1830 = vpack.c.b16 %v1598, %v1594
    %v1831 = vpack.c.b16 %v1599, %v1595
    %v1832 = vpack.c.b16 %v1600, %v1596
    %v1833 = vpack.c.b16 %v1605, %v1601
    %v1834 = vpack.c.b16 %v1606, %v1602
    %v1835 = vpack.c.b16 %v1607, %v1603
    %v1836 = vpack.c.b16 %v1608, %v1604
    %v1837 = vpack.c.b16 %v1613, %v1609
    %v1838 = vpack.c.b16 %v1614, %v1610
    %v1839 = vpack.c.b16 %v1615, %v1611
    %v1840 = vpack.c.b16 %v1616, %v1612
    %v1841 = vpack.c.b16 %v1621, %v1617
    %v1842 = vpack.c.b16 %v1622, %v1618
    %v1843 = vpack.c.b16 %v1623, %v1619
    %v1844 = vpack.c.b16 %v1624, %v1620
    %v1845 = vpack.c.b16 %v1629, %v1625
    %v1846 = vpack.c.b16 %v1630, %v1626
    %v1847 = vpack.c.b16 %v1631, %v1627
    %v1848 = vpack.c.b16 %v1632, %v1628
    %v1849 = vpack.c.b16 %v1637, %v1633
    %v1850 = vpack.c.b16 %v1638, %v1634
    %v1851 = vpack.c.b16 %v1639, %v1635
    %v1852 = vpack.c.b16 %v1640, %v1636
    %v1853 = vpack.c.b16 %v1645, %v1641
    %v1854 = vpack.c.b16 %v1646, %v1642
    %v1855 = vpack.c.b16 %v1647, %v1643
    %v1856 = vpack.c.b16 %v1648, %v1644
    %v1857 = vpack.c.b16 %v1653, %v1649
    %v1858 = vpack.c.b16 %v1654, %v1650
    %v1859 = vpack.c.b16 %v1655, %v1651
    %v1860 = vpack.c.b16 %v1656, %v1652
    %v1861 = vpack.c.b16 %v1661, %v1657
    %v1862 = vpack.c.b16 %v1662, %v1658
    %v1863 = vpack.c.b16 %v1663, %v1659
    %v1864 = vpack.c.b16 %v1664, %v1660
    %v1865 = vpack.c.b16 %v1669, %v1665
    %v1866 = vpack.c.b16 %v1670, %v1666
    %v1867 = vpack.c.b16 %v1671, %v1667
    %v1868 = vpack.c.b16 %v1672, %v1668
    %v1869 = vpack.c.b16 %v1677, %v1673
    %v1870 = vpack.c.b16 %v1678, %v1674
    %v1871 = vpack.c.b16 %v1679, %v1675
    %v1872 = vpack.c.b16 %v1680, %v1676
    %v1873 = vpack.c.b16 %v1685, %v1681
    %v1874 = vpack.c.b16 %v1686, %v1682
    %v1875 = vpack.c.b16 %v1687, %v1683
    %v1876 = vpack.c.b16 %v1688, %v1684
    %v1877 = vpack.c.b16 %v1693, %v1689
    %v1878 = vpack.c.b16 %v1694, %v1690
    %v1879 = vpack.c.b16 %v1695, %v1691
    %v1880 = vpack.c.b16 %v1696, %v1692
    %v1881 = vpack.c.b16 %v1701, %v1697
    %v1882 = vpack.c.b16 %v1702, %v1698
    %v1883 = vpack.c.b16 %v1703, %v1699
    %v1884 = vpack.c.b16 %v1704, %v1700
    %v1885 = vpack.c.b16 %v1709, %v1705
    %v1886 = vpack.c.b16 %v1710, %v1706
    %v1887 = vpack.c.b16 %v1711, %v1707
    %v1888 = vpack.c.b16 %v1712, %v1708
    %v1889 = vpack.c.b16 %v1717, %v1713
    %v1890 = vpack.c.b16 %v1718, %v1714
    %v1891 = vpack.c.b16 %v1719, %v1715
    %v1892 = vpack.c.b16 %v1720, %v1716
    %v1893 = vpack.c.b16 %v1725, %v1721
    %v1894 = vpack.c.b16 %v1726, %v1722
    %v1895 = vpack.c.b16 %v1727, %v1723
    %v1896 = vpack.c.b16 %v1728, %v1724
    %v1897 = vpack.c.b16 %v1733, %v1729
    %v1898 = vpack.c.b16 %v1734, %v1730
    %v1899 = vpack.c.b16 %v1735, %v1731
    %v1900 = vpack.c.b16 %v1736, %v1732
    %v1901 = vpack.c.b16 %v1741, %v1737
    %v1902 = vpack.c.b16 %v1742, %v1738
    %v1903 = vpack.c.b16 %v1743, %v1739
    %v1904 = vpack.c.b16 %v1744, %v1740
    %v1905 = vpack.c.b16 %v1749, %v1745
    %v1906 = vpack.c.b16 %v1750, %v1746
    %v1907 = vpack.c.b16 %v1751, %v1747
    %v1908 = vpack.c.b16 %v1752, %v1748
    %v1909 = vpack.c.b16 %v1757, %v1753
    %v1910 = vpack.c.b16 %v1758, %v1754
    %v1911 = vpack.c.b16 %v1759, %v1755
    %v1912 = vpack.c.b16 %v1760, %v1756
    %v1913 = vpack.c.b16 %v1765, %v1761
    %v1914 = vpack.c.b16 %v1766, %v1762
    %v1915 = vpack.c.b16 %v1767, %v1763
    %v1916 = vpack.c.b16 %v1768, %v1764
    %v1917 = vpack.c.b16 %v1773, %v1769
    %v1918 = vpack.c.b16 %v1774, %v1770
    %v1919 = vpack.c.b16 %v1775, %v1771
    %v1920 = vpack.c.b16 %v1776, %v1772
    %v1921 = vpack.c.b16 %v1781, %v1777
    %v1922 = vpack.c.b16 %v1782, %v1778
    %v1923 = vpack.c.b16 %v1783, %v1779
    %v1924 = vpack.c.b16 %v1784, %v1780
    %v1925 = vpack.c.b16 %v1789, %v1785
    %v1926 = vpack.c.b16 %v1790, %v1786
    %v1927 = vpack.c.b16 %v1791, %v1787
    %v1928 = vpack.c.b16 %v1792, %v1788
    %v1929 = vpack.c.b16 %v1797, %v1793
    %v1930 = vpack.c.b16 %v1798, %v1794
    %v1931 = vpack.c.b16 %v1799, %v1795
    %v1932 = vpack.c.b16 %v1800, %v1796
    %v1933 = vpack.c.b16 %v1805, %v1801
    %v1934 = vpack.c.b16 %v1806, %v1802
    %v1935 = vpack.c.b16 %v1807, %v1803
    %v1936 = vpack.c.b16 %v1808, %v1804
    %2065 = vmatpush.bf16.msra.mxu0 %v1837
    %2066 = vmatpush.bf16.msra.mxu0 %v1833
    %2067 = vmatpush.bf16.msra.mxu0 %v1829
    %2068 = vmatpush.bf16.msra.mxu0 %v1825
    %2069 = vmatpush.bf16.msra.mxu0 %v1821
    %2070 = vmatpush.bf16.msra.mxu0 %v1817
    %2071 = vmatpush.bf16.msra.mxu0 %v1813
    %2072 = vmatpush.bf16.msra.mxu0 %v1809
    %2073 = vmatmul.bf16.gmra.mxu0 %v1279
    %v2074 = vpop.f32.mrf.mxu0
    %v2075 = vadd.f32 %v1417, %v2074
    %v2076 = vpop.f32.mrf.mxu0
    %v2077 = vadd.f32 %v1417, %v2076
    %2078 = vmatmul.bf16.gmra.mxu0 %v1283
    %v2079 = vpop.f32.mrf.mxu0
    %v2080 = vadd.f32 %v1417, %v2079
    %v2081 = vpop.f32.mrf.mxu0
    %v2082 = vadd.f32 %v1417, %v2081
    %2083 = vdwg.mxu0
    %2084 = vmatpush.bf16.msra.mxu0 %v1869
    %2085 = vmatpush.bf16.msra.mxu0 %v1865
    %2086 = vmatpush.bf16.msra.mxu0 %v1861
    %2087 = vmatpush.bf16.msra.mxu0 %v1857
    %2088 = vmatpush.bf16.msra.mxu0 %v1853
    %2089 = vmatpush.bf16.msra.mxu0 %v1849
    %2090 = vmatpush.bf16.msra.mxu0 %v1845
    %2091 = vmatpush.bf16.msra.mxu0 %v1841
    %2092 = vmatmul.bf16.gmra.mxu0 %v1280
    %v2093 = vpop.f32.mrf.mxu0
    %v2094 = vadd.f32 %v2075, %v2093
    %v2095 = vpop.f32.mrf.mxu0
    %v2096 = vadd.f32 %v2077, %v2095
    %2097 = vmatmul.bf16.gmra.mxu0 %v1284
    %v2098 = vpop.f32.mrf.mxu0
    %v2099 = vadd.f32 %v2080, %v2098
    %v2100 = vpop.f32.mrf.mxu0
    %v2101 = vadd.f32 %v2082, %v2100
    %2102 = vdwg.mxu0
    %2103 = vmatpush.bf16.msra.mxu0 %v1901
    %2104 = vmatpush.bf16.msra.mxu0 %v1897
    %2105 = vmatpush.bf16.msra.mxu0 %v1893
    %2106 = vmatpush.bf16.msra.mxu0 %v1889
    %2107 = vmatpush.bf16.msra.mxu0 %v1885
    %2108 = vmatpush.bf16.msra.mxu0 %v1881
    %2109 = vmatpush.bf16.msra.mxu0 %v1877
    %2110 = vmatpush.bf16.msra.mxu0 %v1873
    %2111 = vmatmul.bf16.gmra.mxu0 %v1281
    %v2112 = vpop.f32.mrf.mxu0
    %v2113 = vadd.f32 %v2094, %v2112
    %v2114 = vpop.f32.mrf.mxu0
    %v2115 = vadd.f32 %v2096, %v2114
    %2116 = vmatmul.bf16.gmra.mxu0 %v1285
    %v2117 = vpop.f32.mrf.mxu0
    %v2118 = vadd.f32 %v2099, %v2117
    %v2119 = vpop.f32.mrf.mxu0
    %v2120 = vadd.f32 %v2101, %v2119
    %2121 = vdwg.mxu0
    %2122 = vmatpush.bf16.msra.mxu0 %v1933
    %2123 = vmatpush.bf16.msra.mxu0 %v1929
    %2124 = vmatpush.bf16.msra.mxu0 %v1925
    %2125 = vmatpush.bf16.msra.mxu0 %v1921
    %2126 = vmatpush.bf16.msra.mxu0 %v1917
    %2127 = vmatpush.bf16.msra.mxu0 %v1913
    %2128 = vmatpush.bf16.msra.mxu0 %v1909
    %2129 = vmatpush.bf16.msra.mxu0 %v1905
    %2130 = vmatmul.bf16.gmra.mxu0 %v1282
    %v2131 = vpop.f32.mrf.mxu0
    %v2132 = vadd.f32 %v2113, %v2131
    %v2133 = vpop.f32.mrf.mxu0
    %v2134 = vadd.f32 %v2115, %v2133
    %2135 = vmatmul.bf16.gmra.mxu0 %v1286
    %v2136 = vpop.f32.mrf.mxu0
    %v2137 = vadd.f32 %v2118, %v2136
    %v2138 = vpop.f32.mrf.mxu0
    %v2139 = vadd.f32 %v2120, %v2138
    %2140 = vdwg.mxu0
    %2141 = vmatpush.bf16.msra.mxu0 %v1838
    %2142 = vmatpush.bf16.msra.mxu0 %v1834
    %2143 = vmatpush.bf16.msra.mxu0 %v1830
    %2144 = vmatpush.bf16.msra.mxu0 %v1826
    %2145 = vmatpush.bf16.msra.mxu0 %v1822
    %2146 = vmatpush.bf16.msra.mxu0 %v1818
    %2147 = vmatpush.bf16.msra.mxu0 %v1814
    %2148 = vmatpush.bf16.msra.mxu0 %v1810
    %2149 = vmatmul.bf16.gmra.mxu0 %v1279
    %v2150 = vpop.f32.mrf.mxu0
    %v2151 = vadd.f32 %v1418, %v2150
    %v2152 = vpop.f32.mrf.mxu0
    %v2153 = vadd.f32 %v1418, %v2152
    %2154 = vmatmul.bf16.gmra.mxu0 %v1283
    %v2155 = vpop.f32.mrf.mxu0
    %v2156 = vadd.f32 %v1418, %v2155
    %v2157 = vpop.f32.mrf.mxu0
    %v2158 = vadd.f32 %v1418, %v2157
    %2159 = vdwg.mxu0
    %2160 = vmatpush.bf16.msra.mxu0 %v1870
    %2161 = vmatpush.bf16.msra.mxu0 %v1866
    %2162 = vmatpush.bf16.msra.mxu0 %v1862
    %2163 = vmatpush.bf16.msra.mxu0 %v1858
    %2164 = vmatpush.bf16.msra.mxu0 %v1854
    %2165 = vmatpush.bf16.msra.mxu0 %v1850
    %2166 = vmatpush.bf16.msra.mxu0 %v1846
    %2167 = vmatpush.bf16.msra.mxu0 %v1842
    %2168 = vmatmul.bf16.gmra.mxu0 %v1280
    %v2169 = vpop.f32.mrf.mxu0
    %v2170 = vadd.f32 %v2151, %v2169
    %v2171 = vpop.f32.mrf.mxu0
    %v2172 = vadd.f32 %v2153, %v2171
    %2173 = vmatmul.bf16.gmra.mxu0 %v1284
    %v2174 = vpop.f32.mrf.mxu0
    %v2175 = vadd.f32 %v2156, %v2174
    %v2176 = vpop.f32.mrf.mxu0
    %v2177 = vadd.f32 %v2158, %v2176
    %2178 = vdwg.mxu0
    %2179 = vmatpush.bf16.msra.mxu0 %v1902
    %2180 = vmatpush.bf16.msra.mxu0 %v1898
    %2181 = vmatpush.bf16.msra.mxu0 %v1894
    %2182 = vmatpush.bf16.msra.mxu0 %v1890
    %2183 = vmatpush.bf16.msra.mxu0 %v1886
    %2184 = vmatpush.bf16.msra.mxu0 %v1882
    %2185 = vmatpush.bf16.msra.mxu0 %v1878
    %2186 = vmatpush.bf16.msra.mxu0 %v1874
    %2187 = vmatmul.bf16.gmra.mxu0 %v1281
    %v2188 = vpop.f32.mrf.mxu0
    %v2189 = vadd.f32 %v2170, %v2188
    %v2190 = vpop.f32.mrf.mxu0
    %v2191 = vadd.f32 %v2172, %v2190
    %2192 = vmatmul.bf16.gmra.mxu0 %v1285
    %v2193 = vpop.f32.mrf.mxu0
    %v2194 = vadd.f32 %v2175, %v2193
    %v2195 = vpop.f32.mrf.mxu0
    %v2196 = vadd.f32 %v2177, %v2195
    %2197 = vdwg.mxu0
    %2198 = vmatpush.bf16.msra.mxu0 %v1934
    %2199 = vmatpush.bf16.msra.mxu0 %v1930
    %2200 = vmatpush.bf16.msra.mxu0 %v1926
    %2201 = vmatpush.bf16.msra.mxu0 %v1922
    %2202 = vmatpush.bf16.msra.mxu0 %v1918
    %2203 = vmatpush.bf16.msra.mxu0 %v1914
    %2204 = vmatpush.bf16.msra.mxu0 %v1910
    %2205 = vmatpush.bf16.msra.mxu0 %v1906
    %2206 = vmatmul.bf16.gmra.mxu0 %v1282
    %v2207 = vpop.f32.mrf.mxu0
    %v2208 = vadd.f32 %v2189, %v2207
    %v2209 = vpop.f32.mrf.mxu0
    %v2210 = vadd.f32 %v2191, %v2209
    %2211 = vmatmul.bf16.gmra.mxu0 %v1286
    %v2212 = vpop.f32.mrf.mxu0
    %v2213 = vadd.f32 %v2194, %v2212
    %v2214 = vpop.f32.mrf.mxu0
    %v2215 = vadd.f32 %v2196, %v2214
    %2216 = vdwg.mxu0
    %2217 = vmatpush.bf16.msra.mxu0 %v1839
    %2218 = vmatpush.bf16.msra.mxu0 %v1835
    %2219 = vmatpush.bf16.msra.mxu0 %v1831
    %2220 = vmatpush.bf16.msra.mxu0 %v1827
    %2221 = vmatpush.bf16.msra.mxu0 %v1823
    %2222 = vmatpush.bf16.msra.mxu0 %v1819
    %2223 = vmatpush.bf16.msra.mxu0 %v1815
    %2224 = vmatpush.bf16.msra.mxu0 %v1811
    %2225 = vmatmul.bf16.gmra.mxu0 %v1279
    %v2226 = vpop.f32.mrf.mxu0
    %v2227 = vadd.f32 %v1419, %v2226
    %v2228 = vpop.f32.mrf.mxu0
    %v2229 = vadd.f32 %v1419, %v2228
    %2230 = vmatmul.bf16.gmra.mxu0 %v1283
    %v2231 = vpop.f32.mrf.mxu0
    %v2232 = vadd.f32 %v1419, %v2231
    %v2233 = vpop.f32.mrf.mxu0
    %v2234 = vadd.f32 %v1419, %v2233
    %2235 = vdwg.mxu0
    %2236 = vmatpush.bf16.msra.mxu0 %v1871
    %2237 = vmatpush.bf16.msra.mxu0 %v1867
    %2238 = vmatpush.bf16.msra.mxu0 %v1863
    %2239 = vmatpush.bf16.msra.mxu0 %v1859
    %2240 = vmatpush.bf16.msra.mxu0 %v1855
    %2241 = vmatpush.bf16.msra.mxu0 %v1851
    %2242 = vmatpush.bf16.msra.mxu0 %v1847
    %2243 = vmatpush.bf16.msra.mxu0 %v1843
    %2244 = vmatmul.bf16.gmra.mxu0 %v1280
    %v2245 = vpop.f32.mrf.mxu0
    %v2246 = vadd.f32 %v2227, %v2245
    %v2247 = vpop.f32.mrf.mxu0
    %v2248 = vadd.f32 %v2229, %v2247
    %2249 = vmatmul.bf16.gmra.mxu0 %v1284
    %v2250 = vpop.f32.mrf.mxu0
    %v2251 = vadd.f32 %v2232, %v2250
    %v2252 = vpop.f32.mrf.mxu0
    %v2253 = vadd.f32 %v2234, %v2252
    %2254 = vdwg.mxu0
    %2255 = vmatpush.bf16.msra.mxu0 %v1903
    %2256 = vmatpush.bf16.msra.mxu0 %v1899
    %2257 = vmatpush.bf16.msra.mxu0 %v1895
    %2258 = vmatpush.bf16.msra.mxu0 %v1891
    %2259 = vmatpush.bf16.msra.mxu0 %v1887
    %2260 = vmatpush.bf16.msra.mxu0 %v1883
    %2261 = vmatpush.bf16.msra.mxu0 %v1879
    %2262 = vmatpush.bf16.msra.mxu0 %v1875
    %2263 = vmatmul.bf16.gmra.mxu0 %v1281
    %v2264 = vpop.f32.mrf.mxu0
    %v2265 = vadd.f32 %v2246, %v2264
    %v2266 = vpop.f32.mrf.mxu0
    %v2267 = vadd.f32 %v2248, %v2266
    %2268 = vmatmul.bf16.gmra.mxu0 %v1285
    %v2269 = vpop.f32.mrf.mxu0
    %v2270 = vadd.f32 %v2251, %v2269
    %v2271 = vpop.f32.mrf.mxu0
    %v2272 = vadd.f32 %v2253, %v2271
    %2273 = vdwg.mxu0
    %2274 = vmatpush.bf16.msra.mxu0 %v1935
    %2275 = vmatpush.bf16.msra.mxu0 %v1931
    %2276 = vmatpush.bf16.msra.mxu0 %v1927
    %2277 = vmatpush.bf16.msra.mxu0 %v1923
    %2278 = vmatpush.bf16.msra.mxu0 %v1919
    %2279 = vmatpush.bf16.msra.mxu0 %v1915
    %2280 = vmatpush.bf16.msra.mxu0 %v1911
    %2281 = vmatpush.bf16.msra.mxu0 %v1907
    %2282 = vmatmul.bf16.gmra.mxu0 %v1282
    %v2283 = vpop.f32.mrf.mxu0
    %v2284 = vadd.f32 %v2265, %v2283
    %v2285 = vpop.f32.mrf.mxu0
    %v2286 = vadd.f32 %v2267, %v2285
    %2287 = vmatmul.bf16.gmra.mxu0 %v1286
    %v2288 = vpop.f32.mrf.mxu0
    %v2289 = vadd.f32 %v2270, %v2288
    %v2290 = vpop.f32.mrf.mxu0
    %v2291 = vadd.f32 %v2272, %v2290
    %2292 = vdwg.mxu0
    %2293 = vmatpush.bf16.msra.mxu0 %v1840
    %2294 = vmatpush.bf16.msra.mxu0 %v1836
    %2295 = vmatpush.bf16.msra.mxu0 %v1832
    %2296 = vmatpush.bf16.msra.mxu0 %v1828
    %2297 = vmatpush.bf16.msra.mxu0 %v1824
    %2298 = vmatpush.bf16.msra.mxu0 %v1820
    %2299 = vmatpush.bf16.msra.mxu0 %v1816
    %2300 = vmatpush.bf16.msra.mxu0 %v1812
    %2301 = vmatmul.bf16.gmra.mxu0 %v1279
    %v2302 = vpop.f32.mrf.mxu0
    %v2303 = vadd.f32 %v1420, %v2302
    %v2304 = vpop.f32.mrf.mxu0
    %v2305 = vadd.f32 %v1420, %v2304
    %2306 = vmatmul.bf16.gmra.mxu0 %v1283
    %v2307 = vpop.f32.mrf.mxu0
    %v2308 = vadd.f32 %v1420, %v2307
    %v2309 = vpop.f32.mrf.mxu0
    %v2310 = vadd.f32 %v1420, %v2309
    %2311 = vdwg.mxu0
    %2312 = vmatpush.bf16.msra.mxu0 %v1872
    %2313 = vmatpush.bf16.msra.mxu0 %v1868
    %2314 = vmatpush.bf16.msra.mxu0 %v1864
    %2315 = vmatpush.bf16.msra.mxu0 %v1860
    %2316 = vmatpush.bf16.msra.mxu0 %v1856
    %2317 = vmatpush.bf16.msra.mxu0 %v1852
    %2318 = vmatpush.bf16.msra.mxu0 %v1848
    %2319 = vmatpush.bf16.msra.mxu0 %v1844
    %2320 = vmatmul.bf16.gmra.mxu0 %v1280
    %v2321 = vpop.f32.mrf.mxu0
    %v2322 = vadd.f32 %v2303, %v2321
    %v2323 = vpop.f32.mrf.mxu0
    %v2324 = vadd.f32 %v2305, %v2323
    %2325 = vmatmul.bf16.gmra.mxu0 %v1284
    %v2326 = vpop.f32.mrf.mxu0
    %v2327 = vadd.f32 %v2308, %v2326
    %v2328 = vpop.f32.mrf.mxu0
    %v2329 = vadd.f32 %v2310, %v2328
    %2330 = vdwg.mxu0
    %2331 = vmatpush.bf16.msra.mxu0 %v1904
    %2332 = vmatpush.bf16.msra.mxu0 %v1900
    %2333 = vmatpush.bf16.msra.mxu0 %v1896
    %2334 = vmatpush.bf16.msra.mxu0 %v1892
    %2335 = vmatpush.bf16.msra.mxu0 %v1888
    %2336 = vmatpush.bf16.msra.mxu0 %v1884
    %2337 = vmatpush.bf16.msra.mxu0 %v1880
    %2338 = vmatpush.bf16.msra.mxu0 %v1876
    %2339 = vmatmul.bf16.gmra.mxu0 %v1281
    %v2340 = vpop.f32.mrf.mxu0
    %v2341 = vadd.f32 %v2322, %v2340
    %v2342 = vpop.f32.mrf.mxu0
    %v2343 = vadd.f32 %v2324, %v2342
    %2344 = vmatmul.bf16.gmra.mxu0 %v1285
    %v2345 = vpop.f32.mrf.mxu0
    %v2346 = vadd.f32 %v2327, %v2345
    %v2347 = vpop.f32.mrf.mxu0
    %v2348 = vadd.f32 %v2329, %v2347
    %2349 = vdwg.mxu0
    %2350 = vmatpush.bf16.msra.mxu0 %v1936
    %2351 = vmatpush.bf16.msra.mxu0 %v1932
    %2352 = vmatpush.bf16.msra.mxu0 %v1928
    %2353 = vmatpush.bf16.msra.mxu0 %v1924
    %2354 = vmatpush.bf16.msra.mxu0 %v1920
    %2355 = vmatpush.bf16.msra.mxu0 %v1916
    %2356 = vmatpush.bf16.msra.mxu0 %v1912
    %2357 = vmatpush.bf16.msra.mxu0 %v1908
    %2358 = vmatmul.bf16.gmra.mxu0 %v1282
    %v2359 = vpop.f32.mrf.mxu0
    %v2360 = vadd.f32 %v2341, %v2359
    %v2361 = vpop.f32.mrf.mxu0
    %v2362 = vadd.f32 %v2343, %v2361
    %2363 = vmatmul.bf16.gmra.mxu0 %v1286
    %v2364 = vpop.f32.mrf.mxu0
    %v2365 = vadd.f32 %v2346, %v2364
    %v2366 = vpop.f32.mrf.mxu0
    %v2367 = vadd.f32 %v2348, %v2366
    %2368 = vdwg.mxu0
    %v2369 = vmax.f32 %v2132, %v2208
    %v2370 = vmax.f32 %v2369, %v2284
    %v2371 = vmax.f32 %v2370, %v2360
    %2372 = vmax.xlane.f32.xlu0 %v2371
    %v2373 = vpop.xlane.xlu0 %2372
    %v2374 = vmax.f32 %v2134, %v2210
    %v2375 = vmax.f32 %v2374, %v2286
    %v2376 = vmax.f32 %v2375, %v2362
    %2377 = vmax.xlane.f32.xlu0 %v2376
    %v2378 = vpop.xlane.xlu0 %2377
    %v2379 = vmax.f32 %v2137, %v2213
    %v2380 = vmax.f32 %v2379, %v2289
    %v2381 = vmax.f32 %v2380, %v2365
    %2382 = vmax.xlane.f32.xlu0 %v2381
    %v2383 = vpop.xlane.xlu0 %2382
    %v2384 = vmax.f32 %v2139, %v2215
    %v2385 = vmax.f32 %v2384, %v2291
    %v2386 = vmax.f32 %v2385, %v2367
    %2387 = vmax.xlane.f32.xlu0 %v2386
    %v2388 = vpop.xlane.xlu0 %2387
    %v2389 = vsub.f32 %v2132, %v2373
    %v2390 = vsub.f32 %v2208, %v2373
    %v2391 = vsub.f32 %v2284, %v2373
    %v2392 = vsub.f32 %v2360, %v2373
    %v2393 = vsub.f32 %v2134, %v2378
    %v2394 = vsub.f32 %v2210, %v2378
    %v2395 = vsub.f32 %v2286, %v2378
    %v2396 = vsub.f32 %v2362, %v2378
    %v2397 = vsub.f32 %v2137, %v2383
    %v2398 = vsub.f32 %v2213, %v2383
    %v2399 = vsub.f32 %v2289, %v2383
    %v2400 = vsub.f32 %v2365, %v2383
    %v2401 = vsub.f32 %v2139, %v2388
    %v2402 = vsub.f32 %v2215, %v2388
    %v2403 = vsub.f32 %v2291, %v2388
    %v2404 = vsub.f32 %v2367, %v2388
    %v2405 = vmul.f32 %v2389, 1.442695
    %v2406 = vpow.pop %v2405
    %v2407 = vmul.f32 %v2390, 1.442695
    %v2408 = vpow.pop %v2407
    %v2409 = vmul.f32 %v2391, 1.442695
    %v2410 = vpow.pop %v2409
    %v2411 = vmul.f32 %v2392, 1.442695
    %v2412 = vpow.pop %v2411
    %v2413 = vmul.f32 %v2393, 1.442695
    %v2414 = vpow.pop %v2413
    %v2415 = vmul.f32 %v2394, 1.442695
    %v2416 = vpow.pop %v2415
    %v2417 = vmul.f32 %v2395, 1.442695
    %v2418 = vpow.pop %v2417
    %v2419 = vmul.f32 %v2396, 1.442695
    %v2420 = vpow.pop %v2419
    %v2421 = vmul.f32 %v2397, 1.442695
    %v2422 = vpow.pop %v2421
    %v2423 = vmul.f32 %v2398, 1.442695
    %v2424 = vpow.pop %v2423
    %v2425 = vmul.f32 %v2399, 1.442695
    %v2426 = vpow.pop %v2425
    %v2427 = vmul.f32 %v2400, 1.442695
    %v2428 = vpow.pop %v2427
    %v2429 = vmul.f32 %v2401, 1.442695
    %v2430 = vpow.pop %v2429
    %v2431 = vmul.f32 %v2402, 1.442695
    %v2432 = vpow.pop %v2431
    %v2433 = vmul.f32 %v2403, 1.442695
    %v2434 = vpow.pop %v2433
    %v2435 = vmul.f32 %v2404, 1.442695
    %v2436 = vpow.pop %v2435
    %v2437 = vadd.f32 %v2406, %v2408
    %v2438 = vadd.f32 %v2437, %v2410
    %v2439 = vadd.f32 %v2438, %v2412
    %2440 = vadd.xlane.f32.xlu0 %v2439
    %v2441 = vpop.xlane.xlu0 %2440
    %v2442 = vadd.f32 %v2414, %v2416
    %v2443 = vadd.f32 %v2442, %v2418
    %v2444 = vadd.f32 %v2443, %v2420
    %2445 = vadd.xlane.f32.xlu0 %v2444
    %v2446 = vpop.xlane.xlu0 %2445
    %v2447 = vadd.f32 %v2422, %v2424
    %v2448 = vadd.f32 %v2447, %v2426
    %v2449 = vadd.f32 %v2448, %v2428
    %2450 = vadd.xlane.f32.xlu0 %v2449
    %v2451 = vpop.xlane.xlu0 %2450
    %v2452 = vadd.f32 %v2430, %v2432
    %v2453 = vadd.f32 %v2452, %v2434
    %v2454 = vadd.f32 %v2453, %v2436
    %2455 = vadd.xlane.f32.xlu0 %v2454
    %v2456 = vpop.xlane.xlu0 %2455
    %v2457 = vrcp.pop %v2441
    %v2458 = vrcp.pop %v2446
    %v2459 = vrcp.pop %v2451
    %v2460 = vrcp.pop %v2456
    %v2461 = vmul.f32 %v2406, %v2457
    %v2462 = vmul.f32 %v2408, %v2457
    %v2463 = vmul.f32 %v2410, %v2457
    %v2464 = vmul.f32 %v2412, %v2457
    %v2465 = vmul.f32 %v2414, %v2458
    %v2466 = vmul.f32 %v2416, %v2458
    %v2467 = vmul.f32 %v2418, %v2458
    %v2468 = vmul.f32 %v2420, %v2458
    %v2469 = vmul.f32 %v2422, %v2459
    %v2470 = vmul.f32 %v2424, %v2459
    %v2471 = vmul.f32 %v2426, %v2459
    %v2472 = vmul.f32 %v2428, %v2459
    %v2473 = vmul.f32 %v2430, %v2460
    %v2474 = vmul.f32 %v2432, %v2460
    %v2475 = vmul.f32 %v2434, %v2460
    %v2476 = vmul.f32 %v2436, %v2460
    %v2477 = vmul.f32 %v2461, %v157
    %v2478 = vmul.f32 %v2462, %v158
    %v2479 = vmul.f32 %v2463, %v159
    %v2480 = vmul.f32 %v2464, %v160
    %v2481 = vmul.f32 %v2465, %v161
    %v2482 = vmul.f32 %v2466, %v162
    %v2483 = vmul.f32 %v2467, %v163
    %v2484 = vmul.f32 %v2468, %v164
    %v2485 = vmul.f32 %v2469, %v165
    %v2486 = vmul.f32 %v2470, %v166
    %v2487 = vmul.f32 %v2471, %v167
    %v2488 = vmul.f32 %v2472, %v168
    %v2489 = vmul.f32 %v2473, %v169
    %v2490 = vmul.f32 %v2474, %v170
    %v2491 = vmul.f32 %v2475, %v171
    %v2492 = vmul.f32 %v2476, %v172
    %v2493 = vpack.c.bf16 %v2481, %v2477
    %v2494 = vpack.c.bf16 %v2482, %v2478
    %v2495 = vpack.c.bf16 %v2483, %v2479
    %v2496 = vpack.c.bf16 %v2484, %v2480
    %v2497 = vpack.c.bf16 %v2489, %v2485
    %v2498 = vpack.c.bf16 %v2490, %v2486
    %v2499 = vpack.c.bf16 %v2491, %v2487
    %v2500 = vpack.c.bf16 %v2492, %v2488
    %v2501 = vld [vmem:[#allocation11] sm:$0xff]
    %v2502 = vld [vmem:[#allocation11 + $0x8] sm:$0xff]
    %v2503 = vld [vmem:[#allocation11 + $0x10] sm:$0xff]
    %v2504 = vld [vmem:[#allocation11 + $0x18] sm:$0xff]
    %v2505 = vld [vmem:[#allocation11 + $0x20] sm:$0xff]
    %v2506 = vld [vmem:[#allocation11 + $0x28] sm:$0xff]
    %v2507 = vld [vmem:[#allocation11 + $0x30] sm:$0xff]
    %v2508 = vld [vmem:[#allocation11 + $0x38] sm:$0xff]
    %v2509 = vld [vmem:[#allocation11 + $0x40] sm:$0xff]
    %v2510 = vld [vmem:[#allocation11 + $0x48] sm:$0xff]
    %v2511 = vld [vmem:[#allocation11 + $0x50] sm:$0xff]
    %v2512 = vld [vmem:[#allocation11 + $0x58] sm:$0xff]
    %v2513 = vld [vmem:[#allocation11 + $0x60] sm:$0xff]
    %v2514 = vld [vmem:[#allocation11 + $0x68] sm:$0xff]
    %v2515 = vld [vmem:[#allocation11 + $0x70] sm:$0xff]
    %v2516 = vld [vmem:[#allocation11 + $0x78] sm:$0xff]
    %v2517 = vld [vmem:[#allocation11 + $0x80] sm:$0xff]
    %v2518 = vld [vmem:[#allocation11 + $0x88] sm:$0xff]
    %v2519 = vld [vmem:[#allocation11 + $0x90] sm:$0xff]
    %v2520 = vld [vmem:[#allocation11 + $0x98] sm:$0xff]
    %v2521 = vld [vmem:[#allocation11 + $0xa0] sm:$0xff]
    %v2522 = vld [vmem:[#allocation11 + $0xa8] sm:$0xff]
    %v2523 = vld [vmem:[#allocation11 + $0xb0] sm:$0xff]
    %v2524 = vld [vmem:[#allocation11 + $0xb8] sm:$0xff]
    %v2525 = vld [vmem:[#allocation11 + $0xc0] sm:$0xff]
    %v2526 = vld [vmem:[#allocation11 + $0xc8] sm:$0xff]
    %v2527 = vld [vmem:[#allocation11 + $0xd0] sm:$0xff]
    %v2528 = vld [vmem:[#allocation11 + $0xd8] sm:$0xff]
    %v2529 = vld [vmem:[#allocation11 + $0xe0] sm:$0xff]
    %v2530 = vld [vmem:[#allocation11 + $0xe8] sm:$0xff]
    %v2531 = vld [vmem:[#allocation11 + $0xf0] sm:$0xff]
    %v2532 = vld [vmem:[#allocation11 + $0xf8] sm:$0xff]
    %v2533 = vld [vmem:[#allocation11 + $0x100] sm:$0xff]
    %v2534 = vld [vmem:[#allocation11 + $0x108] sm:$0xff]
    %v2535 = vld [vmem:[#allocation11 + $0x110] sm:$0xff]
    %v2536 = vld [vmem:[#allocation11 + $0x118] sm:$0xff]
    %v2537 = vld [vmem:[#allocation11 + $0x120] sm:$0xff]
    %v2538 = vld [vmem:[#allocation11 + $0x128] sm:$0xff]
    %v2539 = vld [vmem:[#allocation11 + $0x130] sm:$0xff]
    %v2540 = vld [vmem:[#allocation11 + $0x138] sm:$0xff]
    %v2541 = vld [vmem:[#allocation11 + $0x140] sm:$0xff]
    %v2542 = vld [vmem:[#allocation11 + $0x148] sm:$0xff]
    %v2543 = vld [vmem:[#allocation11 + $0x150] sm:$0xff]
    %v2544 = vld [vmem:[#allocation11 + $0x158] sm:$0xff]
    %v2545 = vld [vmem:[#allocation11 + $0x160] sm:$0xff]
    %v2546 = vld [vmem:[#allocation11 + $0x168] sm:$0xff]
    %v2547 = vld [vmem:[#allocation11 + $0x170] sm:$0xff]
    %v2548 = vld [vmem:[#allocation11 + $0x178] sm:$0xff]
    %v2549 = vld [vmem:[#allocation11 + $0x180] sm:$0xff]
    %v2550 = vld [vmem:[#allocation11 + $0x188] sm:$0xff]
    %v2551 = vld [vmem:[#allocation11 + $0x190] sm:$0xff]
    %v2552 = vld [vmem:[#allocation11 + $0x198] sm:$0xff]
    %v2553 = vld [vmem:[#allocation11 + $0x1a0] sm:$0xff]
    %v2554 = vld [vmem:[#allocation11 + $0x1a8] sm:$0xff]
    %v2555 = vld [vmem:[#allocation11 + $0x1b0] sm:$0xff]
    %v2556 = vld [vmem:[#allocation11 + $0x1b8] sm:$0xff]
    %v2557 = vld [vmem:[#allocation11 + $0x1c0] sm:$0xff]
    %v2558 = vld [vmem:[#allocation11 + $0x1c8] sm:$0xff]
    %v2559 = vld [vmem:[#allocation11 + $0x1d0] sm:$0xff]
    %v2560 = vld [vmem:[#allocation11 + $0x1d8] sm:$0xff]
    %v2561 = vld [vmem:[#allocation11 + $0x1e0] sm:$0xff]
    %v2562 = vld [vmem:[#allocation11 + $0x1e8] sm:$0xff]
    %v2563 = vld [vmem:[#allocation11 + $0x1f0] sm:$0xff]
    %v2564 = vld [vmem:[#allocation11 + $0x1f8] sm:$0xff]
    %v2565 = vld [vmem:[#allocation11 + $0x200] sm:$0xff]
    %v2566 = vld [vmem:[#allocation11 + $0x208] sm:$0xff]
    %v2567 = vld [vmem:[#allocation11 + $0x210] sm:$0xff]
    %v2568 = vld [vmem:[#allocation11 + $0x218] sm:$0xff]
    %v2569 = vld [vmem:[#allocation11 + $0x220] sm:$0xff]
    %v2570 = vld [vmem:[#allocation11 + $0x228] sm:$0xff]
    %v2571 = vld [vmem:[#allocation11 + $0x230] sm:$0xff]
    %v2572 = vld [vmem:[#allocation11 + $0x238] sm:$0xff]
    %v2573 = vld [vmem:[#allocation11 + $0x240] sm:$0xff]
    %v2574 = vld [vmem:[#allocation11 + $0x248] sm:$0xff]
    %v2575 = vld [vmem:[#allocation11 + $0x250] sm:$0xff]
    %v2576 = vld [vmem:[#allocation11 + $0x258] sm:$0xff]
    %v2577 = vld [vmem:[#allocation11 + $0x260] sm:$0xff]
    %v2578 = vld [vmem:[#allocation11 + $0x268] sm:$0xff]
    %v2579 = vld [vmem:[#allocation11 + $0x270] sm:$0xff]
    %v2580 = vld [vmem:[#allocation11 + $0x278] sm:$0xff]
    %v2581 = vld [vmem:[#allocation11 + $0x280] sm:$0xff]
    %v2582 = vld [vmem:[#allocation11 + $0x288] sm:$0xff]
    %v2583 = vld [vmem:[#allocation11 + $0x290] sm:$0xff]
    %v2584 = vld [vmem:[#allocation11 + $0x298] sm:$0xff]
    %v2585 = vld [vmem:[#allocation11 + $0x2a0] sm:$0xff]
    %v2586 = vld [vmem:[#allocation11 + $0x2a8] sm:$0xff]
    %v2587 = vld [vmem:[#allocation11 + $0x2b0] sm:$0xff]
    %v2588 = vld [vmem:[#allocation11 + $0x2b8] sm:$0xff]
    %v2589 = vld [vmem:[#allocation11 + $0x2c0] sm:$0xff]
    %v2590 = vld [vmem:[#allocation11 + $0x2c8] sm:$0xff]
    %v2591 = vld [vmem:[#allocation11 + $0x2d0] sm:$0xff]
    %v2592 = vld [vmem:[#allocation11 + $0x2d8] sm:$0xff]
    %v2593 = vld [vmem:[#allocation11 + $0x2e0] sm:$0xff]
    %v2594 = vld [vmem:[#allocation11 + $0x2e8] sm:$0xff]
    %v2595 = vld [vmem:[#allocation11 + $0x2f0] sm:$0xff]
    %v2596 = vld [vmem:[#allocation11 + $0x2f8] sm:$0xff]
    %v2597 = vld [vmem:[#allocation11 + $0x300] sm:$0xff]
    %v2598 = vld [vmem:[#allocation11 + $0x308] sm:$0xff]
    %v2599 = vld [vmem:[#allocation11 + $0x310] sm:$0xff]
    %v2600 = vld [vmem:[#allocation11 + $0x318] sm:$0xff]
    %v2601 = vld [vmem:[#allocation11 + $0x320] sm:$0xff]
    %v2602 = vld [vmem:[#allocation11 + $0x328] sm:$0xff]
    %v2603 = vld [vmem:[#allocation11 + $0x330] sm:$0xff]
    %v2604 = vld [vmem:[#allocation11 + $0x338] sm:$0xff]
    %v2605 = vld [vmem:[#allocation11 + $0x340] sm:$0xff]
    %v2606 = vld [vmem:[#allocation11 + $0x348] sm:$0xff]
    %v2607 = vld [vmem:[#allocation11 + $0x350] sm:$0xff]
    %v2608 = vld [vmem:[#allocation11 + $0x358] sm:$0xff]
    %v2609 = vld [vmem:[#allocation11 + $0x360] sm:$0xff]
    %v2610 = vld [vmem:[#allocation11 + $0x368] sm:$0xff]
    %v2611 = vld [vmem:[#allocation11 + $0x370] sm:$0xff]
    %v2612 = vld [vmem:[#allocation11 + $0x378] sm:$0xff]
    %v2613 = vld [vmem:[#allocation11 + $0x380] sm:$0xff]
    %v2614 = vld [vmem:[#allocation11 + $0x388] sm:$0xff]
    %v2615 = vld [vmem:[#allocation11 + $0x390] sm:$0xff]
    %v2616 = vld [vmem:[#allocation11 + $0x398] sm:$0xff]
    %v2617 = vld [vmem:[#allocation11 + $0x3a0] sm:$0xff]
    %v2618 = vld [vmem:[#allocation11 + $0x3a8] sm:$0xff]
    %v2619 = vld [vmem:[#allocation11 + $0x3b0] sm:$0xff]
    %v2620 = vld [vmem:[#allocation11 + $0x3b8] sm:$0xff]
    %v2621 = vld [vmem:[#allocation11 + $0x3c0] sm:$0xff]
    %v2622 = vld [vmem:[#allocation11 + $0x3c8] sm:$0xff]
    %v2623 = vld [vmem:[#allocation11 + $0x3d0] sm:$0xff]
    %v2624 = vld [vmem:[#allocation11 + $0x3d8] sm:$0xff]
    %v2625 = vld [vmem:[#allocation11 + $0x3e0] sm:$0xff]
    %v2626 = vld [vmem:[#allocation11 + $0x3e8] sm:$0xff]
    %v2627 = vld [vmem:[#allocation11 + $0x3f0] sm:$0xff]
    %v2628 = vld [vmem:[#allocation11 + $0x3f8] sm:$0xff]
    %v2629 = vld [vmem:[#allocation11 + $0x400] sm:$0xff]
    %v2630 = vld [vmem:[#allocation11 + $0x408] sm:$0xff]
    %v2631 = vld [vmem:[#allocation11 + $0x410] sm:$0xff]
    %v2632 = vld [vmem:[#allocation11 + $0x418] sm:$0xff]
    %v2633 = vld [vmem:[#allocation11 + $0x420] sm:$0xff]
    %v2634 = vld [vmem:[#allocation11 + $0x428] sm:$0xff]
    %v2635 = vld [vmem:[#allocation11 + $0x430] sm:$0xff]
    %v2636 = vld [vmem:[#allocation11 + $0x438] sm:$0xff]
    %v2637 = vld [vmem:[#allocation11 + $0x440] sm:$0xff]
    %v2638 = vld [vmem:[#allocation11 + $0x448] sm:$0xff]
    %v2639 = vld [vmem:[#allocation11 + $0x450] sm:$0xff]
    %v2640 = vld [vmem:[#allocation11 + $0x458] sm:$0xff]
    %v2641 = vld [vmem:[#allocation11 + $0x460] sm:$0xff]
    %v2642 = vld [vmem:[#allocation11 + $0x468] sm:$0xff]
    %v2643 = vld [vmem:[#allocation11 + $0x470] sm:$0xff]
    %v2644 = vld [vmem:[#allocation11 + $0x478] sm:$0xff]
    %v2645 = vld [vmem:[#allocation11 + $0x480] sm:$0xff]
    %v2646 = vld [vmem:[#allocation11 + $0x488] sm:$0xff]
    %v2647 = vld [vmem:[#allocation11 + $0x490] sm:$0xff]
    %v2648 = vld [vmem:[#allocation11 + $0x498] sm:$0xff]
    %v2649 = vld [vmem:[#allocation11 + $0x4a0] sm:$0xff]
    %v2650 = vld [vmem:[#allocation11 + $0x4a8] sm:$0xff]
    %v2651 = vld [vmem:[#allocation11 + $0x4b0] sm:$0xff]
    %v2652 = vld [vmem:[#allocation11 + $0x4b8] sm:$0xff]
    %v2653 = vld [vmem:[#allocation11 + $0x4c0] sm:$0xff]
    %v2654 = vld [vmem:[#allocation11 + $0x4c8] sm:$0xff]
    %v2655 = vld [vmem:[#allocation11 + $0x4d0] sm:$0xff]
    %v2656 = vld [vmem:[#allocation11 + $0x4d8] sm:$0xff]
    %v2657 = vld [vmem:[#allocation11 + $0x4e0] sm:$0xff]
    %v2658 = vld [vmem:[#allocation11 + $0x4e8] sm:$0xff]
    %v2659 = vld [vmem:[#allocation11 + $0x4f0] sm:$0xff]
    %v2660 = vld [vmem:[#allocation11 + $0x4f8] sm:$0xff]
    %v2661 = vld [vmem:[#allocation11 + $0x500] sm:$0xff]
    %v2662 = vld [vmem:[#allocation11 + $0x508] sm:$0xff]
    %v2663 = vld [vmem:[#allocation11 + $0x510] sm:$0xff]
    %v2664 = vld [vmem:[#allocation11 + $0x518] sm:$0xff]
    %v2665 = vld [vmem:[#allocation11 + $0x520] sm:$0xff]
    %v2666 = vld [vmem:[#allocation11 + $0x528] sm:$0xff]
    %v2667 = vld [vmem:[#allocation11 + $0x530] sm:$0xff]
    %v2668 = vld [vmem:[#allocation11 + $0x538] sm:$0xff]
    %v2669 = vld [vmem:[#allocation11 + $0x540] sm:$0xff]
    %v2670 = vld [vmem:[#allocation11 + $0x548] sm:$0xff]
    %v2671 = vld [vmem:[#allocation11 + $0x550] sm:$0xff]
    %v2672 = vld [vmem:[#allocation11 + $0x558] sm:$0xff]
    %v2673 = vld [vmem:[#allocation11 + $0x560] sm:$0xff]
    %v2674 = vld [vmem:[#allocation11 + $0x568] sm:$0xff]
    %v2675 = vld [vmem:[#allocation11 + $0x570] sm:$0xff]
    %v2676 = vld [vmem:[#allocation11 + $0x578] sm:$0xff]
    %v2677 = vld [vmem:[#allocation11 + $0x580] sm:$0xff]
    %v2678 = vld [vmem:[#allocation11 + $0x588] sm:$0xff]
    %v2679 = vld [vmem:[#allocation11 + $0x590] sm:$0xff]
    %v2680 = vld [vmem:[#allocation11 + $0x598] sm:$0xff]
    %v2681 = vld [vmem:[#allocation11 + $0x5a0] sm:$0xff]
    %v2682 = vld [vmem:[#allocation11 + $0x5a8] sm:$0xff]
    %v2683 = vld [vmem:[#allocation11 + $0x5b0] sm:$0xff]
    %v2684 = vld [vmem:[#allocation11 + $0x5b8] sm:$0xff]
    %v2685 = vld [vmem:[#allocation11 + $0x5c0] sm:$0xff]
    %v2686 = vld [vmem:[#allocation11 + $0x5c8] sm:$0xff]
    %v2687 = vld [vmem:[#allocation11 + $0x5d0] sm:$0xff]
    %v2688 = vld [vmem:[#allocation11 + $0x5d8] sm:$0xff]
    %v2689 = vld [vmem:[#allocation11 + $0x5e0] sm:$0xff]
    %v2690 = vld [vmem:[#allocation11 + $0x5e8] sm:$0xff]
    %v2691 = vld [vmem:[#allocation11 + $0x5f0] sm:$0xff]
    %v2692 = vld [vmem:[#allocation11 + $0x5f8] sm:$0xff]
    %v2693 = vld [vmem:[#allocation11 + $0x600] sm:$0xff]
    %v2694 = vld [vmem:[#allocation11 + $0x608] sm:$0xff]
    %v2695 = vld [vmem:[#allocation11 + $0x610] sm:$0xff]
    %v2696 = vld [vmem:[#allocation11 + $0x618] sm:$0xff]
    %v2697 = vld [vmem:[#allocation11 + $0x620] sm:$0xff]
    %v2698 = vld [vmem:[#allocation11 + $0x628] sm:$0xff]
    %v2699 = vld [vmem:[#allocation11 + $0x630] sm:$0xff]
    %v2700 = vld [vmem:[#allocation11 + $0x638] sm:$0xff]
    %v2701 = vld [vmem:[#allocation11 + $0x640] sm:$0xff]
    %v2702 = vld [vmem:[#allocation11 + $0x648] sm:$0xff]
    %v2703 = vld [vmem:[#allocation11 + $0x650] sm:$0xff]
    %v2704 = vld [vmem:[#allocation11 + $0x658] sm:$0xff]
    %v2705 = vld [vmem:[#allocation11 + $0x660] sm:$0xff]
    %v2706 = vld [vmem:[#allocation11 + $0x668] sm:$0xff]
    %v2707 = vld [vmem:[#allocation11 + $0x670] sm:$0xff]
    %v2708 = vld [vmem:[#allocation11 + $0x678] sm:$0xff]
    %v2709 = vld [vmem:[#allocation11 + $0x680] sm:$0xff]
    %v2710 = vld [vmem:[#allocation11 + $0x688] sm:$0xff]
    %v2711 = vld [vmem:[#allocation11 + $0x690] sm:$0xff]
    %v2712 = vld [vmem:[#allocation11 + $0x698] sm:$0xff]
    %v2713 = vld [vmem:[#allocation11 + $0x6a0] sm:$0xff]
    %v2714 = vld [vmem:[#allocation11 + $0x6a8] sm:$0xff]
    %v2715 = vld [vmem:[#allocation11 + $0x6b0] sm:$0xff]
    %v2716 = vld [vmem:[#allocation11 + $0x6b8] sm:$0xff]
    %v2717 = vld [vmem:[#allocation11 + $0x6c0] sm:$0xff]
    %v2718 = vld [vmem:[#allocation11 + $0x6c8] sm:$0xff]
    %v2719 = vld [vmem:[#allocation11 + $0x6d0] sm:$0xff]
    %v2720 = vld [vmem:[#allocation11 + $0x6d8] sm:$0xff]
    %v2721 = vld [vmem:[#allocation11 + $0x6e0] sm:$0xff]
    %v2722 = vld [vmem:[#allocation11 + $0x6e8] sm:$0xff]
    %v2723 = vld [vmem:[#allocation11 + $0x6f0] sm:$0xff]
    %v2724 = vld [vmem:[#allocation11 + $0x6f8] sm:$0xff]
    %v2725 = vld [vmem:[#allocation11 + $0x700] sm:$0xff]
    %v2726 = vld [vmem:[#allocation11 + $0x708] sm:$0xff]
    %v2727 = vld [vmem:[#allocation11 + $0x710] sm:$0xff]
    %v2728 = vld [vmem:[#allocation11 + $0x718] sm:$0xff]
    %v2729 = vld [vmem:[#allocation11 + $0x720] sm:$0xff]
    %v2730 = vld [vmem:[#allocation11 + $0x728] sm:$0xff]
    %v2731 = vld [vmem:[#allocation11 + $0x730] sm:$0xff]
    %v2732 = vld [vmem:[#allocation11 + $0x738] sm:$0xff]
    %v2733 = vld [vmem:[#allocation11 + $0x740] sm:$0xff]
    %v2734 = vld [vmem:[#allocation11 + $0x748] sm:$0xff]
    %v2735 = vld [vmem:[#allocation11 + $0x750] sm:$0xff]
    %v2736 = vld [vmem:[#allocation11 + $0x758] sm:$0xff]
    %v2737 = vld [vmem:[#allocation11 + $0x760] sm:$0xff]
    %v2738 = vld [vmem:[#allocation11 + $0x768] sm:$0xff]
    %v2739 = vld [vmem:[#allocation11 + $0x770] sm:$0xff]
    %v2740 = vld [vmem:[#allocation11 + $0x778] sm:$0xff]
    %v2741 = vld [vmem:[#allocation11 + $0x780] sm:$0xff]
    %v2742 = vld [vmem:[#allocation11 + $0x788] sm:$0xff]
    %v2743 = vld [vmem:[#allocation11 + $0x790] sm:$0xff]
    %v2744 = vld [vmem:[#allocation11 + $0x798] sm:$0xff]
    %v2745 = vld [vmem:[#allocation11 + $0x7a0] sm:$0xff]
    %v2746 = vld [vmem:[#allocation11 + $0x7a8] sm:$0xff]
    %v2747 = vld [vmem:[#allocation11 + $0x7b0] sm:$0xff]
    %v2748 = vld [vmem:[#allocation11 + $0x7b8] sm:$0xff]
    %v2749 = vld [vmem:[#allocation11 + $0x7c0] sm:$0xff]
    %v2750 = vld [vmem:[#allocation11 + $0x7c8] sm:$0xff]
    %v2751 = vld [vmem:[#allocation11 + $0x7d0] sm:$0xff]
    %v2752 = vld [vmem:[#allocation11 + $0x7d8] sm:$0xff]
    %v2753 = vld [vmem:[#allocation11 + $0x7e0] sm:$0xff]
    %v2754 = vld [vmem:[#allocation11 + $0x7e8] sm:$0xff]
    %v2755 = vld [vmem:[#allocation11 + $0x7f0] sm:$0xff]
    %v2756 = vld [vmem:[#allocation11 + $0x7f8] sm:$0xff]
    %v2757 = vld [vmem:[#allocation13] sm:$0xff]
    %v2759 = vperm.slane %v2757, 0
    %v2760 = vperm.slane %v2757, 1
    %v2761 = vperm.slane %v2757, 2
    %v2762 = vperm.slane %v2757, 3
    %v2763 = vperm.slane %v2757, 4
    %v2764 = vperm.slane %v2757, 5
    %v2765 = vperm.slane %v2757, 6
    %v2766 = vperm.slane %v2757, 7
    %v3031 = vunpack.c.l.b16 %v2501
    %v3032 = vunpack.c.h.b16 %v2501
    %v3033 = vunpack.c.l.b16 %v2502
    %v3034 = vunpack.c.h.b16 %v2502
    %v3035 = vunpack.c.l.b16 %v2503
    %v3036 = vunpack.c.h.b16 %v2503
    %v3037 = vunpack.c.l.b16 %v2504
    %v3038 = vunpack.c.h.b16 %v2504
    %v3039 = vunpack.c.l.b16 %v2505
    %v3040 = vunpack.c.h.b16 %v2505
    %v3041 = vunpack.c.l.b16 %v2506
    %v3042 = vunpack.c.h.b16 %v2506
    %v3043 = vunpack.c.l.b16 %v2507
    %v3044 = vunpack.c.h.b16 %v2507
    %v3045 = vunpack.c.l.b16 %v2508
    %v3046 = vunpack.c.h.b16 %v2508
    %v3047 = vunpack.c.l.b16 %v2509
    %v3048 = vunpack.c.h.b16 %v2509
    %v3049 = vunpack.c.l.b16 %v2510
    %v3050 = vunpack.c.h.b16 %v2510
    %v3051 = vunpack.c.l.b16 %v2511
    %v3052 = vunpack.c.h.b16 %v2511
    %v3053 = vunpack.c.l.b16 %v2512
    %v3054 = vunpack.c.h.b16 %v2512
    %v3055 = vunpack.c.l.b16 %v2513
    %v3056 = vunpack.c.h.b16 %v2513
    %v3057 = vunpack.c.l.b16 %v2514
    %v3058 = vunpack.c.h.b16 %v2514
    %v3059 = vunpack.c.l.b16 %v2515
    %v3060 = vunpack.c.h.b16 %v2515
    %v3061 = vunpack.c.l.b16 %v2516
    %v3062 = vunpack.c.h.b16 %v2516
    %v3063 = vunpack.c.l.b16 %v2517
    %v3064 = vunpack.c.h.b16 %v2517
    %v3065 = vunpack.c.l.b16 %v2518
    %v3066 = vunpack.c.h.b16 %v2518
    %v3067 = vunpack.c.l.b16 %v2519
    %v3068 = vunpack.c.h.b16 %v2519
    %v3069 = vunpack.c.l.b16 %v2520
    %v3070 = vunpack.c.h.b16 %v2520
    %v3071 = vunpack.c.l.b16 %v2521
    %v3072 = vunpack.c.h.b16 %v2521
    %v3073 = vunpack.c.l.b16 %v2522
    %v3074 = vunpack.c.h.b16 %v2522
    %v3075 = vunpack.c.l.b16 %v2523
    %v3076 = vunpack.c.h.b16 %v2523
    %v3077 = vunpack.c.l.b16 %v2524
    %v3078 = vunpack.c.h.b16 %v2524
    %v3079 = vunpack.c.l.b16 %v2525
    %v3080 = vunpack.c.h.b16 %v2525
    %v3081 = vunpack.c.l.b16 %v2526
    %v3082 = vunpack.c.h.b16 %v2526
    %v3083 = vunpack.c.l.b16 %v2527
    %v3084 = vunpack.c.h.b16 %v2527
    %v3085 = vunpack.c.l.b16 %v2528
    %v3086 = vunpack.c.h.b16 %v2528
    %v3087 = vunpack.c.l.b16 %v2529
    %v3088 = vunpack.c.h.b16 %v2529
    %v3089 = vunpack.c.l.b16 %v2530
    %v3090 = vunpack.c.h.b16 %v2530
    %v3091 = vunpack.c.l.b16 %v2531
    %v3092 = vunpack.c.h.b16 %v2531
    %v3093 = vunpack.c.l.b16 %v2532
    %v3094 = vunpack.c.h.b16 %v2532
    %v3095 = vunpack.c.l.b16 %v2533
    %v3096 = vunpack.c.h.b16 %v2533
    %v3097 = vunpack.c.l.b16 %v2534
    %v3098 = vunpack.c.h.b16 %v2534
    %v3099 = vunpack.c.l.b16 %v2535
    %v3100 = vunpack.c.h.b16 %v2535
    %v3101 = vunpack.c.l.b16 %v2536
    %v3102 = vunpack.c.h.b16 %v2536
    %v3103 = vunpack.c.l.b16 %v2537
    %v3104 = vunpack.c.h.b16 %v2537
    %v3105 = vunpack.c.l.b16 %v2538
    %v3106 = vunpack.c.h.b16 %v2538
    %v3107 = vunpack.c.l.b16 %v2539
    %v3108 = vunpack.c.h.b16 %v2539
    %v3109 = vunpack.c.l.b16 %v2540
    %v3110 = vunpack.c.h.b16 %v2540
    %v3111 = vunpack.c.l.b16 %v2541
    %v3112 = vunpack.c.h.b16 %v2541
    %v3113 = vunpack.c.l.b16 %v2542
    %v3114 = vunpack.c.h.b16 %v2542
    %v3115 = vunpack.c.l.b16 %v2543
    %v3116 = vunpack.c.h.b16 %v2543
    %v3117 = vunpack.c.l.b16 %v2544
    %v3118 = vunpack.c.h.b16 %v2544
    %v3119 = vunpack.c.l.b16 %v2545
    %v3120 = vunpack.c.h.b16 %v2545
    %v3121 = vunpack.c.l.b16 %v2546
    %v3122 = vunpack.c.h.b16 %v2546
    %v3123 = vunpack.c.l.b16 %v2547
    %v3124 = vunpack.c.h.b16 %v2547
    %v3125 = vunpack.c.l.b16 %v2548
    %v3126 = vunpack.c.h.b16 %v2548
    %v3127 = vunpack.c.l.b16 %v2549
    %v3128 = vunpack.c.h.b16 %v2549
    %v3129 = vunpack.c.l.b16 %v2550
    %v3130 = vunpack.c.h.b16 %v2550
    %v3131 = vunpack.c.l.b16 %v2551
    %v3132 = vunpack.c.h.b16 %v2551
    %v3133 = vunpack.c.l.b16 %v2552
    %v3134 = vunpack.c.h.b16 %v2552
    %v3135 = vunpack.c.l.b16 %v2553
    %v3136 = vunpack.c.h.b16 %v2553
    %v3137 = vunpack.c.l.b16 %v2554
    %v3138 = vunpack.c.h.b16 %v2554
    %v3139 = vunpack.c.l.b16 %v2555
    %v3140 = vunpack.c.h.b16 %v2555
    %v3141 = vunpack.c.l.b16 %v2556
    %v3142 = vunpack.c.h.b16 %v2556
    %v3143 = vunpack.c.l.b16 %v2557
    %v3144 = vunpack.c.h.b16 %v2557
    %v3145 = vunpack.c.l.b16 %v2558
    %v3146 = vunpack.c.h.b16 %v2558
    %v3147 = vunpack.c.l.b16 %v2559
    %v3148 = vunpack.c.h.b16 %v2559
    %v3149 = vunpack.c.l.b16 %v2560
    %v3150 = vunpack.c.h.b16 %v2560
    %v3151 = vunpack.c.l.b16 %v2561
    %v3152 = vunpack.c.h.b16 %v2561
    %v3153 = vunpack.c.l.b16 %v2562
    %v3154 = vunpack.c.h.b16 %v2562
    %v3155 = vunpack.c.l.b16 %v2563
    %v3156 = vunpack.c.h.b16 %v2563
    %v3157 = vunpack.c.l.b16 %v2564
    %v3158 = vunpack.c.h.b16 %v2564
    %v3159 = vunpack.c.l.b16 %v2565
    %v3160 = vunpack.c.h.b16 %v2565
    %v3161 = vunpack.c.l.b16 %v2566
    %v3162 = vunpack.c.h.b16 %v2566
    %v3163 = vunpack.c.l.b16 %v2567
    %v3164 = vunpack.c.h.b16 %v2567
    %v3165 = vunpack.c.l.b16 %v2568
    %v3166 = vunpack.c.h.b16 %v2568
    %v3167 = vunpack.c.l.b16 %v2569
    %v3168 = vunpack.c.h.b16 %v2569
    %v3169 = vunpack.c.l.b16 %v2570
    %v3170 = vunpack.c.h.b16 %v2570
    %v3171 = vunpack.c.l.b16 %v2571
    %v3172 = vunpack.c.h.b16 %v2571
    %v3173 = vunpack.c.l.b16 %v2572
    %v3174 = vunpack.c.h.b16 %v2572
    %v3175 = vunpack.c.l.b16 %v2573
    %v3176 = vunpack.c.h.b16 %v2573
    %v3177 = vunpack.c.l.b16 %v2574
    %v3178 = vunpack.c.h.b16 %v2574
    %v3179 = vunpack.c.l.b16 %v2575
    %v3180 = vunpack.c.h.b16 %v2575
    %v3181 = vunpack.c.l.b16 %v2576
    %v3182 = vunpack.c.h.b16 %v2576
    %v3183 = vunpack.c.l.b16 %v2577
    %v3184 = vunpack.c.h.b16 %v2577
    %v3185 = vunpack.c.l.b16 %v2578
    %v3186 = vunpack.c.h.b16 %v2578
    %v3187 = vunpack.c.l.b16 %v2579
    %v3188 = vunpack.c.h.b16 %v2579
    %v3189 = vunpack.c.l.b16 %v2580
    %v3190 = vunpack.c.h.b16 %v2580
    %v3191 = vunpack.c.l.b16 %v2581
    %v3192 = vunpack.c.h.b16 %v2581
    %v3193 = vunpack.c.l.b16 %v2582
    %v3194 = vunpack.c.h.b16 %v2582
    %v3195 = vunpack.c.l.b16 %v2583
    %v3196 = vunpack.c.h.b16 %v2583
    %v3197 = vunpack.c.l.b16 %v2584
    %v3198 = vunpack.c.h.b16 %v2584
    %v3199 = vunpack.c.l.b16 %v2585
    %v3200 = vunpack.c.h.b16 %v2585
    %v3201 = vunpack.c.l.b16 %v2586
    %v3202 = vunpack.c.h.b16 %v2586
    %v3203 = vunpack.c.l.b16 %v2587
    %v3204 = vunpack.c.h.b16 %v2587
    %v3205 = vunpack.c.l.b16 %v2588
    %v3206 = vunpack.c.h.b16 %v2588
    %v3207 = vunpack.c.l.b16 %v2589
    %v3208 = vunpack.c.h.b16 %v2589
    %v3209 = vunpack.c.l.b16 %v2590
    %v3210 = vunpack.c.h.b16 %v2590
    %v3211 = vunpack.c.l.b16 %v2591
    %v3212 = vunpack.c.h.b16 %v2591
    %v3213 = vunpack.c.l.b16 %v2592
    %v3214 = vunpack.c.h.b16 %v2592
    %v3215 = vunpack.c.l.b16 %v2593
    %v3216 = vunpack.c.h.b16 %v2593
    %v3217 = vunpack.c.l.b16 %v2594
    %v3218 = vunpack.c.h.b16 %v2594
    %v3219 = vunpack.c.l.b16 %v2595
    %v3220 = vunpack.c.h.b16 %v2595
    %v3221 = vunpack.c.l.b16 %v2596
    %v3222 = vunpack.c.h.b16 %v2596
    %v3223 = vunpack.c.l.b16 %v2597
    %v3224 = vunpack.c.h.b16 %v2597
    %v3225 = vunpack.c.l.b16 %v2598
    %v3226 = vunpack.c.h.b16 %v2598
    %v3227 = vunpack.c.l.b16 %v2599
    %v3228 = vunpack.c.h.b16 %v2599
    %v3229 = vunpack.c.l.b16 %v2600
    %v3230 = vunpack.c.h.b16 %v2600
    %v3231 = vunpack.c.l.b16 %v2601
    %v3232 = vunpack.c.h.b16 %v2601
    %v3233 = vunpack.c.l.b16 %v2602
    %v3234 = vunpack.c.h.b16 %v2602
    %v3235 = vunpack.c.l.b16 %v2603
    %v3236 = vunpack.c.h.b16 %v2603
    %v3237 = vunpack.c.l.b16 %v2604
    %v3238 = vunpack.c.h.b16 %v2604
    %v3239 = vunpack.c.l.b16 %v2605
    %v3240 = vunpack.c.h.b16 %v2605
    %v3241 = vunpack.c.l.b16 %v2606
    %v3242 = vunpack.c.h.b16 %v2606
    %v3243 = vunpack.c.l.b16 %v2607
    %v3244 = vunpack.c.h.b16 %v2607
    %v3245 = vunpack.c.l.b16 %v2608
    %v3246 = vunpack.c.h.b16 %v2608
    %v3247 = vunpack.c.l.b16 %v2609
    %v3248 = vunpack.c.h.b16 %v2609
    %v3249 = vunpack.c.l.b16 %v2610
    %v3250 = vunpack.c.h.b16 %v2610
    %v3251 = vunpack.c.l.b16 %v2611
    %v3252 = vunpack.c.h.b16 %v2611
    %v3253 = vunpack.c.l.b16 %v2612
    %v3254 = vunpack.c.h.b16 %v2612
    %v3255 = vunpack.c.l.b16 %v2613
    %v3256 = vunpack.c.h.b16 %v2613
    %v3257 = vunpack.c.l.b16 %v2614
    %v3258 = vunpack.c.h.b16 %v2614
    %v3259 = vunpack.c.l.b16 %v2615
    %v3260 = vunpack.c.h.b16 %v2615
    %v3261 = vunpack.c.l.b16 %v2616
    %v3262 = vunpack.c.h.b16 %v2616
    %v3263 = vunpack.c.l.b16 %v2617
    %v3264 = vunpack.c.h.b16 %v2617
    %v3265 = vunpack.c.l.b16 %v2618
    %v3266 = vunpack.c.h.b16 %v2618
    %v3267 = vunpack.c.l.b16 %v2619
    %v3268 = vunpack.c.h.b16 %v2619
    %v3269 = vunpack.c.l.b16 %v2620
    %v3270 = vunpack.c.h.b16 %v2620
    %v3271 = vunpack.c.l.b16 %v2621
    %v3272 = vunpack.c.h.b16 %v2621
    %v3273 = vunpack.c.l.b16 %v2622
    %v3274 = vunpack.c.h.b16 %v2622
    %v3275 = vunpack.c.l.b16 %v2623
    %v3276 = vunpack.c.h.b16 %v2623
    %v3277 = vunpack.c.l.b16 %v2624
    %v3278 = vunpack.c.h.b16 %v2624
    %v3279 = vunpack.c.l.b16 %v2625
    %v3280 = vunpack.c.h.b16 %v2625
    %v3281 = vunpack.c.l.b16 %v2626
    %v3282 = vunpack.c.h.b16 %v2626
    %v3283 = vunpack.c.l.b16 %v2627
    %v3284 = vunpack.c.h.b16 %v2627
    %v3285 = vunpack.c.l.b16 %v2628
    %v3286 = vunpack.c.h.b16 %v2628
    %v3287 = vunpack.c.l.b16 %v2629
    %v3288 = vunpack.c.h.b16 %v2629
    %v3289 = vunpack.c.l.b16 %v2630
    %v3290 = vunpack.c.h.b16 %v2630
    %v3291 = vunpack.c.l.b16 %v2631
    %v3292 = vunpack.c.h.b16 %v2631
    %v3293 = vunpack.c.l.b16 %v2632
    %v3294 = vunpack.c.h.b16 %v2632
    %v3295 = vunpack.c.l.b16 %v2633
    %v3296 = vunpack.c.h.b16 %v2633
    %v3297 = vunpack.c.l.b16 %v2634
    %v3298 = vunpack.c.h.b16 %v2634
    %v3299 = vunpack.c.l.b16 %v2635
    %v3300 = vunpack.c.h.b16 %v2635
    %v3301 = vunpack.c.l.b16 %v2636
    %v3302 = vunpack.c.h.b16 %v2636
    %v3303 = vunpack.c.l.b16 %v2637
    %v3304 = vunpack.c.h.b16 %v2637
    %v3305 = vunpack.c.l.b16 %v2638
    %v3306 = vunpack.c.h.b16 %v2638
    %v3307 = vunpack.c.l.b16 %v2639
    %v3308 = vunpack.c.h.b16 %v2639
    %v3309 = vunpack.c.l.b16 %v2640
    %v3310 = vunpack.c.h.b16 %v2640
    %v3311 = vunpack.c.l.b16 %v2641
    %v3312 = vunpack.c.h.b16 %v2641
    %v3313 = vunpack.c.l.b16 %v2642
    %v3314 = vunpack.c.h.b16 %v2642
    %v3315 = vunpack.c.l.b16 %v2643
    %v3316 = vunpack.c.h.b16 %v2643
    %v3317 = vunpack.c.l.b16 %v2644
    %v3318 = vunpack.c.h.b16 %v2644
    %v3319 = vunpack.c.l.b16 %v2645
    %v3320 = vunpack.c.h.b16 %v2645
    %v3321 = vunpack.c.l.b16 %v2646
    %v3322 = vunpack.c.h.b16 %v2646
    %v3323 = vunpack.c.l.b16 %v2647
    %v3324 = vunpack.c.h.b16 %v2647
    %v3325 = vunpack.c.l.b16 %v2648
    %v3326 = vunpack.c.h.b16 %v2648
    %v3327 = vunpack.c.l.b16 %v2649
    %v3328 = vunpack.c.h.b16 %v2649
    %v3329 = vunpack.c.l.b16 %v2650
    %v3330 = vunpack.c.h.b16 %v2650
    %v3331 = vunpack.c.l.b16 %v2651
    %v3332 = vunpack.c.h.b16 %v2651
    %v3333 = vunpack.c.l.b16 %v2652
    %v3334 = vunpack.c.h.b16 %v2652
    %v3335 = vunpack.c.l.b16 %v2653
    %v3336 = vunpack.c.h.b16 %v2653
    %v3337 = vunpack.c.l.b16 %v2654
    %v3338 = vunpack.c.h.b16 %v2654
    %v3339 = vunpack.c.l.b16 %v2655
    %v3340 = vunpack.c.h.b16 %v2655
    %v3341 = vunpack.c.l.b16 %v2656
    %v3342 = vunpack.c.h.b16 %v2656
    %v3343 = vunpack.c.l.b16 %v2657
    %v3344 = vunpack.c.h.b16 %v2657
    %v3345 = vunpack.c.l.b16 %v2658
    %v3346 = vunpack.c.h.b16 %v2658
    %v3347 = vunpack.c.l.b16 %v2659
    %v3348 = vunpack.c.h.b16 %v2659
    %v3349 = vunpack.c.l.b16 %v2660
    %v3350 = vunpack.c.h.b16 %v2660
    %v3351 = vunpack.c.l.b16 %v2661
    %v3352 = vunpack.c.h.b16 %v2661
    %v3353 = vunpack.c.l.b16 %v2662
    %v3354 = vunpack.c.h.b16 %v2662
    %v3355 = vunpack.c.l.b16 %v2663
    %v3356 = vunpack.c.h.b16 %v2663
    %v3357 = vunpack.c.l.b16 %v2664
    %v3358 = vunpack.c.h.b16 %v2664
    %v3359 = vunpack.c.l.b16 %v2665
    %v3360 = vunpack.c.h.b16 %v2665
    %v3361 = vunpack.c.l.b16 %v2666
    %v3362 = vunpack.c.h.b16 %v2666
    %v3363 = vunpack.c.l.b16 %v2667
    %v3364 = vunpack.c.h.b16 %v2667
    %v3365 = vunpack.c.l.b16 %v2668
    %v3366 = vunpack.c.h.b16 %v2668
    %v3367 = vunpack.c.l.b16 %v2669
    %v3368 = vunpack.c.h.b16 %v2669
    %v3369 = vunpack.c.l.b16 %v2670
    %v3370 = vunpack.c.h.b16 %v2670
    %v3371 = vunpack.c.l.b16 %v2671
    %v3372 = vunpack.c.h.b16 %v2671
    %v3373 = vunpack.c.l.b16 %v2672
    %v3374 = vunpack.c.h.b16 %v2672
    %v3375 = vunpack.c.l.b16 %v2673
    %v3376 = vunpack.c.h.b16 %v2673
    %v3377 = vunpack.c.l.b16 %v2674
    %v3378 = vunpack.c.h.b16 %v2674
    %v3379 = vunpack.c.l.b16 %v2675
    %v3380 = vunpack.c.h.b16 %v2675
    %v3381 = vunpack.c.l.b16 %v2676
    %v3382 = vunpack.c.h.b16 %v2676
    %v3383 = vunpack.c.l.b16 %v2677
    %v3384 = vunpack.c.h.b16 %v2677
    %v3385 = vunpack.c.l.b16 %v2678
    %v3386 = vunpack.c.h.b16 %v2678
    %v3387 = vunpack.c.l.b16 %v2679
    %v3388 = vunpack.c.h.b16 %v2679
    %v3389 = vunpack.c.l.b16 %v2680
    %v3390 = vunpack.c.h.b16 %v2680
    %v3391 = vunpack.c.l.b16 %v2681
    %v3392 = vunpack.c.h.b16 %v2681
    %v3393 = vunpack.c.l.b16 %v2682
    %v3394 = vunpack.c.h.b16 %v2682
    %v3395 = vunpack.c.l.b16 %v2683
    %v3396 = vunpack.c.h.b16 %v2683
    %v3397 = vunpack.c.l.b16 %v2684
    %v3398 = vunpack.c.h.b16 %v2684
    %v3399 = vunpack.c.l.b16 %v2685
    %v3400 = vunpack.c.h.b16 %v2685
    %v3401 = vunpack.c.l.b16 %v2686
    %v3402 = vunpack.c.h.b16 %v2686
    %v3403 = vunpack.c.l.b16 %v2687
    %v3404 = vunpack.c.h.b16 %v2687
    %v3405 = vunpack.c.l.b16 %v2688
    %v3406 = vunpack.c.h.b16 %v2688
    %v3407 = vunpack.c.l.b16 %v2689
    %v3408 = vunpack.c.h.b16 %v2689
    %v3409 = vunpack.c.l.b16 %v2690
    %v3410 = vunpack.c.h.b16 %v2690
    %v3411 = vunpack.c.l.b16 %v2691
    %v3412 = vunpack.c.h.b16 %v2691
    %v3413 = vunpack.c.l.b16 %v2692
    %v3414 = vunpack.c.h.b16 %v2692
    %v3415 = vunpack.c.l.b16 %v2693
    %v3416 = vunpack.c.h.b16 %v2693
    %v3417 = vunpack.c.l.b16 %v2694
    %v3418 = vunpack.c.h.b16 %v2694
    %v3419 = vunpack.c.l.b16 %v2695
    %v3420 = vunpack.c.h.b16 %v2695
    %v3421 = vunpack.c.l.b16 %v2696
    %v3422 = vunpack.c.h.b16 %v2696
    %v3423 = vunpack.c.l.b16 %v2697
    %v3424 = vunpack.c.h.b16 %v2697
    %v3425 = vunpack.c.l.b16 %v2698
    %v3426 = vunpack.c.h.b16 %v2698
    %v3427 = vunpack.c.l.b16 %v2699
    %v3428 = vunpack.c.h.b16 %v2699
    %v3429 = vunpack.c.l.b16 %v2700
    %v3430 = vunpack.c.h.b16 %v2700
    %v3431 = vunpack.c.l.b16 %v2701
    %v3432 = vunpack.c.h.b16 %v2701
    %v3433 = vunpack.c.l.b16 %v2702
    %v3434 = vunpack.c.h.b16 %v2702
    %v3435 = vunpack.c.l.b16 %v2703
    %v3436 = vunpack.c.h.b16 %v2703
    %v3437 = vunpack.c.l.b16 %v2704
    %v3438 = vunpack.c.h.b16 %v2704
    %v3439 = vunpack.c.l.b16 %v2705
    %v3440 = vunpack.c.h.b16 %v2705
    %v3441 = vunpack.c.l.b16 %v2706
    %v3442 = vunpack.c.h.b16 %v2706
    %v3443 = vunpack.c.l.b16 %v2707
    %v3444 = vunpack.c.h.b16 %v2707
    %v3445 = vunpack.c.l.b16 %v2708
    %v3446 = vunpack.c.h.b16 %v2708
    %v3447 = vunpack.c.l.b16 %v2709
    %v3448 = vunpack.c.h.b16 %v2709
    %v3449 = vunpack.c.l.b16 %v2710
    %v3450 = vunpack.c.h.b16 %v2710
    %v3451 = vunpack.c.l.b16 %v2711
    %v3452 = vunpack.c.h.b16 %v2711
    %v3453 = vunpack.c.l.b16 %v2712
    %v3454 = vunpack.c.h.b16 %v2712
    %v3455 = vunpack.c.l.b16 %v2713
    %v3456 = vunpack.c.h.b16 %v2713
    %v3457 = vunpack.c.l.b16 %v2714
    %v3458 = vunpack.c.h.b16 %v2714
    %v3459 = vunpack.c.l.b16 %v2715
    %v3460 = vunpack.c.h.b16 %v2715
    %v3461 = vunpack.c.l.b16 %v2716
    %v3462 = vunpack.c.h.b16 %v2716
    %v3463 = vunpack.c.l.b16 %v2717
    %v3464 = vunpack.c.h.b16 %v2717
    %v3465 = vunpack.c.l.b16 %v2718
    %v3466 = vunpack.c.h.b16 %v2718
    %v3467 = vunpack.c.l.b16 %v2719
    %v3468 = vunpack.c.h.b16 %v2719
    %v3469 = vunpack.c.l.b16 %v2720
    %v3470 = vunpack.c.h.b16 %v2720
    %v3471 = vunpack.c.l.b16 %v2721
    %v3472 = vunpack.c.h.b16 %v2721
    %v3473 = vunpack.c.l.b16 %v2722
    %v3474 = vunpack.c.h.b16 %v2722
    %v3475 = vunpack.c.l.b16 %v2723
    %v3476 = vunpack.c.h.b16 %v2723
    %v3477 = vunpack.c.l.b16 %v2724
    %v3478 = vunpack.c.h.b16 %v2724
    %v3479 = vunpack.c.l.b16 %v2725
    %v3480 = vunpack.c.h.b16 %v2725
    %v3481 = vunpack.c.l.b16 %v2726
    %v3482 = vunpack.c.h.b16 %v2726
    %v3483 = vunpack.c.l.b16 %v2727
    %v3484 = vunpack.c.h.b16 %v2727
    %v3485 = vunpack.c.l.b16 %v2728
    %v3486 = vunpack.c.h.b16 %v2728
    %v3487 = vunpack.c.l.b16 %v2729
    %v3488 = vunpack.c.h.b16 %v2729
    %v3489 = vunpack.c.l.b16 %v2730
    %v3490 = vunpack.c.h.b16 %v2730
    %v3491 = vunpack.c.l.b16 %v2731
    %v3492 = vunpack.c.h.b16 %v2731
    %v3493 = vunpack.c.l.b16 %v2732
    %v3494 = vunpack.c.h.b16 %v2732
    %v3495 = vunpack.c.l.b16 %v2733
    %v3496 = vunpack.c.h.b16 %v2733
    %v3497 = vunpack.c.l.b16 %v2734
    %v3498 = vunpack.c.h.b16 %v2734
    %v3499 = vunpack.c.l.b16 %v2735
    %v3500 = vunpack.c.h.b16 %v2735
    %v3501 = vunpack.c.l.b16 %v2736
    %v3502 = vunpack.c.h.b16 %v2736
    %v3503 = vunpack.c.l.b16 %v2737
    %v3504 = vunpack.c.h.b16 %v2737
    %v3505 = vunpack.c.l.b16 %v2738
    %v3506 = vunpack.c.h.b16 %v2738
    %v3507 = vunpack.c.l.b16 %v2739
    %v3508 = vunpack.c.h.b16 %v2739
    %v3509 = vunpack.c.l.b16 %v2740
    %v3510 = vunpack.c.h.b16 %v2740
    %v3511 = vunpack.c.l.b16 %v2741
    %v3512 = vunpack.c.h.b16 %v2741
    %v3513 = vunpack.c.l.b16 %v2742
    %v3514 = vunpack.c.h.b16 %v2742
    %v3515 = vunpack.c.l.b16 %v2743
    %v3516 = vunpack.c.h.b16 %v2743
    %v3517 = vunpack.c.l.b16 %v2744
    %v3518 = vunpack.c.h.b16 %v2744
    %v3519 = vunpack.c.l.b16 %v2745
    %v3520 = vunpack.c.h.b16 %v2745
    %v3521 = vunpack.c.l.b16 %v2746
    %v3522 = vunpack.c.h.b16 %v2746
    %v3523 = vunpack.c.l.b16 %v2747
    %v3524 = vunpack.c.h.b16 %v2747
    %v3525 = vunpack.c.l.b16 %v2748
    %v3526 = vunpack.c.h.b16 %v2748
    %v3527 = vunpack.c.l.b16 %v2749
    %v3528 = vunpack.c.h.b16 %v2749
    %v3529 = vunpack.c.l.b16 %v2750
    %v3530 = vunpack.c.h.b16 %v2750
    %v3531 = vunpack.c.l.b16 %v2751
    %v3532 = vunpack.c.h.b16 %v2751
    %v3533 = vunpack.c.l.b16 %v2752
    %v3534 = vunpack.c.h.b16 %v2752
    %v3535 = vunpack.c.l.b16 %v2753
    %v3536 = vunpack.c.h.b16 %v2753
    %v3537 = vunpack.c.l.b16 %v2754
    %v3538 = vunpack.c.h.b16 %v2754
    %v3539 = vunpack.c.l.b16 %v2755
    %v3540 = vunpack.c.h.b16 %v2755
    %v3541 = vunpack.c.l.b16 %v2756
    %v3542 = vunpack.c.h.b16 %v2756
    %v3543 = vpack.c.b16 %v3039, %v3031
    %v3544 = vpack.c.b16 %v3040, %v3032
    %v3545 = vpack.c.b16 %v3041, %v3033
    %v3546 = vpack.c.b16 %v3042, %v3034
    %v3547 = vpack.c.b16 %v3043, %v3035
    %v3548 = vpack.c.b16 %v3044, %v3036
    %v3549 = vpack.c.b16 %v3045, %v3037
    %v3550 = vpack.c.b16 %v3046, %v3038
    %v3551 = vpack.c.b16 %v3055, %v3047
    %v3552 = vpack.c.b16 %v3056, %v3048
    %v3553 = vpack.c.b16 %v3057, %v3049
    %v3554 = vpack.c.b16 %v3058, %v3050
    %v3555 = vpack.c.b16 %v3059, %v3051
    %v3556 = vpack.c.b16 %v3060, %v3052
    %v3557 = vpack.c.b16 %v3061, %v3053
    %v3558 = vpack.c.b16 %v3062, %v3054
    %v3559 = vpack.c.b16 %v3071, %v3063
    %v3560 = vpack.c.b16 %v3072, %v3064
    %v3561 = vpack.c.b16 %v3073, %v3065
    %v3562 = vpack.c.b16 %v3074, %v3066
    %v3563 = vpack.c.b16 %v3075, %v3067
    %v3564 = vpack.c.b16 %v3076, %v3068
    %v3565 = vpack.c.b16 %v3077, %v3069
    %v3566 = vpack.c.b16 %v3078, %v3070
    %v3567 = vpack.c.b16 %v3087, %v3079
    %v3568 = vpack.c.b16 %v3088, %v3080
    %v3569 = vpack.c.b16 %v3089, %v3081
    %v3570 = vpack.c.b16 %v3090, %v3082
    %v3571 = vpack.c.b16 %v3091, %v3083
    %v3572 = vpack.c.b16 %v3092, %v3084
    %v3573 = vpack.c.b16 %v3093, %v3085
    %v3574 = vpack.c.b16 %v3094, %v3086
    %v3575 = vpack.c.b16 %v3103, %v3095
    %v3576 = vpack.c.b16 %v3104, %v3096
    %v3577 = vpack.c.b16 %v3105, %v3097
    %v3578 = vpack.c.b16 %v3106, %v3098
    %v3579 = vpack.c.b16 %v3107, %v3099
    %v3580 = vpack.c.b16 %v3108, %v3100
    %v3581 = vpack.c.b16 %v3109, %v3101
    %v3582 = vpack.c.b16 %v3110, %v3102
    %v3583 = vpack.c.b16 %v3119, %v3111
    %v3584 = vpack.c.b16 %v3120, %v3112
    %v3585 = vpack.c.b16 %v3121, %v3113
    %v3586 = vpack.c.b16 %v3122, %v3114
    %v3587 = vpack.c.b16 %v3123, %v3115
    %v3588 = vpack.c.b16 %v3124, %v3116
    %v3589 = vpack.c.b16 %v3125, %v3117
    %v3590 = vpack.c.b16 %v3126, %v3118
    %v3591 = vpack.c.b16 %v3135, %v3127
    %v3592 = vpack.c.b16 %v3136, %v3128
    %v3593 = vpack.c.b16 %v3137, %v3129
    %v3594 = vpack.c.b16 %v3138, %v3130
    %v3595 = vpack.c.b16 %v3139, %v3131
    %v3596 = vpack.c.b16 %v3140, %v3132
    %v3597 = vpack.c.b16 %v3141, %v3133
    %v3598 = vpack.c.b16 %v3142, %v3134
    %v3599 = vpack.c.b16 %v3151, %v3143
    %v3600 = vpack.c.b16 %v3152, %v3144
    %v3601 = vpack.c.b16 %v3153, %v3145
    %v3602 = vpack.c.b16 %v3154, %v3146
    %v3603 = vpack.c.b16 %v3155, %v3147
    %v3604 = vpack.c.b16 %v3156, %v3148
    %v3605 = vpack.c.b16 %v3157, %v3149
    %v3606 = vpack.c.b16 %v3158, %v3150
    %v3607 = vpack.c.b16 %v3167, %v3159
    %v3608 = vpack.c.b16 %v3168, %v3160
    %v3609 = vpack.c.b16 %v3169, %v3161
    %v3610 = vpack.c.b16 %v3170, %v3162
    %v3611 = vpack.c.b16 %v3171, %v3163
    %v3612 = vpack.c.b16 %v3172, %v3164
    %v3613 = vpack.c.b16 %v3173, %v3165
    %v3614 = vpack.c.b16 %v3174, %v3166
    %v3615 = vpack.c.b16 %v3183, %v3175
    %v3616 = vpack.c.b16 %v3184, %v3176
    %v3617 = vpack.c.b16 %v3185, %v3177
    %v3618 = vpack.c.b16 %v3186, %v3178
    %v3619 = vpack.c.b16 %v3187, %v3179
    %v3620 = vpack.c.b16 %v3188, %v3180
    %v3621 = vpack.c.b16 %v3189, %v3181
    %v3622 = vpack.c.b16 %v3190, %v3182
    %v3623 = vpack.c.b16 %v3199, %v3191
    %v3624 = vpack.c.b16 %v3200, %v3192
    %v3625 = vpack.c.b16 %v3201, %v3193
    %v3626 = vpack.c.b16 %v3202, %v3194
    %v3627 = vpack.c.b16 %v3203, %v3195
    %v3628 = vpack.c.b16 %v3204, %v3196
    %v3629 = vpack.c.b16 %v3205, %v3197
    %v3630 = vpack.c.b16 %v3206, %v3198
    %v3631 = vpack.c.b16 %v3215, %v3207
    %v3632 = vpack.c.b16 %v3216, %v3208
    %v3633 = vpack.c.b16 %v3217, %v3209
    %v3634 = vpack.c.b16 %v3218, %v3210
    %v3635 = vpack.c.b16 %v3219, %v3211
    %v3636 = vpack.c.b16 %v3220, %v3212
    %v3637 = vpack.c.b16 %v3221, %v3213
    %v3638 = vpack.c.b16 %v3222, %v3214
    %v3639 = vpack.c.b16 %v3231, %v3223
    %v3640 = vpack.c.b16 %v3232, %v3224
    %v3641 = vpack.c.b16 %v3233, %v3225
    %v3642 = vpack.c.b16 %v3234, %v3226
    %v3643 = vpack.c.b16 %v3235, %v3227
    %v3644 = vpack.c.b16 %v3236, %v3228
    %v3645 = vpack.c.b16 %v3237, %v3229
    %v3646 = vpack.c.b16 %v3238, %v3230
    %v3647 = vpack.c.b16 %v3247, %v3239
    %v3648 = vpack.c.b16 %v3248, %v3240
    %v3649 = vpack.c.b16 %v3249, %v3241
    %v3650 = vpack.c.b16 %v3250, %v3242
    %v3651 = vpack.c.b16 %v3251, %v3243
    %v3652 = vpack.c.b16 %v3252, %v3244
    %v3653 = vpack.c.b16 %v3253, %v3245
    %v3654 = vpack.c.b16 %v3254, %v3246
    %v3655 = vpack.c.b16 %v3263, %v3255
    %v3656 = vpack.c.b16 %v3264, %v3256
    %v3657 = vpack.c.b16 %v3265, %v3257
    %v3658 = vpack.c.b16 %v3266, %v3258
    %v3659 = vpack.c.b16 %v3267, %v3259
    %v3660 = vpack.c.b16 %v3268, %v3260
    %v3661 = vpack.c.b16 %v3269, %v3261
    %v3662 = vpack.c.b16 %v3270, %v3262
    %v3663 = vpack.c.b16 %v3279, %v3271
    %v3664 = vpack.c.b16 %v3280, %v3272
    %v3665 = vpack.c.b16 %v3281, %v3273
    %v3666 = vpack.c.b16 %v3282, %v3274
    %v3667 = vpack.c.b16 %v3283, %v3275
    %v3668 = vpack.c.b16 %v3284, %v3276
    %v3669 = vpack.c.b16 %v3285, %v3277
    %v3670 = vpack.c.b16 %v3286, %v3278
    %v3671 = vpack.c.b16 %v3295, %v3287
    %v3672 = vpack.c.b16 %v3296, %v3288
    %v3673 = vpack.c.b16 %v3297, %v3289
    %v3674 = vpack.c.b16 %v3298, %v3290
    %v3675 = vpack.c.b16 %v3299, %v3291
    %v3676 = vpack.c.b16 %v3300, %v3292
    %v3677 = vpack.c.b16 %v3301, %v3293
    %v3678 = vpack.c.b16 %v3302, %v3294
    %v3679 = vpack.c.b16 %v3311, %v3303
    %v3680 = vpack.c.b16 %v3312, %v3304
    %v3681 = vpack.c.b16 %v3313, %v3305
    %v3682 = vpack.c.b16 %v3314, %v3306
    %v3683 = vpack.c.b16 %v3315, %v3307
    %v3684 = vpack.c.b16 %v3316, %v3308
    %v3685 = vpack.c.b16 %v3317, %v3309
    %v3686 = vpack.c.b16 %v3318, %v3310
    %v3687 = vpack.c.b16 %v3327, %v3319
    %v3688 = vpack.c.b16 %v3328, %v3320
    %v3689 = vpack.c.b16 %v3329, %v3321
    %v3690 = vpack.c.b16 %v3330, %v3322
    %v3691 = vpack.c.b16 %v3331, %v3323
    %v3692 = vpack.c.b16 %v3332, %v3324
    %v3693 = vpack.c.b16 %v3333, %v3325
    %v3694 = vpack.c.b16 %v3334, %v3326
    %v3695 = vpack.c.b16 %v3343, %v3335
    %v3696 = vpack.c.b16 %v3344, %v3336
    %v3697 = vpack.c.b16 %v3345, %v3337
    %v3698 = vpack.c.b16 %v3346, %v3338
    %v3699 = vpack.c.b16 %v3347, %v3339
    %v3700 = vpack.c.b16 %v3348, %v3340
    %v3701 = vpack.c.b16 %v3349, %v3341
    %v3702 = vpack.c.b16 %v3350, %v3342
    %v3703 = vpack.c.b16 %v3359, %v3351
    %v3704 = vpack.c.b16 %v3360, %v3352
    %v3705 = vpack.c.b16 %v3361, %v3353
    %v3706 = vpack.c.b16 %v3362, %v3354
    %v3707 = vpack.c.b16 %v3363, %v3355
    %v3708 = vpack.c.b16 %v3364, %v3356
    %v3709 = vpack.c.b16 %v3365, %v3357
    %v3710 = vpack.c.b16 %v3366, %v3358
    %v3711 = vpack.c.b16 %v3375, %v3367
    %v3712 = vpack.c.b16 %v3376, %v3368
    %v3713 = vpack.c.b16 %v3377, %v3369
    %v3714 = vpack.c.b16 %v3378, %v3370
    %v3715 = vpack.c.b16 %v3379, %v3371
    %v3716 = vpack.c.b16 %v3380, %v3372
    %v3717 = vpack.c.b16 %v3381, %v3373
    %v3718 = vpack.c.b16 %v3382, %v3374
    %v3719 = vpack.c.b16 %v3391, %v3383
    %v3720 = vpack.c.b16 %v3392, %v3384
    %v3721 = vpack.c.b16 %v3393, %v3385
    %v3722 = vpack.c.b16 %v3394, %v3386
    %v3723 = vpack.c.b16 %v3395, %v3387
    %v3724 = vpack.c.b16 %v3396, %v3388
    %v3725 = vpack.c.b16 %v3397, %v3389
    %v3726 = vpack.c.b16 %v3398, %v3390
    %v3727 = vpack.c.b16 %v3407, %v3399
    %v3728 = vpack.c.b16 %v3408, %v3400
    %v3729 = vpack.c.b16 %v3409, %v3401
    %v3730 = vpack.c.b16 %v3410, %v3402
    %v3731 = vpack.c.b16 %v3411, %v3403
    %v3732 = vpack.c.b16 %v3412, %v3404
    %v3733 = vpack.c.b16 %v3413, %v3405
    %v3734 = vpack.c.b16 %v3414, %v3406
    %v3735 = vpack.c.b16 %v3423, %v3415
    %v3736 = vpack.c.b16 %v3424, %v3416
    %v3737 = vpack.c.b16 %v3425, %v3417
    %v3738 = vpack.c.b16 %v3426, %v3418
    %v3739 = vpack.c.b16 %v3427, %v3419
    %v3740 = vpack.c.b16 %v3428, %v3420
    %v3741 = vpack.c.b16 %v3429, %v3421
    %v3742 = vpack.c.b16 %v3430, %v3422
    %v3743 = vpack.c.b16 %v3439, %v3431
    %v3744 = vpack.c.b16 %v3440, %v3432
    %v3745 = vpack.c.b16 %v3441, %v3433
    %v3746 = vpack.c.b16 %v3442, %v3434
    %v3747 = vpack.c.b16 %v3443, %v3435
    %v3748 = vpack.c.b16 %v3444, %v3436
    %v3749 = vpack.c.b16 %v3445, %v3437
    %v3750 = vpack.c.b16 %v3446, %v3438
    %v3751 = vpack.c.b16 %v3455, %v3447
    %v3752 = vpack.c.b16 %v3456, %v3448
    %v3753 = vpack.c.b16 %v3457, %v3449
    %v3754 = vpack.c.b16 %v3458, %v3450
    %v3755 = vpack.c.b16 %v3459, %v3451
    %v3756 = vpack.c.b16 %v3460, %v3452
    %v3757 = vpack.c.b16 %v3461, %v3453
    %v3758 = vpack.c.b16 %v3462, %v3454
    %v3759 = vpack.c.b16 %v3471, %v3463
    %v3760 = vpack.c.b16 %v3472, %v3464
    %v3761 = vpack.c.b16 %v3473, %v3465
    %v3762 = vpack.c.b16 %v3474, %v3466
    %v3763 = vpack.c.b16 %v3475, %v3467
    %v3764 = vpack.c.b16 %v3476, %v3468
    %v3765 = vpack.c.b16 %v3477, %v3469
    %v3766 = vpack.c.b16 %v3478, %v3470
    %v3767 = vpack.c.b16 %v3487, %v3479
    %v3768 = vpack.c.b16 %v3488, %v3480
    %v3769 = vpack.c.b16 %v3489, %v3481
    %v3770 = vpack.c.b16 %v3490, %v3482
    %v3771 = vpack.c.b16 %v3491, %v3483
    %v3772 = vpack.c.b16 %v3492, %v3484
    %v3773 = vpack.c.b16 %v3493, %v3485
    %v3774 = vpack.c.b16 %v3494, %v3486
    %v3775 = vpack.c.b16 %v3503, %v3495
    %v3776 = vpack.c.b16 %v3504, %v3496
    %v3777 = vpack.c.b16 %v3505, %v3497
    %v3778 = vpack.c.b16 %v3506, %v3498
    %v3779 = vpack.c.b16 %v3507, %v3499
    %v3780 = vpack.c.b16 %v3508, %v3500
    %v3781 = vpack.c.b16 %v3509, %v3501
    %v3782 = vpack.c.b16 %v3510, %v3502
    %v3783 = vpack.c.b16 %v3519, %v3511
    %v3784 = vpack.c.b16 %v3520, %v3512
    %v3785 = vpack.c.b16 %v3521, %v3513
    %v3786 = vpack.c.b16 %v3522, %v3514
    %v3787 = vpack.c.b16 %v3523, %v3515
    %v3788 = vpack.c.b16 %v3524, %v3516
    %v3789 = vpack.c.b16 %v3525, %v3517
    %v3790 = vpack.c.b16 %v3526, %v3518
    %v3791 = vpack.c.b16 %v3535, %v3527
    %v3792 = vpack.c.b16 %v3536, %v3528
    %v3793 = vpack.c.b16 %v3537, %v3529
    %v3794 = vpack.c.b16 %v3538, %v3530
    %v3795 = vpack.c.b16 %v3539, %v3531
    %v3796 = vpack.c.b16 %v3540, %v3532
    %v3797 = vpack.c.b16 %v3541, %v3533
    %v3798 = vpack.c.b16 %v3542, %v3534
    %4055 = vmatpush.bf16.msra.mxu0 %v3599
    %4056 = vmatpush.bf16.msra.mxu0 %v3591
    %4057 = vmatpush.bf16.msra.mxu0 %v3583
    %4058 = vmatpush.bf16.msra.mxu0 %v3575
    %4059 = vmatpush.bf16.msra.mxu0 %v3567
    %4060 = vmatpush.bf16.msra.mxu0 %v3559
    %4061 = vmatpush.bf16.msra.mxu0 %v3551
    %4062 = vmatpush.bf16.msra.mxu0 %v3543
    %4063 = vmatmul.bf16.gmra.mxu0 %v2493
    %v4064 = vpop.f32.mrf.mxu0
    %v4065 = vadd.f32 %v2759, %v4064
    %v4066 = vpop.f32.mrf.mxu0
    %v4067 = vadd.f32 %v2759, %v4066
    %4068 = vmatmul.bf16.gmra.mxu0 %v2497
    %v4069 = vpop.f32.mrf.mxu0
    %v4070 = vadd.f32 %v2759, %v4069
    %v4071 = vpop.f32.mrf.mxu0
    %v4072 = vadd.f32 %v2759, %v4071
    %4073 = vdwg.mxu0
    %4074 = vmatpush.bf16.msra.mxu0 %v3663
    %4075 = vmatpush.bf16.msra.mxu0 %v3655
    %4076 = vmatpush.bf16.msra.mxu0 %v3647
    %4077 = vmatpush.bf16.msra.mxu0 %v3639
    %4078 = vmatpush.bf16.msra.mxu0 %v3631
    %4079 = vmatpush.bf16.msra.mxu0 %v3623
    %4080 = vmatpush.bf16.msra.mxu0 %v3615
    %4081 = vmatpush.bf16.msra.mxu0 %v3607
    %4082 = vmatmul.bf16.gmra.mxu0 %v2494
    %v4083 = vpop.f32.mrf.mxu0
    %v4084 = vadd.f32 %v4065, %v4083
    %v4085 = vpop.f32.mrf.mxu0
    %v4086 = vadd.f32 %v4067, %v4085
    %4087 = vmatmul.bf16.gmra.mxu0 %v2498
    %v4088 = vpop.f32.mrf.mxu0
    %v4089 = vadd.f32 %v4070, %v4088
    %v4090 = vpop.f32.mrf.mxu0
    %v4091 = vadd.f32 %v4072, %v4090
    %4092 = vdwg.mxu0
    %4093 = vmatpush.bf16.msra.mxu0 %v3727
    %4094 = vmatpush.bf16.msra.mxu0 %v3719
    %4095 = vmatpush.bf16.msra.mxu0 %v3711
    %4096 = vmatpush.bf16.msra.mxu0 %v3703
    %4097 = vmatpush.bf16.msra.mxu0 %v3695
    %4098 = vmatpush.bf16.msra.mxu0 %v3687
    %4099 = vmatpush.bf16.msra.mxu0 %v3679
    %4100 = vmatpush.bf16.msra.mxu0 %v3671
    %4101 = vmatmul.bf16.gmra.mxu0 %v2495
    %v4102 = vpop.f32.mrf.mxu0
    %v4103 = vadd.f32 %v4084, %v4102
    %v4104 = vpop.f32.mrf.mxu0
    %v4105 = vadd.f32 %v4086, %v4104
    %4106 = vmatmul.bf16.gmra.mxu0 %v2499
    %v4107 = vpop.f32.mrf.mxu0
    %v4108 = vadd.f32 %v4089, %v4107
    %v4109 = vpop.f32.mrf.mxu0
    %v4110 = vadd.f32 %v4091, %v4109
    %4111 = vdwg.mxu0
    %4112 = vmatpush.bf16.msra.mxu0 %v3791
    %4113 = vmatpush.bf16.msra.mxu0 %v3783
    %4114 = vmatpush.bf16.msra.mxu0 %v3775
    %4115 = vmatpush.bf16.msra.mxu0 %v3767
    %4116 = vmatpush.bf16.msra.mxu0 %v3759
    %4117 = vmatpush.bf16.msra.mxu0 %v3751
    %4118 = vmatpush.bf16.msra.mxu0 %v3743
    %4119 = vmatpush.bf16.msra.mxu0 %v3735
    %4120 = vmatmul.bf16.gmra.mxu0 %v2496
    %v4121 = vpop.f32.mrf.mxu0
    %v4122 = vadd.f32 %v4103, %v4121
    %v4123 = vpop.f32.mrf.mxu0
    %v4124 = vadd.f32 %v4105, %v4123
    %4125 = vmatmul.bf16.gmra.mxu0 %v2500
    %v4126 = vpop.f32.mrf.mxu0
    %v4127 = vadd.f32 %v4108, %v4126
    %v4128 = vpop.f32.mrf.mxu0
    %v4129 = vadd.f32 %v4110, %v4128
    %4130 = vdwg.mxu0
    %4131 = vmatpush.bf16.msra.mxu0 %v3600
    %4132 = vmatpush.bf16.msra.mxu0 %v3592
    %4133 = vmatpush.bf16.msra.mxu0 %v3584
    %4134 = vmatpush.bf16.msra.mxu0 %v3576
    %4135 = vmatpush.bf16.msra.mxu0 %v3568
    %4136 = vmatpush.bf16.msra.mxu0 %v3560
    %4137 = vmatpush.bf16.msra.mxu0 %v3552
    %4138 = vmatpush.bf16.msra.mxu0 %v3544
    %4139 = vmatmul.bf16.gmra.mxu0 %v2493
    %v4140 = vpop.f32.mrf.mxu0
    %v4141 = vadd.f32 %v2760, %v4140
    %v4142 = vpop.f32.mrf.mxu0
    %v4143 = vadd.f32 %v2760, %v4142
    %4144 = vmatmul.bf16.gmra.mxu0 %v2497
    %v4145 = vpop.f32.mrf.mxu0
    %v4146 = vadd.f32 %v2760, %v4145
    %v4147 = vpop.f32.mrf.mxu0
    %v4148 = vadd.f32 %v2760, %v4147
    %4149 = vdwg.mxu0
    %4150 = vmatpush.bf16.msra.mxu0 %v3664
    %4151 = vmatpush.bf16.msra.mxu0 %v3656
    %4152 = vmatpush.bf16.msra.mxu0 %v3648
    %4153 = vmatpush.bf16.msra.mxu0 %v3640
    %4154 = vmatpush.bf16.msra.mxu0 %v3632
    %4155 = vmatpush.bf16.msra.mxu0 %v3624
    %4156 = vmatpush.bf16.msra.mxu0 %v3616
    %4157 = vmatpush.bf16.msra.mxu0 %v3608
    %4158 = vmatmul.bf16.gmra.mxu0 %v2494
    %v4159 = vpop.f32.mrf.mxu0
    %v4160 = vadd.f32 %v4141, %v4159
    %v4161 = vpop.f32.mrf.mxu0
    %v4162 = vadd.f32 %v4143, %v4161
    %4163 = vmatmul.bf16.gmra.mxu0 %v2498
    %v4164 = vpop.f32.mrf.mxu0
    %v4165 = vadd.f32 %v4146, %v4164
    %v4166 = vpop.f32.mrf.mxu0
    %v4167 = vadd.f32 %v4148, %v4166
    %4168 = vdwg.mxu0
    %4169 = vmatpush.bf16.msra.mxu0 %v3728
    %4170 = vmatpush.bf16.msra.mxu0 %v3720
    %4171 = vmatpush.bf16.msra.mxu0 %v3712
    %4172 = vmatpush.bf16.msra.mxu0 %v3704
    %4173 = vmatpush.bf16.msra.mxu0 %v3696
    %4174 = vmatpush.bf16.msra.mxu0 %v3688
    %4175 = vmatpush.bf16.msra.mxu0 %v3680
    %4176 = vmatpush.bf16.msra.mxu0 %v3672
    %4177 = vmatmul.bf16.gmra.mxu0 %v2495
    %v4178 = vpop.f32.mrf.mxu0
    %v4179 = vadd.f32 %v4160, %v4178
    %v4180 = vpop.f32.mrf.mxu0
    %v4181 = vadd.f32 %v4162, %v4180
    %4182 = vmatmul.bf16.gmra.mxu0 %v2499
    %v4183 = vpop.f32.mrf.mxu0
    %v4184 = vadd.f32 %v4165, %v4183
    %v4185 = vpop.f32.mrf.mxu0
    %v4186 = vadd.f32 %v4167, %v4185
    %4187 = vdwg.mxu0
    %4188 = vmatpush.bf16.msra.mxu0 %v3792
    %4189 = vmatpush.bf16.msra.mxu0 %v3784
    %4190 = vmatpush.bf16.msra.mxu0 %v3776
    %4191 = vmatpush.bf16.msra.mxu0 %v3768
    %4192 = vmatpush.bf16.msra.mxu0 %v3760
    %4193 = vmatpush.bf16.msra.mxu0 %v3752
    %4194 = vmatpush.bf16.msra.mxu0 %v3744
    %4195 = vmatpush.bf16.msra.mxu0 %v3736
    %4196 = vmatmul.bf16.gmra.mxu0 %v2496
    %v4197 = vpop.f32.mrf.mxu0
    %v4198 = vadd.f32 %v4179, %v4197
    %v4199 = vpop.f32.mrf.mxu0
    %v4200 = vadd.f32 %v4181, %v4199
    %4201 = vmatmul.bf16.gmra.mxu0 %v2500
    %v4202 = vpop.f32.mrf.mxu0
    %v4203 = vadd.f32 %v4184, %v4202
    %v4204 = vpop.f32.mrf.mxu0
    %v4205 = vadd.f32 %v4186, %v4204
    %4206 = vdwg.mxu0
    %4207 = vmatpush.bf16.msra.mxu0 %v3601
    %4208 = vmatpush.bf16.msra.mxu0 %v3593
    %4209 = vmatpush.bf16.msra.mxu0 %v3585
    %4210 = vmatpush.bf16.msra.mxu0 %v3577
    %4211 = vmatpush.bf16.msra.mxu0 %v3569
    %4212 = vmatpush.bf16.msra.mxu0 %v3561
    %4213 = vmatpush.bf16.msra.mxu0 %v3553
    %4214 = vmatpush.bf16.msra.mxu0 %v3545
    %4215 = vmatmul.bf16.gmra.mxu0 %v2493
    %v4216 = vpop.f32.mrf.mxu0
    %v4217 = vadd.f32 %v2761, %v4216
    %v4218 = vpop.f32.mrf.mxu0
    %v4219 = vadd.f32 %v2761, %v4218
    %4220 = vmatmul.bf16.gmra.mxu0 %v2497
    %v4221 = vpop.f32.mrf.mxu0
    %v4222 = vadd.f32 %v2761, %v4221
    %v4223 = vpop.f32.mrf.mxu0
    %v4224 = vadd.f32 %v2761, %v4223
    %4225 = vdwg.mxu0
    %4226 = vmatpush.bf16.msra.mxu0 %v3665
    %4227 = vmatpush.bf16.msra.mxu0 %v3657
    %4228 = vmatpush.bf16.msra.mxu0 %v3649
    %4229 = vmatpush.bf16.msra.mxu0 %v3641
    %4230 = vmatpush.bf16.msra.mxu0 %v3633
    %4231 = vmatpush.bf16.msra.mxu0 %v3625
    %4232 = vmatpush.bf16.msra.mxu0 %v3617
    %4233 = vmatpush.bf16.msra.mxu0 %v3609
    %4234 = vmatmul.bf16.gmra.mxu0 %v2494
    %v4235 = vpop.f32.mrf.mxu0
    %v4236 = vadd.f32 %v4217, %v4235
    %v4237 = vpop.f32.mrf.mxu0
    %v4238 = vadd.f32 %v4219, %v4237
    %4239 = vmatmul.bf16.gmra.mxu0 %v2498
    %v4240 = vpop.f32.mrf.mxu0
    %v4241 = vadd.f32 %v4222, %v4240
    %v4242 = vpop.f32.mrf.mxu0
    %v4243 = vadd.f32 %v4224, %v4242
    %4244 = vdwg.mxu0
    %4245 = vmatpush.bf16.msra.mxu0 %v3729
    %4246 = vmatpush.bf16.msra.mxu0 %v3721
    %4247 = vmatpush.bf16.msra.mxu0 %v3713
    %4248 = vmatpush.bf16.msra.mxu0 %v3705
    %4249 = vmatpush.bf16.msra.mxu0 %v3697
    %4250 = vmatpush.bf16.msra.mxu0 %v3689
    %4251 = vmatpush.bf16.msra.mxu0 %v3681
    %4252 = vmatpush.bf16.msra.mxu0 %v3673
    %4253 = vmatmul.bf16.gmra.mxu0 %v2495
    %v4254 = vpop.f32.mrf.mxu0
    %v4255 = vadd.f32 %v4236, %v4254
    %v4256 = vpop.f32.mrf.mxu0
    %v4257 = vadd.f32 %v4238, %v4256
    %4258 = vmatmul.bf16.gmra.mxu0 %v2499
    %v4259 = vpop.f32.mrf.mxu0
    %v4260 = vadd.f32 %v4241, %v4259
    %v4261 = vpop.f32.mrf.mxu0
    %v4262 = vadd.f32 %v4243, %v4261
    %4263 = vdwg.mxu0
    %4264 = vmatpush.bf16.msra.mxu0 %v3793
    %4265 = vmatpush.bf16.msra.mxu0 %v3785
    %4266 = vmatpush.bf16.msra.mxu0 %v3777
    %4267 = vmatpush.bf16.msra.mxu0 %v3769
    %4268 = vmatpush.bf16.msra.mxu0 %v3761
    %4269 = vmatpush.bf16.msra.mxu0 %v3753
    %4270 = vmatpush.bf16.msra.mxu0 %v3745
    %4271 = vmatpush.bf16.msra.mxu0 %v3737
    %4272 = vmatmul.bf16.gmra.mxu0 %v2496
    %v4273 = vpop.f32.mrf.mxu0
    %v4274 = vadd.f32 %v4255, %v4273
    %v4275 = vpop.f32.mrf.mxu0
    %v4276 = vadd.f32 %v4257, %v4275
    %4277 = vmatmul.bf16.gmra.mxu0 %v2500
    %v4278 = vpop.f32.mrf.mxu0
    %v4279 = vadd.f32 %v4260, %v4278
    %v4280 = vpop.f32.mrf.mxu0
    %v4281 = vadd.f32 %v4262, %v4280
    %4282 = vdwg.mxu0
    %4283 = vmatpush.bf16.msra.mxu0 %v3602
    %4284 = vmatpush.bf16.msra.mxu0 %v3594
    %4285 = vmatpush.bf16.msra.mxu0 %v3586
    %4286 = vmatpush.bf16.msra.mxu0 %v3578
    %4287 = vmatpush.bf16.msra.mxu0 %v3570
    %4288 = vmatpush.bf16.msra.mxu0 %v3562
    %4289 = vmatpush.bf16.msra.mxu0 %v3554
    %4290 = vmatpush.bf16.msra.mxu0 %v3546
    %4291 = vmatmul.bf16.gmra.mxu0 %v2493
    %v4292 = vpop.f32.mrf.mxu0
    %v4293 = vadd.f32 %v2762, %v4292
    %v4294 = vpop.f32.mrf.mxu0
    %v4295 = vadd.f32 %v2762, %v4294
    %4296 = vmatmul.bf16.gmra.mxu0 %v2497
    %v4297 = vpop.f32.mrf.mxu0
    %v4298 = vadd.f32 %v2762, %v4297
    %v4299 = vpop.f32.mrf.mxu0
    %v4300 = vadd.f32 %v2762, %v4299
    %4301 = vdwg.mxu0
    %4302 = vmatpush.bf16.msra.mxu0 %v3666
    %4303 = vmatpush.bf16.msra.mxu0 %v3658
    %4304 = vmatpush.bf16.msra.mxu0 %v3650
    %4305 = vmatpush.bf16.msra.mxu0 %v3642
    %4306 = vmatpush.bf16.msra.mxu0 %v3634
    %4307 = vmatpush.bf16.msra.mxu0 %v3626
    %4308 = vmatpush.bf16.msra.mxu0 %v3618
    %4309 = vmatpush.bf16.msra.mxu0 %v3610
    %4310 = vmatmul.bf16.gmra.mxu0 %v2494
    %v4311 = vpop.f32.mrf.mxu0
    %v4312 = vadd.f32 %v4293, %v4311
    %v4313 = vpop.f32.mrf.mxu0
    %v4314 = vadd.f32 %v4295, %v4313
    %4315 = vmatmul.bf16.gmra.mxu0 %v2498
    %v4316 = vpop.f32.mrf.mxu0
    %v4317 = vadd.f32 %v4298, %v4316
    %v4318 = vpop.f32.mrf.mxu0
    %v4319 = vadd.f32 %v4300, %v4318
    %4320 = vdwg.mxu0
    %4321 = vmatpush.bf16.msra.mxu0 %v3730
    %4322 = vmatpush.bf16.msra.mxu0 %v3722
    %4323 = vmatpush.bf16.msra.mxu0 %v3714
    %4324 = vmatpush.bf16.msra.mxu0 %v3706
    %4325 = vmatpush.bf16.msra.mxu0 %v3698
    %4326 = vmatpush.bf16.msra.mxu0 %v3690
    %4327 = vmatpush.bf16.msra.mxu0 %v3682
    %4328 = vmatpush.bf16.msra.mxu0 %v3674
    %4329 = vmatmul.bf16.gmra.mxu0 %v2495
    %v4330 = vpop.f32.mrf.mxu0
    %v4331 = vadd.f32 %v4312, %v4330
    %v4332 = vpop.f32.mrf.mxu0
    %v4333 = vadd.f32 %v4314, %v4332
    %4334 = vmatmul.bf16.gmra.mxu0 %v2499
    %v4335 = vpop.f32.mrf.mxu0
    %v4336 = vadd.f32 %v4317, %v4335
    %v4337 = vpop.f32.mrf.mxu0
    %v4338 = vadd.f32 %v4319, %v4337
    %4339 = vdwg.mxu0
    %4340 = vmatpush.bf16.msra.mxu0 %v3794
    %4341 = vmatpush.bf16.msra.mxu0 %v3786
    %4342 = vmatpush.bf16.msra.mxu0 %v3778
    %4343 = vmatpush.bf16.msra.mxu0 %v3770
    %4344 = vmatpush.bf16.msra.mxu0 %v3762
    %4345 = vmatpush.bf16.msra.mxu0 %v3754
    %4346 = vmatpush.bf16.msra.mxu0 %v3746
    %4347 = vmatpush.bf16.msra.mxu0 %v3738
    %4348 = vmatmul.bf16.gmra.mxu0 %v2496
    %v4349 = vpop.f32.mrf.mxu0
    %v4350 = vadd.f32 %v4331, %v4349
    %v4351 = vpop.f32.mrf.mxu0
    %v4352 = vadd.f32 %v4333, %v4351
    %4353 = vmatmul.bf16.gmra.mxu0 %v2500
    %v4354 = vpop.f32.mrf.mxu0
    %v4355 = vadd.f32 %v4336, %v4354
    %v4356 = vpop.f32.mrf.mxu0
    %v4357 = vadd.f32 %v4338, %v4356
    %4358 = vdwg.mxu0
    %4359 = vmatpush.bf16.msra.mxu0 %v3603
    %4360 = vmatpush.bf16.msra.mxu0 %v3595
    %4361 = vmatpush.bf16.msra.mxu0 %v3587
    %4362 = vmatpush.bf16.msra.mxu0 %v3579
    %4363 = vmatpush.bf16.msra.mxu0 %v3571
    %4364 = vmatpush.bf16.msra.mxu0 %v3563
    %4365 = vmatpush.bf16.msra.mxu0 %v3555
    %4366 = vmatpush.bf16.msra.mxu0 %v3547
    %4367 = vmatmul.bf16.gmra.mxu0 %v2493
    %v4368 = vpop.f32.mrf.mxu0
    %v4369 = vadd.f32 %v2763, %v4368
    %v4370 = vpop.f32.mrf.mxu0
    %v4371 = vadd.f32 %v2763, %v4370
    %4372 = vmatmul.bf16.gmra.mxu0 %v2497
    %v4373 = vpop.f32.mrf.mxu0
    %v4374 = vadd.f32 %v2763, %v4373
    %v4375 = vpop.f32.mrf.mxu0
    %v4376 = vadd.f32 %v2763, %v4375
    %4377 = vdwg.mxu0
    %4378 = vmatpush.bf16.msra.mxu0 %v3667
    %4379 = vmatpush.bf16.msra.mxu0 %v3659
    %4380 = vmatpush.bf16.msra.mxu0 %v3651
    %4381 = vmatpush.bf16.msra.mxu0 %v3643
    %4382 = vmatpush.bf16.msra.mxu0 %v3635
    %4383 = vmatpush.bf16.msra.mxu0 %v3627
    %4384 = vmatpush.bf16.msra.mxu0 %v3619
    %4385 = vmatpush.bf16.msra.mxu0 %v3611
    %4386 = vmatmul.bf16.gmra.mxu0 %v2494
    %v4387 = vpop.f32.mrf.mxu0
    %v4388 = vadd.f32 %v4369, %v4387
    %v4389 = vpop.f32.mrf.mxu0
    %v4390 = vadd.f32 %v4371, %v4389
    %4391 = vmatmul.bf16.gmra.mxu0 %v2498
    %v4392 = vpop.f32.mrf.mxu0
    %v4393 = vadd.f32 %v4374, %v4392
    %v4394 = vpop.f32.mrf.mxu0
    %v4395 = vadd.f32 %v4376, %v4394
    %4396 = vdwg.mxu0
    %4397 = vmatpush.bf16.msra.mxu0 %v3731
    %4398 = vmatpush.bf16.msra.mxu0 %v3723
    %4399 = vmatpush.bf16.msra.mxu0 %v3715
    %4400 = vmatpush.bf16.msra.mxu0 %v3707
    %4401 = vmatpush.bf16.msra.mxu0 %v3699
    %4402 = vmatpush.bf16.msra.mxu0 %v3691
    %4403 = vmatpush.bf16.msra.mxu0 %v3683
    %4404 = vmatpush.bf16.msra.mxu0 %v3675
    %4405 = vmatmul.bf16.gmra.mxu0 %v2495
    %v4406 = vpop.f32.mrf.mxu0
    %v4407 = vadd.f32 %v4388, %v4406
    %v4408 = vpop.f32.mrf.mxu0
    %v4409 = vadd.f32 %v4390, %v4408
    %4410 = vmatmul.bf16.gmra.mxu0 %v2499
    %v4411 = vpop.f32.mrf.mxu0
    %v4412 = vadd.f32 %v4393, %v4411
    %v4413 = vpop.f32.mrf.mxu0
    %v4414 = vadd.f32 %v4395, %v4413
    %4415 = vdwg.mxu0
    %4416 = vmatpush.bf16.msra.mxu0 %v3795
    %4417 = vmatpush.bf16.msra.mxu0 %v3787
    %4418 = vmatpush.bf16.msra.mxu0 %v3779
    %4419 = vmatpush.bf16.msra.mxu0 %v3771
    %4420 = vmatpush.bf16.msra.mxu0 %v3763
    %4421 = vmatpush.bf16.msra.mxu0 %v3755
    %4422 = vmatpush.bf16.msra.mxu0 %v3747
    %4423 = vmatpush.bf16.msra.mxu0 %v3739
    %4424 = vmatmul.bf16.gmra.mxu0 %v2496
    %v4425 = vpop.f32.mrf.mxu0
    %v4426 = vadd.f32 %v4407, %v4425
    %v4427 = vpop.f32.mrf.mxu0
    %v4428 = vadd.f32 %v4409, %v4427
    %4429 = vmatmul.bf16.gmra.mxu0 %v2500
    %v4430 = vpop.f32.mrf.mxu0
    %v4431 = vadd.f32 %v4412, %v4430
    %v4432 = vpop.f32.mrf.mxu0
    %v4433 = vadd.f32 %v4414, %v4432
    %4434 = vdwg.mxu0
    %4435 = vmatpush.bf16.msra.mxu0 %v3604
    %4436 = vmatpush.bf16.msra.mxu0 %v3596
    %4437 = vmatpush.bf16.msra.mxu0 %v3588
    %4438 = vmatpush.bf16.msra.mxu0 %v3580
    %4439 = vmatpush.bf16.msra.mxu0 %v3572
    %4440 = vmatpush.bf16.msra.mxu0 %v3564
    %4441 = vmatpush.bf16.msra.mxu0 %v3556
    %4442 = vmatpush.bf16.msra.mxu0 %v3548
    %4443 = vmatmul.bf16.gmra.mxu0 %v2493
    %v4444 = vpop.f32.mrf.mxu0
    %v4445 = vadd.f32 %v2764, %v4444
    %v4446 = vpop.f32.mrf.mxu0
    %v4447 = vadd.f32 %v2764, %v4446
    %4448 = vmatmul.bf16.gmra.mxu0 %v2497
    %v4449 = vpop.f32.mrf.mxu0
    %v4450 = vadd.f32 %v2764, %v4449
    %v4451 = vpop.f32.mrf.mxu0
    %v4452 = vadd.f32 %v2764, %v4451
    %4453 = vdwg.mxu0
    %4454 = vmatpush.bf16.msra.mxu0 %v3668
    %4455 = vmatpush.bf16.msra.mxu0 %v3660
    %4456 = vmatpush.bf16.msra.mxu0 %v3652
    %4457 = vmatpush.bf16.msra.mxu0 %v3644
    %4458 = vmatpush.bf16.msra.mxu0 %v3636
    %4459 = vmatpush.bf16.msra.mxu0 %v3628
    %4460 = vmatpush.bf16.msra.mxu0 %v3620
    %4461 = vmatpush.bf16.msra.mxu0 %v3612
    %4462 = vmatmul.bf16.gmra.mxu0 %v2494
    %v4463 = vpop.f32.mrf.mxu0
    %v4464 = vadd.f32 %v4445, %v4463
    %v4465 = vpop.f32.mrf.mxu0
    %v4466 = vadd.f32 %v4447, %v4465
    %4467 = vmatmul.bf16.gmra.mxu0 %v2498
    %v4468 = vpop.f32.mrf.mxu0
    %v4469 = vadd.f32 %v4450, %v4468
    %v4470 = vpop.f32.mrf.mxu0
    %v4471 = vadd.f32 %v4452, %v4470
    %4472 = vdwg.mxu0
    %4473 = vmatpush.bf16.msra.mxu0 %v3732
    %4474 = vmatpush.bf16.msra.mxu0 %v3724
    %4475 = vmatpush.bf16.msra.mxu0 %v3716
    %4476 = vmatpush.bf16.msra.mxu0 %v3708
    %4477 = vmatpush.bf16.msra.mxu0 %v3700
    %4478 = vmatpush.bf16.msra.mxu0 %v3692
    %4479 = vmatpush.bf16.msra.mxu0 %v3684
    %4480 = vmatpush.bf16.msra.mxu0 %v3676
    %4481 = vmatmul.bf16.gmra.mxu0 %v2495
    %v4482 = vpop.f32.mrf.mxu0
    %v4483 = vadd.f32 %v4464, %v4482
    %v4484 = vpop.f32.mrf.mxu0
    %v4485 = vadd.f32 %v4466, %v4484
    %4486 = vmatmul.bf16.gmra.mxu0 %v2499
    %v4487 = vpop.f32.mrf.mxu0
    %v4488 = vadd.f32 %v4469, %v4487
    %v4489 = vpop.f32.mrf.mxu0
    %v4490 = vadd.f32 %v4471, %v4489
    %4491 = vdwg.mxu0
    %4492 = vmatpush.bf16.msra.mxu0 %v3796
    %4493 = vmatpush.bf16.msra.mxu0 %v3788
    %4494 = vmatpush.bf16.msra.mxu0 %v3780
    %4495 = vmatpush.bf16.msra.mxu0 %v3772
    %4496 = vmatpush.bf16.msra.mxu0 %v3764
    %4497 = vmatpush.bf16.msra.mxu0 %v3756
    %4498 = vmatpush.bf16.msra.mxu0 %v3748
    %4499 = vmatpush.bf16.msra.mxu0 %v3740
    %4500 = vmatmul.bf16.gmra.mxu0 %v2496
    %v4501 = vpop.f32.mrf.mxu0
    %v4502 = vadd.f32 %v4483, %v4501
    %v4503 = vpop.f32.mrf.mxu0
    %v4504 = vadd.f32 %v4485, %v4503
    %4505 = vmatmul.bf16.gmra.mxu0 %v2500
    %v4506 = vpop.f32.mrf.mxu0
    %v4507 = vadd.f32 %v4488, %v4506
    %v4508 = vpop.f32.mrf.mxu0
    %v4509 = vadd.f32 %v4490, %v4508
    %4510 = vdwg.mxu0
    %4511 = vmatpush.bf16.msra.mxu0 %v3605
    %4512 = vmatpush.bf16.msra.mxu0 %v3597
    %4513 = vmatpush.bf16.msra.mxu0 %v3589
    %4514 = vmatpush.bf16.msra.mxu0 %v3581
    %4515 = vmatpush.bf16.msra.mxu0 %v3573
    %4516 = vmatpush.bf16.msra.mxu0 %v3565
    %4517 = vmatpush.bf16.msra.mxu0 %v3557
    %4518 = vmatpush.bf16.msra.mxu0 %v3549
    %4519 = vmatmul.bf16.gmra.mxu0 %v2493
    %v4520 = vpop.f32.mrf.mxu0
    %v4521 = vadd.f32 %v2765, %v4520
    %v4522 = vpop.f32.mrf.mxu0
    %v4523 = vadd.f32 %v2765, %v4522
    %4524 = vmatmul.bf16.gmra.mxu0 %v2497
    %v4525 = vpop.f32.mrf.mxu0
    %v4526 = vadd.f32 %v2765, %v4525
    %v4527 = vpop.f32.mrf.mxu0
    %v4528 = vadd.f32 %v2765, %v4527
    %4529 = vdwg.mxu0
    %4530 = vmatpush.bf16.msra.mxu0 %v3669
    %4531 = vmatpush.bf16.msra.mxu0 %v3661
    %4532 = vmatpush.bf16.msra.mxu0 %v3653
    %4533 = vmatpush.bf16.msra.mxu0 %v3645
    %4534 = vmatpush.bf16.msra.mxu0 %v3637
    %4535 = vmatpush.bf16.msra.mxu0 %v3629
    %4536 = vmatpush.bf16.msra.mxu0 %v3621
    %4537 = vmatpush.bf16.msra.mxu0 %v3613
    %4538 = vmatmul.bf16.gmra.mxu0 %v2494
    %v4539 = vpop.f32.mrf.mxu0
    %v4540 = vadd.f32 %v4521, %v4539
    %v4541 = vpop.f32.mrf.mxu0
    %v4542 = vadd.f32 %v4523, %v4541
    %4543 = vmatmul.bf16.gmra.mxu0 %v2498
    %v4544 = vpop.f32.mrf.mxu0
    %v4545 = vadd.f32 %v4526, %v4544
    %v4546 = vpop.f32.mrf.mxu0
    %v4547 = vadd.f32 %v4528, %v4546
    %4548 = vdwg.mxu0
    %4549 = vmatpush.bf16.msra.mxu0 %v3733
    %4550 = vmatpush.bf16.msra.mxu0 %v3725
    %4551 = vmatpush.bf16.msra.mxu0 %v3717
    %4552 = vmatpush.bf16.msra.mxu0 %v3709
    %4553 = vmatpush.bf16.msra.mxu0 %v3701
    %4554 = vmatpush.bf16.msra.mxu0 %v3693
    %4555 = vmatpush.bf16.msra.mxu0 %v3685
    %4556 = vmatpush.bf16.msra.mxu0 %v3677
    %4557 = vmatmul.bf16.gmra.mxu0 %v2495
    %v4558 = vpop.f32.mrf.mxu0
    %v4559 = vadd.f32 %v4540, %v4558
    %v4560 = vpop.f32.mrf.mxu0
    %v4561 = vadd.f32 %v4542, %v4560
    %4562 = vmatmul.bf16.gmra.mxu0 %v2499
    %v4563 = vpop.f32.mrf.mxu0
    %v4564 = vadd.f32 %v4545, %v4563
    %v4565 = vpop.f32.mrf.mxu0
    %v4566 = vadd.f32 %v4547, %v4565
    %4567 = vdwg.mxu0
    %4568 = vmatpush.bf16.msra.mxu0 %v3797
    %4569 = vmatpush.bf16.msra.mxu0 %v3789
    %4570 = vmatpush.bf16.msra.mxu0 %v3781
    %4571 = vmatpush.bf16.msra.mxu0 %v3773
    %4572 = vmatpush.bf16.msra.mxu0 %v3765
    %4573 = vmatpush.bf16.msra.mxu0 %v3757
    %4574 = vmatpush.bf16.msra.mxu0 %v3749
    %4575 = vmatpush.bf16.msra.mxu0 %v3741
    %4576 = vmatmul.bf16.gmra.mxu0 %v2496
    %v4577 = vpop.f32.mrf.mxu0
    %v4578 = vadd.f32 %v4559, %v4577
    %v4579 = vpop.f32.mrf.mxu0
    %v4580 = vadd.f32 %v4561, %v4579
    %4581 = vmatmul.bf16.gmra.mxu0 %v2500
    %v4582 = vpop.f32.mrf.mxu0
    %v4583 = vadd.f32 %v4564, %v4582
    %v4584 = vpop.f32.mrf.mxu0
    %v4585 = vadd.f32 %v4566, %v4584
    %4586 = vdwg.mxu0
    %4587 = vmatpush.bf16.msra.mxu0 %v3606
    %4588 = vmatpush.bf16.msra.mxu0 %v3598
    %4589 = vmatpush.bf16.msra.mxu0 %v3590
    %4590 = vmatpush.bf16.msra.mxu0 %v3582
    %4591 = vmatpush.bf16.msra.mxu0 %v3574
    %4592 = vmatpush.bf16.msra.mxu0 %v3566
    %4593 = vmatpush.bf16.msra.mxu0 %v3558
    %4594 = vmatpush.bf16.msra.mxu0 %v3550
    %4595 = vmatmul.bf16.gmra.mxu0 %v2493
    %v4596 = vpop.f32.mrf.mxu0
    %v4597 = vadd.f32 %v2766, %v4596
    %v4598 = vpop.f32.mrf.mxu0
    %v4599 = vadd.f32 %v2766, %v4598
    %4600 = vmatmul.bf16.gmra.mxu0 %v2497
    %v4601 = vpop.f32.mrf.mxu0
    %v4602 = vadd.f32 %v2766, %v4601
    %v4603 = vpop.f32.mrf.mxu0
    %v4604 = vadd.f32 %v2766, %v4603
    %4605 = vdwg.mxu0
    %4606 = vmatpush.bf16.msra.mxu0 %v3670
    %4607 = vmatpush.bf16.msra.mxu0 %v3662
    %4608 = vmatpush.bf16.msra.mxu0 %v3654
    %4609 = vmatpush.bf16.msra.mxu0 %v3646
    %4610 = vmatpush.bf16.msra.mxu0 %v3638
    %4611 = vmatpush.bf16.msra.mxu0 %v3630
    %4612 = vmatpush.bf16.msra.mxu0 %v3622
    %4613 = vmatpush.bf16.msra.mxu0 %v3614
    %4614 = vmatmul.bf16.gmra.mxu0 %v2494
    %v4615 = vpop.f32.mrf.mxu0
    %v4616 = vadd.f32 %v4597, %v4615
    %v4617 = vpop.f32.mrf.mxu0
    %v4618 = vadd.f32 %v4599, %v4617
    %4619 = vmatmul.bf16.gmra.mxu0 %v2498
    %v4620 = vpop.f32.mrf.mxu0
    %v4621 = vadd.f32 %v4602, %v4620
    %v4622 = vpop.f32.mrf.mxu0
    %v4623 = vadd.f32 %v4604, %v4622
    %4624 = vdwg.mxu0
    %4625 = vmatpush.bf16.msra.mxu0 %v3734
    %4626 = vmatpush.bf16.msra.mxu0 %v3726
    %4627 = vmatpush.bf16.msra.mxu0 %v3718
    %4628 = vmatpush.bf16.msra.mxu0 %v3710
    %4629 = vmatpush.bf16.msra.mxu0 %v3702
    %4630 = vmatpush.bf16.msra.mxu0 %v3694
    %4631 = vmatpush.bf16.msra.mxu0 %v3686
    %4632 = vmatpush.bf16.msra.mxu0 %v3678
    %4633 = vmatmul.bf16.gmra.mxu0 %v2495
    %v4634 = vpop.f32.mrf.mxu0
    %v4635 = vadd.f32 %v4616, %v4634
    %v4636 = vpop.f32.mrf.mxu0
    %v4637 = vadd.f32 %v4618, %v4636
    %4638 = vmatmul.bf16.gmra.mxu0 %v2499
    %v4639 = vpop.f32.mrf.mxu0
    %v4640 = vadd.f32 %v4621, %v4639
    %v4641 = vpop.f32.mrf.mxu0
    %v4642 = vadd.f32 %v4623, %v4641
    %4643 = vdwg.mxu0
    %4644 = vmatpush.bf16.msra.mxu0 %v3798
    %4645 = vmatpush.bf16.msra.mxu0 %v3790
    %4646 = vmatpush.bf16.msra.mxu0 %v3782
    %4647 = vmatpush.bf16.msra.mxu0 %v3774
    %4648 = vmatpush.bf16.msra.mxu0 %v3766
    %4649 = vmatpush.bf16.msra.mxu0 %v3758
    %4650 = vmatpush.bf16.msra.mxu0 %v3750
    %4651 = vmatpush.bf16.msra.mxu0 %v3742
    %4652 = vmatmul.bf16.gmra.mxu0 %v2496
    %v4653 = vpop.f32.mrf.mxu0
    %v4654 = vadd.f32 %v4635, %v4653
    %v4655 = vpop.f32.mrf.mxu0
    %v4656 = vadd.f32 %v4637, %v4655
    %4657 = vmatmul.bf16.gmra.mxu0 %v2500
    %v4658 = vpop.f32.mrf.mxu0
    %v4659 = vadd.f32 %v4640, %v4658
    %v4660 = vpop.f32.mrf.mxu0
    %v4661 = vadd.f32 %v4642, %v4660
    %4662 = vdwg.mxu0
    %v4663 = vld [vmem:[#allocation2] sm:$0xff]
    %v4664 = vld [vmem:[#allocation2 + $0x8] sm:$0xff]
    %v4665 = vld [vmem:[#allocation2 + $0x10] sm:$0xff]
    %v4666 = vld [vmem:[#allocation2 + $0x18] sm:$0xff]
    %v4667 = vld [vmem:[#allocation2 + $0x20] sm:$0xff]
    %v4668 = vld [vmem:[#allocation2 + $0x28] sm:$0xff]
    %v4669 = vld [vmem:[#allocation2 + $0x30] sm:$0xff]
    %v4670 = vld [vmem:[#allocation2 + $0x38] sm:$0xff]
    %v4671 = vld [vmem:[#allocation2 + $0x40] sm:$0xff]
    %v4672 = vld [vmem:[#allocation2 + $0x48] sm:$0xff]
    %v4673 = vld [vmem:[#allocation2 + $0x50] sm:$0xff]
    %v4674 = vld [vmem:[#allocation2 + $0x58] sm:$0xff]
    %v4675 = vld [vmem:[#allocation2 + $0x60] sm:$0xff]
    %v4676 = vld [vmem:[#allocation2 + $0x68] sm:$0xff]
    %v4677 = vld [vmem:[#allocation2 + $0x70] sm:$0xff]
    %v4678 = vld [vmem:[#allocation2 + $0x78] sm:$0xff]
    %v4679 = vmul.f32 %v4122, %v4663
    %v4680 = vmul.f32 %v4198, %v4664
    %v4681 = vmul.f32 %v4274, %v4665
    %v4682 = vmul.f32 %v4350, %v4666
    %v4683 = vmul.f32 %v4124, %v4667
    %v4684 = vmul.f32 %v4200, %v4668
    %v4685 = vmul.f32 %v4276, %v4669
    %v4686 = vmul.f32 %v4352, %v4670
    %v4687 = vmul.f32 %v4127, %v4671
    %v4688 = vmul.f32 %v4203, %v4672
    %v4689 = vmul.f32 %v4279, %v4673
    %v4690 = vmul.f32 %v4355, %v4674
    %v4691 = vmul.f32 %v4129, %v4675
    %v4692 = vmul.f32 %v4205, %v4676
    %v4693 = vmul.f32 %v4281, %v4677
    %v4694 = vmul.f32 %v4357, %v4678
    %v4695 = vadd.f32 %v4679, %v4426
    %v4696 = vadd.f32 %v4680, %v4502
    %v4697 = vadd.f32 %v4681, %v4578
    %v4698 = vadd.f32 %v4682, %v4654
    %v4699 = vadd.f32 %v4683, %v4428
    %v4700 = vadd.f32 %v4684, %v4504
    %v4701 = vadd.f32 %v4685, %v4580
    %v4702 = vadd.f32 %v4686, %v4656
    %v4703 = vadd.f32 %v4687, %v4431
    %v4704 = vadd.f32 %v4688, %v4507
    %v4705 = vadd.f32 %v4689, %v4583
    %v4706 = vadd.f32 %v4690, %v4659
    %v4707 = vadd.f32 %v4691, %v4433
    %v4708 = vadd.f32 %v4692, %v4509
    %v4709 = vadd.f32 %v4693, %v4585
    %v4710 = vadd.f32 %v4694, %v4661
    %v4711 = vpack.c.bf16 %v4699, %v4695
    %v4712 = vpack.c.bf16 %v4700, %v4696
    %v4713 = vpack.c.bf16 %v4701, %v4697
    %v4714 = vpack.c.bf16 %v4702, %v4698
    %v4715 = vpack.c.bf16 %v4707, %v4703
    %v4716 = vpack.c.bf16 %v4708, %v4704
    %v4717 = vpack.c.bf16 %v4709, %v4705
    %v4718 = vpack.c.bf16 %v4710, %v4706
    %v4719 = vld [vmem:[#allocation14] sm:$0xff]
    %v4720 = vld [vmem:[#allocation14 + $0x8] sm:$0xff]
    %v4721 = vld [vmem:[#allocation14 + $0x10] sm:$0xff]
    %v4722 = vld [vmem:[#allocation14 + $0x18] sm:$0xff]
    %v4723 = vld [vmem:[#allocation14 + $0x20] sm:$0xff]
    %v4724 = vld [vmem:[#allocation14 + $0x28] sm:$0xff]
    %v4725 = vld [vmem:[#allocation14 + $0x30] sm:$0xff]
    %v4726 = vld [vmem:[#allocation14 + $0x38] sm:$0xff]
    %v4727 = vld [vmem:[#allocation14 + $0x40] sm:$0xff]
    %v4728 = vld [vmem:[#allocation14 + $0x48] sm:$0xff]
    %v4729 = vld [vmem:[#allocation14 + $0x50] sm:$0xff]
    %v4730 = vld [vmem:[#allocation14 + $0x58] sm:$0xff]
    %v4731 = vld [vmem:[#allocation14 + $0x60] sm:$0xff]
    %v4732 = vld [vmem:[#allocation14 + $0x68] sm:$0xff]
    %v4733 = vld [vmem:[#allocation14 + $0x70] sm:$0xff]
    %v4734 = vld [vmem:[#allocation14 + $0x78] sm:$0xff]
    %v4735 = vld [vmem:[#allocation14 + $0x80] sm:$0xff]
    %v4736 = vld [vmem:[#allocation14 + $0x88] sm:$0xff]
    %v4737 = vld [vmem:[#allocation14 + $0x90] sm:$0xff]
    %v4738 = vld [vmem:[#allocation14 + $0x98] sm:$0xff]
    %v4739 = vld [vmem:[#allocation14 + $0xa0] sm:$0xff]
    %v4740 = vld [vmem:[#allocation14 + $0xa8] sm:$0xff]
    %v4741 = vld [vmem:[#allocation14 + $0xb0] sm:$0xff]
    %v4742 = vld [vmem:[#allocation14 + $0xb8] sm:$0xff]
    %v4743 = vld [vmem:[#allocation14 + $0xc0] sm:$0xff]
    %v4744 = vld [vmem:[#allocation14 + $0xc8] sm:$0xff]
    %v4745 = vld [vmem:[#allocation14 + $0xd0] sm:$0xff]
    %v4746 = vld [vmem:[#allocation14 + $0xd8] sm:$0xff]
    %v4747 = vld [vmem:[#allocation14 + $0xe0] sm:$0xff]
    %v4748 = vld [vmem:[#allocation14 + $0xe8] sm:$0xff]
    %v4749 = vld [vmem:[#allocation14 + $0xf0] sm:$0xff]
    %v4750 = vld [vmem:[#allocation14 + $0xf8] sm:$0xff]
    %v4751 = vld [vmem:[#allocation14 + $0x100] sm:$0xff]
    %v4752 = vld [vmem:[#allocation14 + $0x108] sm:$0xff]
    %v4753 = vld [vmem:[#allocation14 + $0x110] sm:$0xff]
    %v4754 = vld [vmem:[#allocation14 + $0x118] sm:$0xff]
    %v4755 = vld [vmem:[#allocation14 + $0x120] sm:$0xff]
    %v4756 = vld [vmem:[#allocation14 + $0x128] sm:$0xff]
    %v4757 = vld [vmem:[#allocation14 + $0x130] sm:$0xff]
    %v4758 = vld [vmem:[#allocation14 + $0x138] sm:$0xff]
    %v4759 = vld [vmem:[#allocation14 + $0x140] sm:$0xff]
    %v4760 = vld [vmem:[#allocation14 + $0x148] sm:$0xff]
    %v4761 = vld [vmem:[#allocation14 + $0x150] sm:$0xff]
    %v4762 = vld [vmem:[#allocation14 + $0x158] sm:$0xff]
    %v4763 = vld [vmem:[#allocation14 + $0x160] sm:$0xff]
    %v4764 = vld [vmem:[#allocation14 + $0x168] sm:$0xff]
    %v4765 = vld [vmem:[#allocation14 + $0x170] sm:$0xff]
    %v4766 = vld [vmem:[#allocation14 + $0x178] sm:$0xff]
    %v4767 = vld [vmem:[#allocation14 + $0x180] sm:$0xff]
    %v4768 = vld [vmem:[#allocation14 + $0x188] sm:$0xff]
    %v4769 = vld [vmem:[#allocation14 + $0x190] sm:$0xff]
    %v4770 = vld [vmem:[#allocation14 + $0x198] sm:$0xff]
    %v4771 = vld [vmem:[#allocation14 + $0x1a0] sm:$0xff]
    %v4772 = vld [vmem:[#allocation14 + $0x1a8] sm:$0xff]
    %v4773 = vld [vmem:[#allocation14 + $0x1b0] sm:$0xff]
    %v4774 = vld [vmem:[#allocation14 + $0x1b8] sm:$0xff]
    %v4775 = vld [vmem:[#allocation14 + $0x1c0] sm:$0xff]
    %v4776 = vld [vmem:[#allocation14 + $0x1c8] sm:$0xff]
    %v4777 = vld [vmem:[#allocation14 + $0x1d0] sm:$0xff]
    %v4778 = vld [vmem:[#allocation14 + $0x1d8] sm:$0xff]
    %v4779 = vld [vmem:[#allocation14 + $0x1e0] sm:$0xff]
    %v4780 = vld [vmem:[#allocation14 + $0x1e8] sm:$0xff]
    %v4781 = vld [vmem:[#allocation14 + $0x1f0] sm:$0xff]
    %v4782 = vld [vmem:[#allocation14 + $0x1f8] sm:$0xff]
    %v4783 = vld [vmem:[#allocation14 + $0x200] sm:$0xff]
    %v4784 = vld [vmem:[#allocation14 + $0x208] sm:$0xff]
    %v4785 = vld [vmem:[#allocation14 + $0x210] sm:$0xff]
    %v4786 = vld [vmem:[#allocation14 + $0x218] sm:$0xff]
    %v4787 = vld [vmem:[#allocation14 + $0x220] sm:$0xff]
    %v4788 = vld [vmem:[#allocation14 + $0x228] sm:$0xff]
    %v4789 = vld [vmem:[#allocation14 + $0x230] sm:$0xff]
    %v4790 = vld [vmem:[#allocation14 + $0x238] sm:$0xff]
    %v4791 = vld [vmem:[#allocation14 + $0x240] sm:$0xff]
    %v4792 = vld [vmem:[#allocation14 + $0x248] sm:$0xff]
    %v4793 = vld [vmem:[#allocation14 + $0x250] sm:$0xff]
    %v4794 = vld [vmem:[#allocation14 + $0x258] sm:$0xff]
    %v4795 = vld [vmem:[#allocation14 + $0x260] sm:$0xff]
    %v4796 = vld [vmem:[#allocation14 + $0x268] sm:$0xff]
    %v4797 = vld [vmem:[#allocation14 + $0x270] sm:$0xff]
    %v4798 = vld [vmem:[#allocation14 + $0x278] sm:$0xff]
    %v4799 = vld [vmem:[#allocation14 + $0x280] sm:$0xff]
    %v4800 = vld [vmem:[#allocation14 + $0x288] sm:$0xff]
    %v4801 = vld [vmem:[#allocation14 + $0x290] sm:$0xff]
    %v4802 = vld [vmem:[#allocation14 + $0x298] sm:$0xff]
    %v4803 = vld [vmem:[#allocation14 + $0x2a0] sm:$0xff]
    %v4804 = vld [vmem:[#allocation14 + $0x2a8] sm:$0xff]
    %v4805 = vld [vmem:[#allocation14 + $0x2b0] sm:$0xff]
    %v4806 = vld [vmem:[#allocation14 + $0x2b8] sm:$0xff]
    %v4807 = vld [vmem:[#allocation14 + $0x2c0] sm:$0xff]
    %v4808 = vld [vmem:[#allocation14 + $0x2c8] sm:$0xff]
    %v4809 = vld [vmem:[#allocation14 + $0x2d0] sm:$0xff]
    %v4810 = vld [vmem:[#allocation14 + $0x2d8] sm:$0xff]
    %v4811 = vld [vmem:[#allocation14 + $0x2e0] sm:$0xff]
    %v4812 = vld [vmem:[#allocation14 + $0x2e8] sm:$0xff]
    %v4813 = vld [vmem:[#allocation14 + $0x2f0] sm:$0xff]
    %v4814 = vld [vmem:[#allocation14 + $0x2f8] sm:$0xff]
    %v4815 = vld [vmem:[#allocation14 + $0x300] sm:$0xff]
    %v4816 = vld [vmem:[#allocation14 + $0x308] sm:$0xff]
    %v4817 = vld [vmem:[#allocation14 + $0x310] sm:$0xff]
    %v4818 = vld [vmem:[#allocation14 + $0x318] sm:$0xff]
    %v4819 = vld [vmem:[#allocation14 + $0x320] sm:$0xff]
    %v4820 = vld [vmem:[#allocation14 + $0x328] sm:$0xff]
    %v4821 = vld [vmem:[#allocation14 + $0x330] sm:$0xff]
    %v4822 = vld [vmem:[#allocation14 + $0x338] sm:$0xff]
    %v4823 = vld [vmem:[#allocation14 + $0x340] sm:$0xff]
    %v4824 = vld [vmem:[#allocation14 + $0x348] sm:$0xff]
    %v4825 = vld [vmem:[#allocation14 + $0x350] sm:$0xff]
    %v4826 = vld [vmem:[#allocation14 + $0x358] sm:$0xff]
    %v4827 = vld [vmem:[#allocation14 + $0x360] sm:$0xff]
    %v4828 = vld [vmem:[#allocation14 + $0x368] sm:$0xff]
    %v4829 = vld [vmem:[#allocation14 + $0x370] sm:$0xff]
    %v4830 = vld [vmem:[#allocation14 + $0x378] sm:$0xff]
    %v4831 = vld [vmem:[#allocation14 + $0x380] sm:$0xff]
    %v4832 = vld [vmem:[#allocation14 + $0x388] sm:$0xff]
    %v4833 = vld [vmem:[#allocation14 + $0x390] sm:$0xff]
    %v4834 = vld [vmem:[#allocation14 + $0x398] sm:$0xff]
    %v4835 = vld [vmem:[#allocation14 + $0x3a0] sm:$0xff]
    %v4836 = vld [vmem:[#allocation14 + $0x3a8] sm:$0xff]
    %v4837 = vld [vmem:[#allocation14 + $0x3b0] sm:$0xff]
    %v4838 = vld [vmem:[#allocation14 + $0x3b8] sm:$0xff]
    %v4839 = vld [vmem:[#allocation14 + $0x3c0] sm:$0xff]
    %v4840 = vld [vmem:[#allocation14 + $0x3c8] sm:$0xff]
    %v4841 = vld [vmem:[#allocation14 + $0x3d0] sm:$0xff]
    %v4842 = vld [vmem:[#allocation14 + $0x3d8] sm:$0xff]
    %v4843 = vld [vmem:[#allocation14 + $0x3e0] sm:$0xff]
    %v4844 = vld [vmem:[#allocation14 + $0x3e8] sm:$0xff]
    %v4845 = vld [vmem:[#allocation14 + $0x3f0] sm:$0xff]
    %v4846 = vld [vmem:[#allocation14 + $0x3f8] sm:$0xff]
    %v4847 = vld [vmem:[%s9] sm:$0xf]
    %v4849 = vperm.slane %v4847, 0
    %v4850 = vperm.slane %v4847, 1
    %v4851 = vperm.slane %v4847, 2
    %v4852 = vperm.slane %v4847, 3
    %v4985 = vunpack.c.l.b16 %v4719
    %v4986 = vunpack.c.h.b16 %v4719
    %v4987 = vunpack.c.l.b16 %v4720
    %v4988 = vunpack.c.h.b16 %v4720
    %v4989 = vunpack.c.l.b16 %v4721
    %v4990 = vunpack.c.h.b16 %v4721
    %v4991 = vunpack.c.l.b16 %v4722
    %v4992 = vunpack.c.h.b16 %v4722
    %v4993 = vunpack.c.l.b16 %v4723
    %v4994 = vunpack.c.h.b16 %v4723
    %v4995 = vunpack.c.l.b16 %v4724
    %v4996 = vunpack.c.h.b16 %v4724
    %v4997 = vunpack.c.l.b16 %v4725
    %v4998 = vunpack.c.h.b16 %v4725
    %v4999 = vunpack.c.l.b16 %v4726
    %v5000 = vunpack.c.h.b16 %v4726
    %v5001 = vunpack.c.l.b16 %v4727
    %v5002 = vunpack.c.h.b16 %v4727
    %v5003 = vunpack.c.l.b16 %v4728
    %v5004 = vunpack.c.h.b16 %v4728
    %v5005 = vunpack.c.l.b16 %v4729
    %v5006 = vunpack.c.h.b16 %v4729
    %v5007 = vunpack.c.l.b16 %v4730
    %v5008 = vunpack.c.h.b16 %v4730
    %v5009 = vunpack.c.l.b16 %v4731
    %v5010 = vunpack.c.h.b16 %v4731
    %v5011 = vunpack.c.l.b16 %v4732
    %v5012 = vunpack.c.h.b16 %v4732
    %v5013 = vunpack.c.l.b16 %v4733
    %v5014 = vunpack.c.h.b16 %v4733
    %v5015 = vunpack.c.l.b16 %v4734
    %v5016 = vunpack.c.h.b16 %v4734
    %v5017 = vunpack.c.l.b16 %v4735
    %v5018 = vunpack.c.h.b16 %v4735
    %v5019 = vunpack.c.l.b16 %v4736
    %v5020 = vunpack.c.h.b16 %v4736
    %v5021 = vunpack.c.l.b16 %v4737
    %v5022 = vunpack.c.h.b16 %v4737
    %v5023 = vunpack.c.l.b16 %v4738
    %v5024 = vunpack.c.h.b16 %v4738
    %v5025 = vunpack.c.l.b16 %v4739
    %v5026 = vunpack.c.h.b16 %v4739
    %v5027 = vunpack.c.l.b16 %v4740
    %v5028 = vunpack.c.h.b16 %v4740
    %v5029 = vunpack.c.l.b16 %v4741
    %v5030 = vunpack.c.h.b16 %v4741
    %v5031 = vunpack.c.l.b16 %v4742
    %v5032 = vunpack.c.h.b16 %v4742
    %v5033 = vunpack.c.l.b16 %v4743
    %v5034 = vunpack.c.h.b16 %v4743
    %v5035 = vunpack.c.l.b16 %v4744
    %v5036 = vunpack.c.h.b16 %v4744
    %v5037 = vunpack.c.l.b16 %v4745
    %v5038 = vunpack.c.h.b16 %v4745
    %v5039 = vunpack.c.l.b16 %v4746
    %v5040 = vunpack.c.h.b16 %v4746
    %v5041 = vunpack.c.l.b16 %v4747
    %v5042 = vunpack.c.h.b16 %v4747
    %v5043 = vunpack.c.l.b16 %v4748
    %v5044 = vunpack.c.h.b16 %v4748
    %v5045 = vunpack.c.l.b16 %v4749
    %v5046 = vunpack.c.h.b16 %v4749
    %v5047 = vunpack.c.l.b16 %v4750
    %v5048 = vunpack.c.h.b16 %v4750
    %v5049 = vunpack.c.l.b16 %v4751
    %v5050 = vunpack.c.h.b16 %v4751
    %v5051 = vunpack.c.l.b16 %v4752
    %v5052 = vunpack.c.h.b16 %v4752
    %v5053 = vunpack.c.l.b16 %v4753
    %v5054 = vunpack.c.h.b16 %v4753
    %v5055 = vunpack.c.l.b16 %v4754
    %v5056 = vunpack.c.h.b16 %v4754
    %v5057 = vunpack.c.l.b16 %v4755
    %v5058 = vunpack.c.h.b16 %v4755
    %v5059 = vunpack.c.l.b16 %v4756
    %v5060 = vunpack.c.h.b16 %v4756
    %v5061 = vunpack.c.l.b16 %v4757
    %v5062 = vunpack.c.h.b16 %v4757
    %v5063 = vunpack.c.l.b16 %v4758
    %v5064 = vunpack.c.h.b16 %v4758
    %v5065 = vunpack.c.l.b16 %v4759
    %v5066 = vunpack.c.h.b16 %v4759
    %v5067 = vunpack.c.l.b16 %v4760
    %v5068 = vunpack.c.h.b16 %v4760
    %v5069 = vunpack.c.l.b16 %v4761
    %v5070 = vunpack.c.h.b16 %v4761
    %v5071 = vunpack.c.l.b16 %v4762
    %v5072 = vunpack.c.h.b16 %v4762
    %v5073 = vunpack.c.l.b16 %v4763
    %v5074 = vunpack.c.h.b16 %v4763
    %v5075 = vunpack.c.l.b16 %v4764
    %v5076 = vunpack.c.h.b16 %v4764
    %v5077 = vunpack.c.l.b16 %v4765
    %v5078 = vunpack.c.h.b16 %v4765
    %v5079 = vunpack.c.l.b16 %v4766
    %v5080 = vunpack.c.h.b16 %v4766
    %v5081 = vunpack.c.l.b16 %v4767
    %v5082 = vunpack.c.h.b16 %v4767
    %v5083 = vunpack.c.l.b16 %v4768
    %v5084 = vunpack.c.h.b16 %v4768
    %v5085 = vunpack.c.l.b16 %v4769
    %v5086 = vunpack.c.h.b16 %v4769
    %v5087 = vunpack.c.l.b16 %v4770
    %v5088 = vunpack.c.h.b16 %v4770
    %v5089 = vunpack.c.l.b16 %v4771
    %v5090 = vunpack.c.h.b16 %v4771
    %v5091 = vunpack.c.l.b16 %v4772
    %v5092 = vunpack.c.h.b16 %v4772
    %v5093 = vunpack.c.l.b16 %v4773
    %v5094 = vunpack.c.h.b16 %v4773
    %v5095 = vunpack.c.l.b16 %v4774
    %v5096 = vunpack.c.h.b16 %v4774
    %v5097 = vunpack.c.l.b16 %v4775
    %v5098 = vunpack.c.h.b16 %v4775
    %v5099 = vunpack.c.l.b16 %v4776
    %v5100 = vunpack.c.h.b16 %v4776
    %v5101 = vunpack.c.l.b16 %v4777
    %v5102 = vunpack.c.h.b16 %v4777
    %v5103 = vunpack.c.l.b16 %v4778
    %v5104 = vunpack.c.h.b16 %v4778
    %v5105 = vunpack.c.l.b16 %v4779
    %v5106 = vunpack.c.h.b16 %v4779
    %v5107 = vunpack.c.l.b16 %v4780
    %v5108 = vunpack.c.h.b16 %v4780
    %v5109 = vunpack.c.l.b16 %v4781
    %v5110 = vunpack.c.h.b16 %v4781
    %v5111 = vunpack.c.l.b16 %v4782
    %v5112 = vunpack.c.h.b16 %v4782
    %v5113 = vunpack.c.l.b16 %v4783
    %v5114 = vunpack.c.h.b16 %v4783
    %v5115 = vunpack.c.l.b16 %v4784
    %v5116 = vunpack.c.h.b16 %v4784
    %v5117 = vunpack.c.l.b16 %v4785
    %v5118 = vunpack.c.h.b16 %v4785
    %v5119 = vunpack.c.l.b16 %v4786
    %v5120 = vunpack.c.h.b16 %v4786
    %v5121 = vunpack.c.l.b16 %v4787
    %v5122 = vunpack.c.h.b16 %v4787
    %v5123 = vunpack.c.l.b16 %v4788
    %v5124 = vunpack.c.h.b16 %v4788
    %v5125 = vunpack.c.l.b16 %v4789
    %v5126 = vunpack.c.h.b16 %v4789
    %v5127 = vunpack.c.l.b16 %v4790
    %v5128 = vunpack.c.h.b16 %v4790
    %v5129 = vunpack.c.l.b16 %v4791
    %v5130 = vunpack.c.h.b16 %v4791
    %v5131 = vunpack.c.l.b16 %v4792
    %v5132 = vunpack.c.h.b16 %v4792
    %v5133 = vunpack.c.l.b16 %v4793
    %v5134 = vunpack.c.h.b16 %v4793
    %v5135 = vunpack.c.l.b16 %v4794
    %v5136 = vunpack.c.h.b16 %v4794
    %v5137 = vunpack.c.l.b16 %v4795
    %v5138 = vunpack.c.h.b16 %v4795
    %v5139 = vunpack.c.l.b16 %v4796
    %v5140 = vunpack.c.h.b16 %v4796
    %v5141 = vunpack.c.l.b16 %v4797
    %v5142 = vunpack.c.h.b16 %v4797
    %v5143 = vunpack.c.l.b16 %v4798
    %v5144 = vunpack.c.h.b16 %v4798
    %v5145 = vunpack.c.l.b16 %v4799
    %v5146 = vunpack.c.h.b16 %v4799
    %v5147 = vunpack.c.l.b16 %v4800
    %v5148 = vunpack.c.h.b16 %v4800
    %v5149 = vunpack.c.l.b16 %v4801
    %v5150 = vunpack.c.h.b16 %v4801
    %v5151 = vunpack.c.l.b16 %v4802
    %v5152 = vunpack.c.h.b16 %v4802
    %v5153 = vunpack.c.l.b16 %v4803
    %v5154 = vunpack.c.h.b16 %v4803
    %v5155 = vunpack.c.l.b16 %v4804
    %v5156 = vunpack.c.h.b16 %v4804
    %v5157 = vunpack.c.l.b16 %v4805
    %v5158 = vunpack.c.h.b16 %v4805
    %v5159 = vunpack.c.l.b16 %v4806
    %v5160 = vunpack.c.h.b16 %v4806
    %v5161 = vunpack.c.l.b16 %v4807
    %v5162 = vunpack.c.h.b16 %v4807
    %v5163 = vunpack.c.l.b16 %v4808
    %v5164 = vunpack.c.h.b16 %v4808
    %v5165 = vunpack.c.l.b16 %v4809
    %v5166 = vunpack.c.h.b16 %v4809
    %v5167 = vunpack.c.l.b16 %v4810
    %v5168 = vunpack.c.h.b16 %v4810
    %v5169 = vunpack.c.l.b16 %v4811
    %v5170 = vunpack.c.h.b16 %v4811
    %v5171 = vunpack.c.l.b16 %v4812
    %v5172 = vunpack.c.h.b16 %v4812
    %v5173 = vunpack.c.l.b16 %v4813
    %v5174 = vunpack.c.h.b16 %v4813
    %v5175 = vunpack.c.l.b16 %v4814
    %v5176 = vunpack.c.h.b16 %v4814
    %v5177 = vunpack.c.l.b16 %v4815
    %v5178 = vunpack.c.h.b16 %v4815
    %v5179 = vunpack.c.l.b16 %v4816
    %v5180 = vunpack.c.h.b16 %v4816
    %v5181 = vunpack.c.l.b16 %v4817
    %v5182 = vunpack.c.h.b16 %v4817
    %v5183 = vunpack.c.l.b16 %v4818
    %v5184 = vunpack.c.h.b16 %v4818
    %v5185 = vunpack.c.l.b16 %v4819
    %v5186 = vunpack.c.h.b16 %v4819
    %v5187 = vunpack.c.l.b16 %v4820
    %v5188 = vunpack.c.h.b16 %v4820
    %v5189 = vunpack.c.l.b16 %v4821
    %v5190 = vunpack.c.h.b16 %v4821
    %v5191 = vunpack.c.l.b16 %v4822
    %v5192 = vunpack.c.h.b16 %v4822
    %v5193 = vunpack.c.l.b16 %v4823
    %v5194 = vunpack.c.h.b16 %v4823
    %v5195 = vunpack.c.l.b16 %v4824
    %v5196 = vunpack.c.h.b16 %v4824
    %v5197 = vunpack.c.l.b16 %v4825
    %v5198 = vunpack.c.h.b16 %v4825
    %v5199 = vunpack.c.l.b16 %v4826
    %v5200 = vunpack.c.h.b16 %v4826
    %v5201 = vunpack.c.l.b16 %v4827
    %v5202 = vunpack.c.h.b16 %v4827
    %v5203 = vunpack.c.l.b16 %v4828
    %v5204 = vunpack.c.h.b16 %v4828
    %v5205 = vunpack.c.l.b16 %v4829
    %v5206 = vunpack.c.h.b16 %v4829
    %v5207 = vunpack.c.l.b16 %v4830
    %v5208 = vunpack.c.h.b16 %v4830
    %v5209 = vunpack.c.l.b16 %v4831
    %v5210 = vunpack.c.h.b16 %v4831
    %v5211 = vunpack.c.l.b16 %v4832
    %v5212 = vunpack.c.h.b16 %v4832
    %v5213 = vunpack.c.l.b16 %v4833
    %v5214 = vunpack.c.h.b16 %v4833
    %v5215 = vunpack.c.l.b16 %v4834
    %v5216 = vunpack.c.h.b16 %v4834
    %v5217 = vunpack.c.l.b16 %v4835
    %v5218 = vunpack.c.h.b16 %v4835
    %v5219 = vunpack.c.l.b16 %v4836
    %v5220 = vunpack.c.h.b16 %v4836
    %v5221 = vunpack.c.l.b16 %v4837
    %v5222 = vunpack.c.h.b16 %v4837
    %v5223 = vunpack.c.l.b16 %v4838
    %v5224 = vunpack.c.h.b16 %v4838
    %v5225 = vunpack.c.l.b16 %v4839
    %v5226 = vunpack.c.h.b16 %v4839
    %v5227 = vunpack.c.l.b16 %v4840
    %v5228 = vunpack.c.h.b16 %v4840
    %v5229 = vunpack.c.l.b16 %v4841
    %v5230 = vunpack.c.h.b16 %v4841
    %v5231 = vunpack.c.l.b16 %v4842
    %v5232 = vunpack.c.h.b16 %v4842
    %v5233 = vunpack.c.l.b16 %v4843
    %v5234 = vunpack.c.h.b16 %v4843
    %v5235 = vunpack.c.l.b16 %v4844
    %v5236 = vunpack.c.h.b16 %v4844
    %v5237 = vunpack.c.l.b16 %v4845
    %v5238 = vunpack.c.h.b16 %v4845
    %v5239 = vunpack.c.l.b16 %v4846
    %v5240 = vunpack.c.h.b16 %v4846
    %v5241 = vpack.c.b16 %v4989, %v4985
    %v5242 = vpack.c.b16 %v4990, %v4986
    %v5243 = vpack.c.b16 %v4991, %v4987
    %v5244 = vpack.c.b16 %v4992, %v4988
    %v5245 = vpack.c.b16 %v4997, %v4993
    %v5246 = vpack.c.b16 %v4998, %v4994
    %v5247 = vpack.c.b16 %v4999, %v4995
    %v5248 = vpack.c.b16 %v5000, %v4996
    %v5249 = vpack.c.b16 %v5005, %v5001
    %v5250 = vpack.c.b16 %v5006, %v5002
    %v5251 = vpack.c.b16 %v5007, %v5003
    %v5252 = vpack.c.b16 %v5008, %v5004
    %v5253 = vpack.c.b16 %v5013, %v5009
    %v5254 = vpack.c.b16 %v5014, %v5010
    %v5255 = vpack.c.b16 %v5015, %v5011
    %v5256 = vpack.c.b16 %v5016, %v5012
    %v5257 = vpack.c.b16 %v5021, %v5017
    %v5258 = vpack.c.b16 %v5022, %v5018
    %v5259 = vpack.c.b16 %v5023, %v5019
    %v5260 = vpack.c.b16 %v5024, %v5020
    %v5261 = vpack.c.b16 %v5029, %v5025
    %v5262 = vpack.c.b16 %v5030, %v5026
    %v5263 = vpack.c.b16 %v5031, %v5027
    %v5264 = vpack.c.b16 %v5032, %v5028
    %v5265 = vpack.c.b16 %v5037, %v5033
    %v5266 = vpack.c.b16 %v5038, %v5034
    %v5267 = vpack.c.b16 %v5039, %v5035
    %v5268 = vpack.c.b16 %v5040, %v5036
    %v5269 = vpack.c.b16 %v5045, %v5041
    %v5270 = vpack.c.b16 %v5046, %v5042
    %v5271 = vpack.c.b16 %v5047, %v5043
    %v5272 = vpack.c.b16 %v5048, %v5044
    %v5273 = vpack.c.b16 %v5053, %v5049
    %v5274 = vpack.c.b16 %v5054, %v5050
    %v5275 = vpack.c.b16 %v5055, %v5051
    %v5276 = vpack.c.b16 %v5056, %v5052
    %v5277 = vpack.c.b16 %v5061, %v5057
    %v5278 = vpack.c.b16 %v5062, %v5058
    %v5279 = vpack.c.b16 %v5063, %v5059
    %v5280 = vpack.c.b16 %v5064, %v5060
    %v5281 = vpack.c.b16 %v5069, %v5065
    %v5282 = vpack.c.b16 %v5070, %v5066
    %v5283 = vpack.c.b16 %v5071, %v5067
    %v5284 = vpack.c.b16 %v5072, %v5068
    %v5285 = vpack.c.b16 %v5077, %v5073
    %v5286 = vpack.c.b16 %v5078, %v5074
    %v5287 = vpack.c.b16 %v5079, %v5075
    %v5288 = vpack.c.b16 %v5080, %v5076
    %v5289 = vpack.c.b16 %v5085, %v5081
    %v5290 = vpack.c.b16 %v5086, %v5082
    %v5291 = vpack.c.b16 %v5087, %v5083
    %v5292 = vpack.c.b16 %v5088, %v5084
    %v5293 = vpack.c.b16 %v5093, %v5089
    %v5294 = vpack.c.b16 %v5094, %v5090
    %v5295 = vpack.c.b16 %v5095, %v5091
    %v5296 = vpack.c.b16 %v5096, %v5092
    %v5297 = vpack.c.b16 %v5101, %v5097
    %v5298 = vpack.c.b16 %v5102, %v5098
    %v5299 = vpack.c.b16 %v5103, %v5099
    %v5300 = vpack.c.b16 %v5104, %v5100
    %v5301 = vpack.c.b16 %v5109, %v5105
    %v5302 = vpack.c.b16 %v5110, %v5106
    %v5303 = vpack.c.b16 %v5111, %v5107
    %v5304 = vpack.c.b16 %v5112, %v5108
    %v5305 = vpack.c.b16 %v5117, %v5113
    %v5306 = vpack.c.b16 %v5118, %v5114
    %v5307 = vpack.c.b16 %v5119, %v5115
    %v5308 = vpack.c.b16 %v5120, %v5116
    %v5309 = vpack.c.b16 %v5125, %v5121
    %v5310 = vpack.c.b16 %v5126, %v5122
    %v5311 = vpack.c.b16 %v5127, %v5123
    %v5312 = vpack.c.b16 %v5128, %v5124
    %v5313 = vpack.c.b16 %v5133, %v5129
    %v5314 = vpack.c.b16 %v5134, %v5130
    %v5315 = vpack.c.b16 %v5135, %v5131
    %v5316 = vpack.c.b16 %v5136, %v5132
    %v5317 = vpack.c.b16 %v5141, %v5137
    %v5318 = vpack.c.b16 %v5142, %v5138
    %v5319 = vpack.c.b16 %v5143, %v5139
    %v5320 = vpack.c.b16 %v5144, %v5140
    %v5321 = vpack.c.b16 %v5149, %v5145
    %v5322 = vpack.c.b16 %v5150, %v5146
    %v5323 = vpack.c.b16 %v5151, %v5147
    %v5324 = vpack.c.b16 %v5152, %v5148
    %v5325 = vpack.c.b16 %v5157, %v5153
    %v5326 = vpack.c.b16 %v5158, %v5154
    %v5327 = vpack.c.b16 %v5159, %v5155
    %v5328 = vpack.c.b16 %v5160, %v5156
    %v5329 = vpack.c.b16 %v5165, %v5161
    %v5330 = vpack.c.b16 %v5166, %v5162
    %v5331 = vpack.c.b16 %v5167, %v5163
    %v5332 = vpack.c.b16 %v5168, %v5164
    %v5333 = vpack.c.b16 %v5173, %v5169
    %v5334 = vpack.c.b16 %v5174, %v5170
    %v5335 = vpack.c.b16 %v5175, %v5171
    %v5336 = vpack.c.b16 %v5176, %v5172
    %v5337 = vpack.c.b16 %v5181, %v5177
    %v5338 = vpack.c.b16 %v5182, %v5178
    %v5339 = vpack.c.b16 %v5183, %v5179
    %v5340 = vpack.c.b16 %v5184, %v5180
    %v5341 = vpack.c.b16 %v5189, %v5185
    %v5342 = vpack.c.b16 %v5190, %v5186
    %v5343 = vpack.c.b16 %v5191, %v5187
    %v5344 = vpack.c.b16 %v5192, %v5188
    %v5345 = vpack.c.b16 %v5197, %v5193
    %v5346 = vpack.c.b16 %v5198, %v5194
    %v5347 = vpack.c.b16 %v5199, %v5195
    %v5348 = vpack.c.b16 %v5200, %v5196
    %v5349 = vpack.c.b16 %v5205, %v5201
    %v5350 = vpack.c.b16 %v5206, %v5202
    %v5351 = vpack.c.b16 %v5207, %v5203
    %v5352 = vpack.c.b16 %v5208, %v5204
    %v5353 = vpack.c.b16 %v5213, %v5209
    %v5354 = vpack.c.b16 %v5214, %v5210
    %v5355 = vpack.c.b16 %v5215, %v5211
    %v5356 = vpack.c.b16 %v5216, %v5212
    %v5357 = vpack.c.b16 %v5221, %v5217
    %v5358 = vpack.c.b16 %v5222, %v5218
    %v5359 = vpack.c.b16 %v5223, %v5219
    %v5360 = vpack.c.b16 %v5224, %v5220
    %v5361 = vpack.c.b16 %v5229, %v5225
    %v5362 = vpack.c.b16 %v5230, %v5226
    %v5363 = vpack.c.b16 %v5231, %v5227
    %v5364 = vpack.c.b16 %v5232, %v5228
    %v5365 = vpack.c.b16 %v5237, %v5233
    %v5366 = vpack.c.b16 %v5238, %v5234
    %v5367 = vpack.c.b16 %v5239, %v5235
    %v5368 = vpack.c.b16 %v5240, %v5236
    %5497 = vmatpush.bf16.msra.mxu0 %v5269
    %5498 = vmatpush.bf16.msra.mxu0 %v5265
    %5499 = vmatpush.bf16.msra.mxu0 %v5261
    %5500 = vmatpush.bf16.msra.mxu0 %v5257
    %5501 = vmatpush.bf16.msra.mxu0 %v5253
    %5502 = vmatpush.bf16.msra.mxu0 %v5249
    %5503 = vmatpush.bf16.msra.mxu0 %v5245
    %5504 = vmatpush.bf16.msra.mxu0 %v5241
    %5505 = vmatmul.bf16.gmra.mxu0 %v4711
    %v5506 = vpop.f32.mrf.mxu0
    %v5507 = vadd.f32 %v4849, %v5506
    %v5508 = vpop.f32.mrf.mxu0
    %v5509 = vadd.f32 %v4849, %v5508
    %5510 = vmatmul.bf16.gmra.mxu0 %v4715
    %v5511 = vpop.f32.mrf.mxu0
    %v5512 = vadd.f32 %v4849, %v5511
    %v5513 = vpop.f32.mrf.mxu0
    %v5514 = vadd.f32 %v4849, %v5513
    %5515 = vdwg.mxu0
    %5516 = vmatpush.bf16.msra.mxu0 %v5301
    %5517 = vmatpush.bf16.msra.mxu0 %v5297
    %5518 = vmatpush.bf16.msra.mxu0 %v5293
    %5519 = vmatpush.bf16.msra.mxu0 %v5289
    %5520 = vmatpush.bf16.msra.mxu0 %v5285
    %5521 = vmatpush.bf16.msra.mxu0 %v5281
    %5522 = vmatpush.bf16.msra.mxu0 %v5277
    %5523 = vmatpush.bf16.msra.mxu0 %v5273
    %5524 = vmatmul.bf16.gmra.mxu0 %v4712
    %v5525 = vpop.f32.mrf.mxu0
    %v5526 = vadd.f32 %v5507, %v5525
    %v5527 = vpop.f32.mrf.mxu0
    %v5528 = vadd.f32 %v5509, %v5527
    %5529 = vmatmul.bf16.gmra.mxu0 %v4716
    %v5530 = vpop.f32.mrf.mxu0
    %v5531 = vadd.f32 %v5512, %v5530
    %v5532 = vpop.f32.mrf.mxu0
    %v5533 = vadd.f32 %v5514, %v5532
    %5534 = vdwg.mxu0
    %5535 = vmatpush.bf16.msra.mxu0 %v5333
    %5536 = vmatpush.bf16.msra.mxu0 %v5329
    %5537 = vmatpush.bf16.msra.mxu0 %v5325
    %5538 = vmatpush.bf16.msra.mxu0 %v5321
    %5539 = vmatpush.bf16.msra.mxu0 %v5317
    %5540 = vmatpush.bf16.msra.mxu0 %v5313
    %5541 = vmatpush.bf16.msra.mxu0 %v5309
    %5542 = vmatpush.bf16.msra.mxu0 %v5305
    %5543 = vmatmul.bf16.gmra.mxu0 %v4713
    %v5544 = vpop.f32.mrf.mxu0
    %v5545 = vadd.f32 %v5526, %v5544
    %v5546 = vpop.f32.mrf.mxu0
    %v5547 = vadd.f32 %v5528, %v5546
    %5548 = vmatmul.bf16.gmra.mxu0 %v4717
    %v5549 = vpop.f32.mrf.mxu0
    %v5550 = vadd.f32 %v5531, %v5549
    %v5551 = vpop.f32.mrf.mxu0
    %v5552 = vadd.f32 %v5533, %v5551
    %5553 = vdwg.mxu0
    %5554 = vmatpush.bf16.msra.mxu0 %v5365
    %5555 = vmatpush.bf16.msra.mxu0 %v5361
    %5556 = vmatpush.bf16.msra.mxu0 %v5357
    %5557 = vmatpush.bf16.msra.mxu0 %v5353
    %5558 = vmatpush.bf16.msra.mxu0 %v5349
    %5559 = vmatpush.bf16.msra.mxu0 %v5345
    %5560 = vmatpush.bf16.msra.mxu0 %v5341
    %5561 = vmatpush.bf16.msra.mxu0 %v5337
    %5562 = vmatmul.bf16.gmra.mxu0 %v4714
    %v5563 = vpop.f32.mrf.mxu0
    %v5564 = vadd.f32 %v5545, %v5563
    %v5565 = vpop.f32.mrf.mxu0
    %v5566 = vadd.f32 %v5547, %v5565
    %5567 = vmatmul.bf16.gmra.mxu0 %v4718
    %v5568 = vpop.f32.mrf.mxu0
    %v5569 = vadd.f32 %v5550, %v5568
    %v5570 = vpop.f32.mrf.mxu0
    %v5571 = vadd.f32 %v5552, %v5570
    %5572 = vdwg.mxu0
    %5573 = vmatpush.bf16.msra.mxu0 %v5270
    %5574 = vmatpush.bf16.msra.mxu0 %v5266
    %5575 = vmatpush.bf16.msra.mxu0 %v5262
    %5576 = vmatpush.bf16.msra.mxu0 %v5258
    %5577 = vmatpush.bf16.msra.mxu0 %v5254
    %5578 = vmatpush.bf16.msra.mxu0 %v5250
    %5579 = vmatpush.bf16.msra.mxu0 %v5246
    %5580 = vmatpush.bf16.msra.mxu0 %v5242
    %5581 = vmatmul.bf16.gmra.mxu0 %v4711
    %v5582 = vpop.f32.mrf.mxu0
    %v5583 = vadd.f32 %v4850, %v5582
    %v5584 = vpop.f32.mrf.mxu0
    %v5585 = vadd.f32 %v4850, %v5584
    %5586 = vmatmul.bf16.gmra.mxu0 %v4715
    %v5587 = vpop.f32.mrf.mxu0
    %v5588 = vadd.f32 %v4850, %v5587
    %v5589 = vpop.f32.mrf.mxu0
    %v5590 = vadd.f32 %v4850, %v5589
    %5591 = vdwg.mxu0
    %5592 = vmatpush.bf16.msra.mxu0 %v5302
    %5593 = vmatpush.bf16.msra.mxu0 %v5298
    %5594 = vmatpush.bf16.msra.mxu0 %v5294
    %5595 = vmatpush.bf16.msra.mxu0 %v5290
    %5596 = vmatpush.bf16.msra.mxu0 %v5286
    %5597 = vmatpush.bf16.msra.mxu0 %v5282
    %5598 = vmatpush.bf16.msra.mxu0 %v5278
    %5599 = vmatpush.bf16.msra.mxu0 %v5274
    %5600 = vmatmul.bf16.gmra.mxu0 %v4712
    %v5601 = vpop.f32.mrf.mxu0
    %v5602 = vadd.f32 %v5583, %v5601
    %v5603 = vpop.f32.mrf.mxu0
    %v5604 = vadd.f32 %v5585, %v5603
    %5605 = vmatmul.bf16.gmra.mxu0 %v4716
    %v5606 = vpop.f32.mrf.mxu0
    %v5607 = vadd.f32 %v5588, %v5606
    %v5608 = vpop.f32.mrf.mxu0
    %v5609 = vadd.f32 %v5590, %v5608
    %5610 = vdwg.mxu0
    %5611 = vmatpush.bf16.msra.mxu0 %v5334
    %5612 = vmatpush.bf16.msra.mxu0 %v5330
    %5613 = vmatpush.bf16.msra.mxu0 %v5326
    %5614 = vmatpush.bf16.msra.mxu0 %v5322
    %5615 = vmatpush.bf16.msra.mxu0 %v5318
    %5616 = vmatpush.bf16.msra.mxu0 %v5314
    %5617 = vmatpush.bf16.msra.mxu0 %v5310
    %5618 = vmatpush.bf16.msra.mxu0 %v5306
    %5619 = vmatmul.bf16.gmra.mxu0 %v4713
    %v5620 = vpop.f32.mrf.mxu0
    %v5621 = vadd.f32 %v5602, %v5620
    %v5622 = vpop.f32.mrf.mxu0
    %v5623 = vadd.f32 %v5604, %v5622
    %5624 = vmatmul.bf16.gmra.mxu0 %v4717
    %v5625 = vpop.f32.mrf.mxu0
    %v5626 = vadd.f32 %v5607, %v5625
    %v5627 = vpop.f32.mrf.mxu0
    %v5628 = vadd.f32 %v5609, %v5627
    %5629 = vdwg.mxu0
    %5630 = vmatpush.bf16.msra.mxu0 %v5366
    %5631 = vmatpush.bf16.msra.mxu0 %v5362
    %5632 = vmatpush.bf16.msra.mxu0 %v5358
    %5633 = vmatpush.bf16.msra.mxu0 %v5354
    %5634 = vmatpush.bf16.msra.mxu0 %v5350
    %5635 = vmatpush.bf16.msra.mxu0 %v5346
    %5636 = vmatpush.bf16.msra.mxu0 %v5342
    %5637 = vmatpush.bf16.msra.mxu0 %v5338
    %5638 = vmatmul.bf16.gmra.mxu0 %v4714
    %v5639 = vpop.f32.mrf.mxu0
    %v5640 = vadd.f32 %v5621, %v5639
    %v5641 = vpop.f32.mrf.mxu0
    %v5642 = vadd.f32 %v5623, %v5641
    %5643 = vmatmul.bf16.gmra.mxu0 %v4718
    %v5644 = vpop.f32.mrf.mxu0
    %v5645 = vadd.f32 %v5626, %v5644
    %v5646 = vpop.f32.mrf.mxu0
    %v5647 = vadd.f32 %v5628, %v5646
    %5648 = vdwg.mxu0
    %5649 = vmatpush.bf16.msra.mxu0 %v5271
    %5650 = vmatpush.bf16.msra.mxu0 %v5267
    %5651 = vmatpush.bf16.msra.mxu0 %v5263
    %5652 = vmatpush.bf16.msra.mxu0 %v5259
    %5653 = vmatpush.bf16.msra.mxu0 %v5255
    %5654 = vmatpush.bf16.msra.mxu0 %v5251
    %5655 = vmatpush.bf16.msra.mxu0 %v5247
    %5656 = vmatpush.bf16.msra.mxu0 %v5243
    %5657 = vmatmul.bf16.gmra.mxu0 %v4711
    %v5658 = vpop.f32.mrf.mxu0
    %v5659 = vadd.f32 %v4851, %v5658
    %v5660 = vpop.f32.mrf.mxu0
    %v5661 = vadd.f32 %v4851, %v5660
    %5662 = vmatmul.bf16.gmra.mxu0 %v4715
    %v5663 = vpop.f32.mrf.mxu0
    %v5664 = vadd.f32 %v4851, %v5663
    %v5665 = vpop.f32.mrf.mxu0
    %v5666 = vadd.f32 %v4851, %v5665
    %5667 = vdwg.mxu0
    %5668 = vmatpush.bf16.msra.mxu0 %v5303
    %5669 = vmatpush.bf16.msra.mxu0 %v5299
    %5670 = vmatpush.bf16.msra.mxu0 %v5295
    %5671 = vmatpush.bf16.msra.mxu0 %v5291
    %5672 = vmatpush.bf16.msra.mxu0 %v5287
    %5673 = vmatpush.bf16.msra.mxu0 %v5283
    %5674 = vmatpush.bf16.msra.mxu0 %v5279
    %5675 = vmatpush.bf16.msra.mxu0 %v5275
    %5676 = vmatmul.bf16.gmra.mxu0 %v4712
    %v5677 = vpop.f32.mrf.mxu0
    %v5678 = vadd.f32 %v5659, %v5677
    %v5679 = vpop.f32.mrf.mxu0
    %v5680 = vadd.f32 %v5661, %v5679
    %5681 = vmatmul.bf16.gmra.mxu0 %v4716
    %v5682 = vpop.f32.mrf.mxu0
    %v5683 = vadd.f32 %v5664, %v5682
    %v5684 = vpop.f32.mrf.mxu0
    %v5685 = vadd.f32 %v5666, %v5684
    %5686 = vdwg.mxu0
    %5687 = vmatpush.bf16.msra.mxu0 %v5335
    %5688 = vmatpush.bf16.msra.mxu0 %v5331
    %5689 = vmatpush.bf16.msra.mxu0 %v5327
    %5690 = vmatpush.bf16.msra.mxu0 %v5323
    %5691 = vmatpush.bf16.msra.mxu0 %v5319
    %5692 = vmatpush.bf16.msra.mxu0 %v5315
    %5693 = vmatpush.bf16.msra.mxu0 %v5311
    %5694 = vmatpush.bf16.msra.mxu0 %v5307
    %5695 = vmatmul.bf16.gmra.mxu0 %v4713
    %v5696 = vpop.f32.mrf.mxu0
    %v5697 = vadd.f32 %v5678, %v5696
    %v5698 = vpop.f32.mrf.mxu0
    %v5699 = vadd.f32 %v5680, %v5698
    %5700 = vmatmul.bf16.gmra.mxu0 %v4717
    %v5701 = vpop.f32.mrf.mxu0
    %v5702 = vadd.f32 %v5683, %v5701
    %v5703 = vpop.f32.mrf.mxu0
    %v5704 = vadd.f32 %v5685, %v5703
    %5705 = vdwg.mxu0
    %5706 = vmatpush.bf16.msra.mxu0 %v5367
    %5707 = vmatpush.bf16.msra.mxu0 %v5363
    %5708 = vmatpush.bf16.msra.mxu0 %v5359
    %5709 = vmatpush.bf16.msra.mxu0 %v5355
    %5710 = vmatpush.bf16.msra.mxu0 %v5351
    %5711 = vmatpush.bf16.msra.mxu0 %v5347
    %5712 = vmatpush.bf16.msra.mxu0 %v5343
    %5713 = vmatpush.bf16.msra.mxu0 %v5339
    %5714 = vmatmul.bf16.gmra.mxu0 %v4714
    %v5715 = vpop.f32.mrf.mxu0
    %v5716 = vadd.f32 %v5697, %v5715
    %v5717 = vpop.f32.mrf.mxu0
    %v5718 = vadd.f32 %v5699, %v5717
    %5719 = vmatmul.bf16.gmra.mxu0 %v4718
    %v5720 = vpop.f32.mrf.mxu0
    %v5721 = vadd.f32 %v5702, %v5720
    %v5722 = vpop.f32.mrf.mxu0
    %v5723 = vadd.f32 %v5704, %v5722
    %5724 = vdwg.mxu0
    %5725 = vmatpush.bf16.msra.mxu0 %v5272
    %5726 = vmatpush.bf16.msra.mxu0 %v5268
    %5727 = vmatpush.bf16.msra.mxu0 %v5264
    %5728 = vmatpush.bf16.msra.mxu0 %v5260
    %5729 = vmatpush.bf16.msra.mxu0 %v5256
    %5730 = vmatpush.bf16.msra.mxu0 %v5252
    %5731 = vmatpush.bf16.msra.mxu0 %v5248
    %5732 = vmatpush.bf16.msra.mxu0 %v5244
    %5733 = vmatmul.bf16.gmra.mxu0 %v4711
    %v5734 = vpop.f32.mrf.mxu0
    %v5735 = vadd.f32 %v4852, %v5734
    %v5736 = vpop.f32.mrf.mxu0
    %v5737 = vadd.f32 %v4852, %v5736
    %5738 = vmatmul.bf16.gmra.mxu0 %v4715
    %v5739 = vpop.f32.mrf.mxu0
    %v5740 = vadd.f32 %v4852, %v5739
    %v5741 = vpop.f32.mrf.mxu0
    %v5742 = vadd.f32 %v4852, %v5741
    %5743 = vdwg.mxu0
    %5744 = vmatpush.bf16.msra.mxu0 %v5304
    %5745 = vmatpush.bf16.msra.mxu0 %v5300
    %5746 = vmatpush.bf16.msra.mxu0 %v5296
    %5747 = vmatpush.bf16.msra.mxu0 %v5292
    %5748 = vmatpush.bf16.msra.mxu0 %v5288
    %5749 = vmatpush.bf16.msra.mxu0 %v5284
    %5750 = vmatpush.bf16.msra.mxu0 %v5280
    %5751 = vmatpush.bf16.msra.mxu0 %v5276
    %5752 = vmatmul.bf16.gmra.mxu0 %v4712
    %v5753 = vpop.f32.mrf.mxu0
    %v5754 = vadd.f32 %v5735, %v5753
    %v5755 = vpop.f32.mrf.mxu0
    %v5756 = vadd.f32 %v5737, %v5755
    %5757 = vmatmul.bf16.gmra.mxu0 %v4716
    %v5758 = vpop.f32.mrf.mxu0
    %v5759 = vadd.f32 %v5740, %v5758
    %v5760 = vpop.f32.mrf.mxu0
    %v5761 = vadd.f32 %v5742, %v5760
    %5762 = vdwg.mxu0
    %5763 = vmatpush.bf16.msra.mxu0 %v5336
    %5764 = vmatpush.bf16.msra.mxu0 %v5332
    %5765 = vmatpush.bf16.msra.mxu0 %v5328
    %5766 = vmatpush.bf16.msra.mxu0 %v5324
    %5767 = vmatpush.bf16.msra.mxu0 %v5320
    %5768 = vmatpush.bf16.msra.mxu0 %v5316
    %5769 = vmatpush.bf16.msra.mxu0 %v5312
    %5770 = vmatpush.bf16.msra.mxu0 %v5308
    %5771 = vmatmul.bf16.gmra.mxu0 %v4713
    %v5772 = vpop.f32.mrf.mxu0
    %v5773 = vadd.f32 %v5754, %v5772
    %v5774 = vpop.f32.mrf.mxu0
    %v5775 = vadd.f32 %v5756, %v5774
    %5776 = vmatmul.bf16.gmra.mxu0 %v4717
    %v5777 = vpop.f32.mrf.mxu0
    %v5778 = vadd.f32 %v5759, %v5777
    %v5779 = vpop.f32.mrf.mxu0
    %v5780 = vadd.f32 %v5761, %v5779
    %5781 = vdwg.mxu0
    %5782 = vmatpush.bf16.msra.mxu0 %v5368
    %5783 = vmatpush.bf16.msra.mxu0 %v5364
    %5784 = vmatpush.bf16.msra.mxu0 %v5360
    %5785 = vmatpush.bf16.msra.mxu0 %v5356
    %5786 = vmatpush.bf16.msra.mxu0 %v5352
    %5787 = vmatpush.bf16.msra.mxu0 %v5348
    %5788 = vmatpush.bf16.msra.mxu0 %v5344
    %5789 = vmatpush.bf16.msra.mxu0 %v5340
    %5790 = vmatmul.bf16.gmra.mxu0 %v4714
    %v5791 = vpop.f32.mrf.mxu0
    %v5792 = vadd.f32 %v5773, %v5791
    %v5793 = vpop.f32.mrf.mxu0
    %v5794 = vadd.f32 %v5775, %v5793
    %5795 = vmatmul.bf16.gmra.mxu0 %v4718
    %v5796 = vpop.f32.mrf.mxu0
    %v5797 = vadd.f32 %v5778, %v5796
    %v5798 = vpop.f32.mrf.mxu0
    %v5799 = vadd.f32 %v5780, %v5798
    %5800 = vdwg.mxu0
    %v5801 = vpack.c.bf16 %v5640, %v5564
    %v5802 = vpack.c.bf16 %v5792, %v5716
    %v5803 = vpack.c.bf16 %v5642, %v5566
    %v5804 = vpack.c.bf16 %v5794, %v5718
    %v5805 = vpack.c.bf16 %v5645, %v5569
    %v5806 = vpack.c.bf16 %v5797, %v5721
    %v5807 = vpack.c.bf16 %v5647, %v5571
    %v5808 = vpack.c.bf16 %v5799, %v5723
    %5809 = vst [vmem:[#allocation16] sm:$0xff] %v5801
    %5810 = vst [vmem:[#allocation16 + $0x8] sm:$0xff] %v5802
    %5811 = vst [vmem:[#allocation16 + $0x10] sm:$0xff] %v5803
    %5812 = vst [vmem:[#allocation16 + $0x18] sm:$0xff] %v5804
    %5813 = vst [vmem:[#allocation16 + $0x20] sm:$0xff] %v5805
    %5814 = vst [vmem:[#allocation16 + $0x28] sm:$0xff] %v5806
    %5815 = vst [vmem:[#allocation16 + $0x30] sm:$0xff] %v5807
    %5816 = vst [vmem:[#allocation16 + $0x38] sm:$0xff] %v5808
    // Predicated region
    $region74: #{tpu_custom_call.1} parent=1 // pred_check
      _
    $region75: #{tpu_custom_call.1} parent=1 // pred_check_branch
      %5818 = sbr.rel (0) target = $region77
    $region76: #{tpu_custom_call.1} parent=1 // pred_region
      %5820 = vsyncadd [#allocation4], 0
      %s5821 = sshll.u32 [#allocation16], 4
      %s5822 = int_to_ptr.vmem [resolvable:$true] %s5821
      %s5823 = sshll.u32 %s10, 4
      %s5824 = int_to_ptr.hbm [resolvable:$true] %s5823
      %5829 = dma.vmem_to_hbm [thread:$0]  %s5822, 1024, %s5824, [#allocation4], 256, 256, 16
    $region77: #{tpu_custom_call.1} parent=1 // pred_fallthru
      _
    // Predicated region
    $region78: #{tpu_custom_call.1} parent=1 // pred_check
      _
    $region79: #{tpu_custom_call.1} parent=1 // pred_check_branch
      %5831 = sbr.rel (0) target = $region81
    $region80: #{tpu_custom_call.1} parent=1 // pred_region
      %5833 = dma.done [#allocation4], 1024
    $region81: #{tpu_custom_call.1} parent=1 // pred_fallthru
      _
    %5834 = vsyncpa [#allocation3], 1
    %5835 = vsyncpa [#allocation6], 1
    %5836 = vsyncpa [#allocation9], 1
    %5837 = vsyncpa [#allocation12], 1
    %5838 = vsyncpa [#allocation15], 1
    %5839 = vsyncpa [#allocation4], 1

</llo_original>
